<compile_context>
chip_gen: v6e
topology: v6e:2x2x1
jax: 0.10.0
libtpu: 0.0.40
codegen_flags: <defaults>
</compile_context>

<pallas_src>
import functools
import math

import jax
import jax.numpy as jnp
import numpy as np
from jax import lax
from jax.experimental import pallas as pl
from jax.experimental.pallas import tpu as pltpu

_LANE = 128


def _round_up(v: int, m: int) -> int:
    return ((v + m - 1) // m) * m


def _pe_kernel_dense(scale_ref, phase_ref, x_ref, o_ref, *, D: int, C: int):
    """Lane-dense block: one sin pass + one full-width store per tile."""
    x = x_ref[...].astype(jnp.float32)                       # (tm, D)
    tm = x.shape[0]
    out_D = D * C

    # Replicate x across channels: (tm, D) -> (tm, C*D).  XLU concat; free slot
    # next to the EUP.
    xt = jnp.concatenate([x] * C, axis=-1) if C > 1 else x

    # arg[:, c*D + d] = 2^i * x[:, d]  (+ pi/2 for the cos channels).
    arg = xt * scale_ref[...] + phase_ref[...]                # VPU, row-broadcast

    col = lax.broadcasted_iota(jnp.int32, (tm, out_D), 1)
    out = jnp.where(col < D, xt, jnp.sin(arg))                # one dense EUP pass
    o_ref[...] = out.astype(o_ref.dtype)                      # one unmasked store


def _pe_kernel_sliced(scale_ref, phase_ref, x_ref, o_ref, *, D: int, C: int):
    """Known-good fallback: per-channel column-slice stores (previous kernel)."""
    del scale_ref, phase_ref
    x = x_ref[...].astype(jnp.float32)
    out_dtype = o_ref.dtype
    o_ref[:, 0:D] = x.astype(out_dtype)
    for i in range((C - 1) // 2):
        scaled = x * (2.0 ** i)
        base = (1 + 2 * i) * D
        o_ref[:, base:base + D] = jnp.sin(scaled).astype(out_dtype)
        o_ref[:, base + D:base + 2 * D] = jnp.cos(scaled).astype(out_dtype)


def _vmem_capacity_bytes() -> int:
    try:
        info = pltpu.get_tpu_info()
        cap = getattr(info, "vmem_capacity_bytes", None)
        if cap:
            return int(cap)
    except Exception:
        pass
    return 64 * 1024 * 1024  # conservative default: v7x per-TensorCore VMEM


def positional_encoding(x: jax.Array, L_embed: int = 10,
                        row_tile: int | None = None) -> jax.Array:
    """Pallas equivalent of positionalEncoding(L_embed).forward(x)."""
    orig_shape = x.shape
    D = int(orig_shape[-1])
    N = int(math.prod(orig_shape[:-1]))
    C = 1 + 2 * L_embed
    out_D = D * C

    x2d = x.reshape(N, D)
    itemsize = jnp.dtype(x.dtype).itemsize
    # bf16 packs (16, 128) per vreg: keep row tiles 16-aligned for narrow dtypes.
    align = 8 if itemsize >= 4 else 16

    # Per-generation VMEM budget (v5e/v6e: 128 MiB physical, v7x: 64 MiB/TC).
    vmem_cap = _vmem_capacity_bytes()
    vmem_limit = min(max(vmem_cap // 2, 32 * 1024 * 1024), 64 * 1024 * 1024)
    block_budget = int(vmem_limit * 0.6)

    # Row-tile sizing with lane padding accounted for.
    out_D_pad = _round_up(out_D, _LANE)
    in_D_pad = _round_up(D, _LANE)
    if row_tile is None:
        per_row = (2 * out_D_pad * itemsize      # double-buffered output block
                   + 2 * in_D_pad * itemsize     # double-buffered input block
                   + 3 * out_D_pad * 4)          # f32 temporaries (xt / arg / out)
        row_tile = max(align, (block_budget // per_row) // align * align)
    tm = max(align, (int(row_tile) // align) * align)

    # No tile larger than the (row-aligned) problem ...
    tm = min(tm, _round_up(N, align))
    # ... and keep >=2 grid steps when possible so both v7x TensorCores work.
    if N > align:
        tm = min(tm, _round_up(pl.cdiv(N, 2), align))

    grid = (pl.cdiv(N, tm),)   # partial final block handled by Pallas masking

    # Constant per-column scale / phase rows (resident in VMEM across the grid).
    scale_np = np.ones((1, out_D), np.float32)
    phase_np = np.zeros((1, out_D), np.float32)
    for i in range(L_embed):
        scale_np[0, (1 + 2 * i) * D:(3 + 2 * i) * D] = 2.0 ** i
        phase_np[0, (2 + 2 * i) * D:(3 + 2 * i) * D] = np.pi / 2.0  # cos(y)=sin(y+pi/2)
    scale = jnp.asarray(scale_np)
    phase = jnp.asarray(phase_np)

    def _build(kernel_body):
        return pl.pallas_call(
            functools.partial(kernel_body, D=D, C=C),
            out_shape=jax.ShapeDtypeStruct((N, out_D), x.dtype),
            grid_spec=pltpu.PrefetchScalarGridSpec(
                num_scalar_prefetch=0,
                grid=grid,
                in_specs=[
                    pl.BlockSpec((1, out_D), lambda i: (0, 0)),   # scale (resident)
                    pl.BlockSpec((1, out_D), lambda i: (0, 0)),   # phase (resident)
                    pl.BlockSpec((tm, D), lambda i: (i, 0)),      # x rows
                ],
                out_specs=pl.BlockSpec((tm, out_D), lambda i: (i, 0)),
            ),
            compiler_params=pltpu.CompilerParams(
                dimension_semantics=("parallel",),
                vmem_limit_bytes=vmem_limit,
            ),
            cost_estimate=pl.CostEstimate(
                flops=2 * N * out_D,
                transcendentals=N * out_D,
                bytes_accessed=N * (D + out_D) * itemsize,
            ),
        )

    try:
        out2d = _build(_pe_kernel_dense)(scale, phase, x2d)
    except Exception:
        # TODO(synk): fallback for Mosaic builds lacking unaligned lane concat;
        # uses the previously-validated per-channel column-slice kernel.
        out2d = _build(_pe_kernel_sliced)(scale, phase, x2d)

    return out2d.reshape(*orig_shape[:-1], out_D)


def positional_encoding_ref(x: jax.Array, L_embed: int = 10) -> jax.Array:
    """Pure-JAX reference mirroring the PyTorch forward."""
    pe = [x]
    for i in range(L_embed):
        for fn in (jnp.sin, jnp.cos):
            pe.append(fn(2.0 ** i * x))
    return jnp.concatenate(pe, axis=-1)


if __name__ == "__main__":
    L_embed = 10
    key = jax.random.PRNGKey(0)
    # NeRF-style coordinates in [-1, 1): batch=2, seq=8, feature dim=16.
    x = jax.random.uniform(key, (2, 8, 16), dtype=jnp.float32, minval=-1.0, maxval=1.0)

    out = jax.block_until_ready(positional_encoding(x, L_embed=L_embed))
    ref = positional_encoding_ref(x, L_embed=L_embed)

    assert out.shape == (2, 8, 16 * (1 + 2 * L_embed)), out.shape
    # cos channels are computed as sin(y + pi/2); the pi/2 add rounds at
    # ~ulp(2^(L-1) * |x|), so use a slightly looser-than-eps tolerance.
    assert jnp.allclose(out, ref, atol=1e-3, rtol=1e-3), "mismatch vs reference"

    # Ragged-N (partial final block) path with a small, NeRF-like feature dim.
    x2 = jax.random.uniform(jax.random.PRNGKey(1), (5, 3), dtype=jnp.float32,
                            minval=-1.0, maxval=1.0)
    out2 = jax.block_until_ready(positional_encoding(x2, L_embed=4))
    ref2 = positional_encoding_ref(x2, L_embed=4)
    assert out2.shape == (5, 3 * (1 + 2 * 4)), out2.shape
    assert jnp.allclose(out2, ref2, atol=1e-4, rtol=1e-4), "ragged-N mismatch"

    print("KERNEL_OK")
</pallas_src>

<mosaic_0001>
module attributes {stable_mosaic.version = 11 : i64} {
  func.func @_pe_kernel_dense(%arg0: i32, %arg1: memref<1x336xf32, #tpu.memory_space<vmem>>, %arg2: memref<1x336xf32, #tpu.memory_space<vmem>>, %arg3: memref<8x16xf32, #tpu.memory_space<vmem>>, %arg4: memref<8x336xf32, #tpu.memory_space<vmem>>) attributes {dimension_semantics = [#tpu.dimension_semantics<parallel>], iteration_bounds = array<i64: 2>, scalar_prefetch = 0 : i64, scratch_operands = 0 : i64, tpu.core_type = #tpu.core_type<tc>, window_params = [{pipeline_mode = #tpu.pipeline_mode<synchronous>, transform_indices = @transform_0, window_bounds = array<i64: 1, 336>}, {pipeline_mode = #tpu.pipeline_mode<synchronous>, transform_indices = @transform_1, window_bounds = array<i64: 1, 336>}, {transform_indices = @transform_2, window_bounds = array<i64: 8, 16>}, {transform_indices = @transform_3, window_bounds = array<i64: 8, 336>}]} {
    %c0 = arith.constant 0 : index
    %c0_0 = arith.constant 0 : index
    %0 = vector.load %arg3[%c0, %c0_0] : memref<8x16xf32, #tpu.memory_space<vmem>>, vector<8x16xf32>
    %1 = tpu.concatenate %0, %0, %0, %0, %0, %0, %0, %0, %0, %0, %0, %0, %0, %0, %0, %0 in 1 : vector<8x16xf32>, vector<8x16xf32>, vector<8x16xf32>, vector<8x16xf32>, vector<8x16xf32>, vector<8x16xf32>, vector<8x16xf32>, vector<8x16xf32>, vector<8x16xf32>, vector<8x16xf32>, vector<8x16xf32>, vector<8x16xf32>, vector<8x16xf32>, vector<8x16xf32>, vector<8x16xf32>, vector<8x16xf32> -> vector<8x256xf32>
    %2 = tpu.concatenate %0, %0, %0, %0, %0 in 1 : vector<8x16xf32>, vector<8x16xf32>, vector<8x16xf32>, vector<8x16xf32>, vector<8x16xf32> -> vector<8x80xf32>
    %3 = tpu.concatenate %1, %2 in 1 : vector<8x256xf32>, vector<8x80xf32> -> vector<8x336xf32>
    %c0_1 = arith.constant 0 : index
    %c0_2 = arith.constant 0 : index
    %4 = vector.load %arg1[%c0_1, %c0_2] : memref<1x336xf32, #tpu.memory_space<vmem>>, vector<1x336xf32>
    %5 = vector.broadcast %4 : vector<1x336xf32> to vector<8x336xf32>
    %6 = arith.mulf %3, %5 : vector<8x336xf32>
    %c0_3 = arith.constant 0 : index
    %c0_4 = arith.constant 0 : index
    %7 = vector.load %arg2[%c0_3, %c0_4] : memref<1x336xf32, #tpu.memory_space<vmem>>, vector<1x336xf32>
    %8 = vector.broadcast %7 : vector<1x336xf32> to vector<8x336xf32>
    %9 = arith.addf %6, %8 : vector<8x336xf32>
    %10 = tpu.iota {dimensions = array<i32: 1>} : vector<8x336xi32>
    %c16_i32 = arith.constant 16 : i32
    %11 = vector.broadcast %c16_i32 : i32 to vector<8x336xi32>
    %12 = arith.cmpi slt, %10, %11 : vector<8x336xi32>
    %13 = math.sin %9 : vector<8x336xf32>
    %14 = arith.select %12, %3, %13 : vector<8x336xi1>, vector<8x336xf32>
    %c0_5 = arith.constant 0 : index
    %c0_6 = arith.constant 0 : index
    %15 = vector.load %arg4[%c0_5, %c0_6] : memref<8x336xf32, #tpu.memory_space<vmem>>, vector<8x336xf32>
    tpu.vector_store %arg4[%c0_5, %c0_6], %14 {strides = array<i32>} : memref<8x336xf32, #tpu.memory_space<vmem>>, vector<8x336xf32>,
    return
  }
  func.func @transform_0(%arg0: i32) -> (i32, i32) {
    %c0_i32 = arith.constant 0 : i32
    %c0_i32_0 = arith.constant 0 : i32
    %c0_i32_1 = arith.constant 0 : i32
    return %c0_i32, %c0_i32_0 : i32, i32
  }
  func.func @transform_1(%arg0: i32) -> (i32, i32) {
    %c0_i32 = arith.constant 0 : i32
    %c0_i32_0 = arith.constant 0 : i32
    %c0_i32_1 = arith.constant 0 : i32
    return %c0_i32, %c0_i32_0 : i32, i32
  }
  func.func @transform_2(%arg0: i32) -> (i32, i32) {
    %c0_i32 = arith.constant 0 : i32
    %c0_i32_0 = arith.constant 0 : i32
    return %arg0, %c0_i32 : i32, i32
  }
  func.func @transform_3(%arg0: i32) -> (i32, i32) {
    %c0_i32 = arith.constant 0 : i32
    %c0_i32_0 = arith.constant 0 : i32
    return %arg0, %c0_i32 : i32, i32
  }
}

module attributes {stable_mosaic.version = 11 : i64} {
  func.func @_pe_kernel_sliced(%arg0: i32, %arg1: memref<1x336xf32, #tpu.memory_space<vmem>>, %arg2: memref<1x336xf32, #tpu.memory_space<vmem>>, %arg3: memref<8x16xf32, #tpu.memory_space<vmem>>, %arg4: memref<8x336xf32, #tpu.memory_space<vmem>>) attributes {dimension_semantics = [#tpu.dimension_semantics<parallel>], iteration_bounds = array<i64: 2>, scalar_prefetch = 0 : i64, scratch_operands = 0 : i64, tpu.core_type = #tpu.core_type<tc>, window_params = [{pipeline_mode = #tpu.pipeline_mode<synchronous>, transform_indices = @transform_0, window_bounds = array<i64: 1, 336>}, {pipeline_mode = #tpu.pipeline_mode<synchronous>, transform_indices = @transform_1, window_bounds = array<i64: 1, 336>}, {transform_indices = @transform_2, window_bounds = array<i64: 8, 16>}, {transform_indices = @transform_3, window_bounds = array<i64: 8, 336>}]} {
    %c0 = arith.constant 0 : index
    %c0_0 = arith.constant 0 : index
    %0 = vector.load %arg3[%c0, %c0_0] : memref<8x16xf32, #tpu.memory_space<vmem>>, vector<8x16xf32>
    %c0_1 = arith.constant 0 : index
    %c0_2 = arith.constant 0 : index
    %1 = vector.load %arg4[%c0_1, %c0_2] : memref<8x336xf32, #tpu.memory_space<vmem>>, vector<8x16xf32>
    tpu.vector_store %arg4[%c0_1, %c0_2], %0 {strides = array<i32>} : memref<8x336xf32, #tpu.memory_space<vmem>>, vector<8x16xf32>,
    %cst = arith.constant 1.000000e+00 : f32
    %2 = vector.broadcast %cst : f32 to vector<8x16xf32>
    %3 = arith.mulf %0, %2 : vector<8x16xf32>
    %4 = math.sin %3 : vector<8x16xf32>
    %c0_3 = arith.constant 0 : index
    %c16 = arith.constant 16 : index
    %5 = vector.load %arg4[%c0_3, %c16] : memref<8x336xf32, #tpu.memory_space<vmem>>, vector<8x16xf32>
    tpu.vector_store %arg4[%c0_3, %c16], %4 {strides = array<i32>} : memref<8x336xf32, #tpu.memory_space<vmem>>, vector<8x16xf32>,
    %6 = math.cos %3 : vector<8x16xf32>
    %c0_4 = arith.constant 0 : index
    %c32 = arith.constant 32 : index
    %7 = vector.load %arg4[%c0_4, %c32] : memref<8x336xf32, #tpu.memory_space<vmem>>, vector<8x16xf32>
    tpu.vector_store %arg4[%c0_4, %c32], %6 {strides = array<i32>} : memref<8x336xf32, #tpu.memory_space<vmem>>, vector<8x16xf32>,
    %cst_5 = arith.constant 2.000000e+00 : f32
    %8 = vector.broadcast %cst_5 : f32 to vector<8x16xf32>
    %9 = arith.mulf %0, %8 : vector<8x16xf32>
    %10 = math.sin %9 : vector<8x16xf32>
    %c0_6 = arith.constant 0 : index
    %c48 = arith.constant 48 : index
    %11 = vector.load %arg4[%c0_6, %c48] : memref<8x336xf32, #tpu.memory_space<vmem>>, vector<8x16xf32>
    tpu.vector_store %arg4[%c0_6, %c48], %10 {strides = array<i32>} : memref<8x336xf32, #tpu.memory_space<vmem>>, vector<8x16xf32>,
    %12 = math.cos %9 : vector<8x16xf32>
    %c0_7 = arith.constant 0 : index
    %c64 = arith.constant 64 : index
    %13 = vector.load %arg4[%c0_7, %c64] : memref<8x336xf32, #tpu.memory_space<vmem>>, vector<8x16xf32>
    tpu.vector_store %arg4[%c0_7, %c64], %12 {strides = array<i32>} : memref<8x336xf32, #tpu.memory_space<vmem>>, vector<8x16xf32>,
    %cst_8 = arith.constant 4.000000e+00 : f32
    %14 = vector.broadcast %cst_8 : f32 to vector<8x16xf32>
    %15 = arith.mulf %0, %14 : vector<8x16xf32>
    %16 = math.sin %15 : vector<8x16xf32>
    %c0_9 = arith.constant 0 : index
    %c80 = arith.constant 80 : index
    %17 = vector.load %arg4[%c0_9, %c80] : memref<8x336xf32, #tpu.memory_space<vmem>>, vector<8x16xf32>
    tpu.vector_store %arg4[%c0_9, %c80], %16 {strides = array<i32>} : memref<8x336xf32, #tpu.memory_space<vmem>>, vector<8x16xf32>,
    %18 = math.cos %15 : vector<8x16xf32>
    %c0_10 = arith.constant 0 : index
    %c96 = arith.constant 96 : index
    %19 = vector.load %arg4[%c0_10, %c96] : memref<8x336xf32, #tpu.memory_space<vmem>>, vector<8x16xf32>
    tpu.vector_store %arg4[%c0_10, %c96], %18 {strides = array<i32>} : memref<8x336xf32, #tpu.memory_space<vmem>>, vector<8x16xf32>,
    %cst_11 = arith.constant 8.000000e+00 : f32
    %20 = vector.broadcast %cst_11 : f32 to vector<8x16xf32>
    %21 = arith.mulf %0, %20 : vector<8x16xf32>
    %22 = math.sin %21 : vector<8x16xf32>
    %c0_12 = arith.constant 0 : index
    %c112 = arith.constant 112 : index
    %23 = vector.load %arg4[%c0_12, %c112] : memref<8x336xf32, #tpu.memory_space<vmem>>, vector<8x16xf32>
    tpu.vector_store %arg4[%c0_12, %c112], %22 {strides = array<i32>} : memref<8x336xf32, #tpu.memory_space<vmem>>, vector<8x16xf32>,
    %24 = math.cos %21 : vector<8x16xf32>
    %c0_13 = arith.constant 0 : index
    %c128 = arith.constant 128 : index
    %25 = vector.load %arg4[%c0_13, %c128] : memref<8x336xf32, #tpu.memory_space<vmem>>, vector<8x16xf32>
    tpu.vector_store %arg4[%c0_13, %c128], %24 {strides = array<i32>} : memref<8x336xf32, #tpu.memory_space<vmem>>, vector<8x16xf32>,
    %cst_14 = arith.constant 1.600000e+01 : f32
    %26 = vector.broadcast %cst_14 : f32 to vector<8x16xf32>
    %27 = arith.mulf %0, %26 : vector<8x16xf32>
    %28 = math.sin %27 : vector<8x16xf32>
    %c0_15 = arith.constant 0 : index
    %c144 = arith.constant 144 : index
    %29 = vector.load %arg4[%c0_15, %c144] : memref<8x336xf32, #tpu.memory_space<vmem>>, vector<8x16xf32>
    tpu.vector_store %arg4[%c0_15, %c144], %28 {strides = array<i32>} : memref<8x336xf32, #tpu.memory_space<vmem>>, vector<8x16xf32>,
    %30 = math.cos %27 : vector<8x16xf32>
    %c0_16 = arith.constant 0 : index
    %c160 = arith.constant 160 : index
    %31 = vector.load %arg4[%c0_16, %c160] : memref<8x336xf32, #tpu.memory_space<vmem>>, vector<8x16xf32>
    tpu.vector_store %arg4[%c0_16, %c160], %30 {strides = array<i32>} : memref<8x336xf32, #tpu.memory_space<vmem>>, vector<8x16xf32>,
    %cst_17 = arith.constant 3.200000e+01 : f32
    %32 = vector.broadcast %cst_17 : f32 to vector<8x16xf32>
    %33 = arith.mulf %0, %32 : vector<8x16xf32>
    %34 = math.sin %33 : vector<8x16xf32>
    %c0_18 = arith.constant 0 : index
    %c176 = arith.constant 176 : index
    %35 = vector.load %arg4[%c0_18, %c176] : memref<8x336xf32, #tpu.memory_space<vmem>>, vector<8x16xf32>
    tpu.vector_store %arg4[%c0_18, %c176], %34 {strides = array<i32>} : memref<8x336xf32, #tpu.memory_space<vmem>>, vector<8x16xf32>,
    %36 = math.cos %33 : vector<8x16xf32>
    %c0_19 = arith.constant 0 : index
    %c192 = arith.constant 192 : index
    %37 = vector.load %arg4[%c0_19, %c192] : memref<8x336xf32, #tpu.memory_space<vmem>>, vector<8x16xf32>
    tpu.vector_store %arg4[%c0_19, %c192], %36 {strides = array<i32>} : memref<8x336xf32, #tpu.memory_space<vmem>>, vector<8x16xf32>,
    %cst_20 = arith.constant 6.400000e+01 : f32
    %38 = vector.broadcast %cst_20 : f32 to vector<8x16xf32>
    %39 = arith.mulf %0, %38 : vector<8x16xf32>
    %40 = math.sin %39 : vector<8x16xf32>
    %c0_21 = arith.constant 0 : index
    %c208 = arith.constant 208 : index
    %41 = vector.load %arg4[%c0_21, %c208] : memref<8x336xf32, #tpu.memory_space<vmem>>, vector<8x16xf32>
    tpu.vector_store %arg4[%c0_21, %c208], %40 {strides = array<i32>} : memref<8x336xf32, #tpu.memory_space<vmem>>, vector<8x16xf32>,
    %42 = math.cos %39 : vector<8x16xf32>
    %c0_22 = arith.constant 0 : index
    %c224 = arith.constant 224 : index
    %43 = vector.load %arg4[%c0_22, %c224] : memref<8x336xf32, #tpu.memory_space<vmem>>, vector<8x16xf32>
    tpu.vector_store %arg4[%c0_22, %c224], %42 {strides = array<i32>} : memref<8x336xf32, #tpu.memory_space<vmem>>, vector<8x16xf32>,
    %cst_23 = arith.constant 1.280000e+02 : f32
    %44 = vector.broadcast %cst_23 : f32 to vector<8x16xf32>
    %45 = arith.mulf %0, %44 : vector<8x16xf32>
    %46 = math.sin %45 : vector<8x16xf32>
    %c0_24 = arith.constant 0 : index
    %c240 = arith.constant 240 : index
    %47 = vector.load %arg4[%c0_24, %c240] : memref<8x336xf32, #tpu.memory_space<vmem>>, vector<8x16xf32>
    tpu.vector_store %arg4[%c0_24, %c240], %46 {strides = array<i32>} : memref<8x336xf32, #tpu.memory_space<vmem>>, vector<8x16xf32>,
    %48 = math.cos %45 : vector<8x16xf32>
    %c0_25 = arith.constant 0 : index
    %c256 = arith.constant 256 : index
    %49 = vector.load %arg4[%c0_25, %c256] : memref<8x336xf32, #tpu.memory_space<vmem>>, vector<8x16xf32>
    tpu.vector_store %arg4[%c0_25, %c256], %48 {strides = array<i32>} : memref<8x336xf32, #tpu.memory_space<vmem>>, vector<8x16xf32>,
    %cst_26 = arith.constant 2.560000e+02 : f32
    %50 = vector.broadcast %cst_26 : f32 to vector<8x16xf32>
    %51 = arith.mulf %0, %50 : vector<8x16xf32>
    %52 = math.sin %51 : vector<8x16xf32>
    %c0_27 = arith.constant 0 : index
    %c272 = arith.constant 272 : index
    %53 = vector.load %arg4[%c0_27, %c272] : memref<8x336xf32, #tpu.memory_space<vmem>>, vector<8x16xf32>
    tpu.vector_store %arg4[%c0_27, %c272], %52 {strides = array<i32>} : memref<8x336xf32, #tpu.memory_space<vmem>>, vector<8x16xf32>,
    %54 = math.cos %51 : vector<8x16xf32>
    %c0_28 = arith.constant 0 : index
    %c288 = arith.constant 288 : index
    %55 = vector.load %arg4[%c0_28, %c288] : memref<8x336xf32, #tpu.memory_space<vmem>>, vector<8x16xf32>
    tpu.vector_store %arg4[%c0_28, %c288], %54 {strides = array<i32>} : memref<8x336xf32, #tpu.memory_space<vmem>>, vector<8x16xf32>,
    %cst_29 = arith.constant 5.120000e+02 : f32
    %56 = vector.broadcast %cst_29 : f32 to vector<8x16xf32>
    %57 = arith.mulf %0, %56 : vector<8x16xf32>
    %58 = math.sin %57 : vector<8x16xf32>
    %c0_30 = arith.constant 0 : index
    %c304 = arith.constant 304 : index
    %59 = vector.load %arg4[%c0_30, %c304] : memref<8x336xf32, #tpu.memory_space<vmem>>, vector<8x16xf32>
    tpu.vector_store %arg4[%c0_30, %c304], %58 {strides = array<i32>} : memref<8x336xf32, #tpu.memory_space<vmem>>, vector<8x16xf32>,
    %60 = math.cos %57 : vector<8x16xf32>
    %c0_31 = arith.constant 0 : index
    %c320 = arith.constant 320 : index
    %61 = vector.load %arg4[%c0_31, %c320] : memref<8x336xf32, #tpu.memory_space<vmem>>, vector<8x16xf32>
    tpu.vector_store %arg4[%c0_31, %c320], %60 {strides = array<i32>} : memref<8x336xf32, #tpu.memory_space<vmem>>, vector<8x16xf32>,
    return
  }
  func.func @transform_0(%arg0: i32) -> (i32, i32) {
    %c0_i32 = arith.constant 0 : i32
    %c0_i32_0 = arith.constant 0 : i32
    %c0_i32_1 = arith.constant 0 : i32
    return %c0_i32, %c0_i32_0 : i32, i32
  }
  func.func @transform_1(%arg0: i32) -> (i32, i32) {
    %c0_i32 = arith.constant 0 : i32
    %c0_i32_0 = arith.constant 0 : i32
    %c0_i32_1 = arith.constant 0 : i32
    return %c0_i32, %c0_i32_0 : i32, i32
  }
  func.func @transform_2(%arg0: i32) -> (i32, i32) {
    %c0_i32 = arith.constant 0 : i32
    %c0_i32_0 = arith.constant 0 : i32
    return %arg0, %c0_i32 : i32, i32
  }
  func.func @transform_3(%arg0: i32) -> (i32, i32) {
    %c0_i32 = arith.constant 0 : i32
    %c0_i32_0 = arith.constant 0 : i32
    return %arg0, %c0_i32 : i32, i32
  }
}

</mosaic_0001>

<llo_original>
// kernel: tpu_custom_call.1
$region0: #{tpu_custom_call.1}
  #allocation0 [shape = 'u32[]', space=smem, size = 0x4, offset = 0x4, fixed_abs, tag = 'smem constant byte address 0x4 - core index']
  #allocation1 [shape = 'u32[144,128]{1,0:T(1,128)}', space=vmem, size = 0x12000, scoped, tag = 'internal scratch']
  %s0 = inlined_call_operand.hbm [shape: f32[1,336], index: 0, kind: input, shape index: {}]
  %s1 = inlined_call_operand.hbm [shape: f32[1,336], index: 1, kind: input, shape index: {}]
  %s2 = inlined_call_operand.hbm [shape: f32[16,16], index: 2, kind: input, shape index: {}]
  %s3 = inlined_call_operand.hbm [shape: f32[16,336], index: 3, kind: output, shape index: {}]
  %s4 = sld [smem:[#allocation0]]
  $region57: #{tpu_custom_call.1} parent=0
    _
  %s6 = ssub.s32 1, %s4
  %s7 = scalar_select 0, %s6, %s4
  $region1: #{tpu_custom_call.1} parent=0
    #allocation2 [shape = 'u8[1536]{0}', space=vmem, size = 0x800, scoped, tag = 'input window, operand 0, single buffered']
    #allocation3 [shape = 's32[2]{0}', space=sflag, size = 0x8, scoped, tag = 'scoped memory for tpu_custom_call.1']
    #allocation4 [shape = 's32[2]{0}', space=sflag, size = 0x8, scoped, tag = 'scoped memory for tpu_custom_call.1']
    #allocation5 [shape = 'u8[1536]{0}', space=vmem, size = 0x800, scoped, tag = 'input window, operand 1, single buffered']
    #allocation6 [shape = 's32[1]{0}', space=sflag, size = 0x4, scoped, tag = 'scoped memory for tpu_custom_call.1']
    #allocation7 [shape = 'u8[8192]{0}', space=vmem, size = 0x2000, scoped, tag = 'input window, operand 2']
    #allocation8 [shape = 'u8[24576]{0}', space=vmem, size = 0x6000, scoped, tag = 'output window, operand 0']
    %8 = vsyncpa [#allocation3], 0
    %9 = vsyncpa [#allocation6], 0
    %10 = vsyncpa [#allocation4], 0
    %s11 = scalar_lea.sflag [#allocation4], 1
    %12 = vsyncpa %s11, 0
    loop: start=0, step=1, limit=4
    $region2: #{tpu_custom_call.1} parent=1 // loop_pre_header
      _
    $region3: #{tpu_custom_call.1} parent=1 // loop_header
      %s14 = sphi 0, %s18
      %p15 = scmp.ge.s32.totalorder %s14, 4
      %s22 = sphi 0, %s22
      %s24 = sphi 0, %s22
      %s25 = sphi 0, %s24
      %s39 = sphi 0, %s25
      %s43 = sphi 0, %s43
      %s45 = sphi 0, %s43
      %s46 = sphi 0, %s45
      %s60 = sphi 0, %s46
      %s66 = sphi 0, %s68
      %s69 = sphi 0, %s66
      %s70 = sphi 0, %s69
      %s86 = sphi 0, %s70
      %s92 = sphi 0, %s94
      %s95 = sphi 0, %s92
      %s96 = sphi 0, %s95
      %s112 = sphi 0, %s96
    $region4: #{tpu_custom_call.1} parent=1 // loop_header_branch
      %17 = sbr.rel (%p15) target = $region8
    $region5: #{tpu_custom_call.1} parent=1 // loop_body
      %s19 = ssub.s32 %s14, 1
      %s20 = ssub.s32 %s14, 2
      %s21 = sadd.s32 %s14, 1
      %s23 = sadd.s32 %s22, 1
      %p26 = scmp.eq.s32.totalorder %s14, 1
      %p27 = scmp.ne.s32.totalorder %s22, %s24
      %p28 = scmp.eq.s32.totalorder %s14, 0
      %p29 = por %p27, %p28
      %p30 = scmp.ne.s32.totalorder %s22, %s24
      %p31 = scmp.eq.s32.totalorder %s19, 1
      %p32 = por %p30, %p31
      %p33 = scmp.ne.s32.totalorder %s24, %s25
      %p34 = scmp.eq.s32.totalorder %s19, 0
      %p35 = por %p33, %p34
      %p36 = scmp.ne.s32.totalorder %s24, %s25
      %p37 = scmp.eq.s32.totalorder %s20, 1
      %p38 = por %p36, %p37
      %p40 = scmp.ne.s32.totalorder %s25, %s39
      %p41 = scmp.eq.s32.totalorder %s20, 0
      %p42 = por %p40, %p41
      %s44 = sadd.s32 %s43, 1
      %p47 = scmp.eq.s32.totalorder %s14, 1
      %p48 = scmp.ne.s32.totalorder %s43, %s45
      %p49 = scmp.eq.s32.totalorder %s14, 0
      %p50 = por %p48, %p49
      %p51 = scmp.ne.s32.totalorder %s43, %s45
      %p52 = scmp.eq.s32.totalorder %s19, 1
      %p53 = por %p51, %p52
      %p54 = scmp.ne.s32.totalorder %s45, %s46
      %p55 = scmp.eq.s32.totalorder %s19, 0
      %p56 = por %p54, %p55
      %p57 = scmp.ne.s32.totalorder %s45, %s46
      %p58 = scmp.eq.s32.totalorder %s20, 1
      %p59 = por %p57, %p58
      %p61 = scmp.ne.s32.totalorder %s46, %s60
      %p62 = scmp.eq.s32.totalorder %s20, 0
      %p63 = por %p61, %p62
      %s64 = ssub.s32 %s14, %s21
      %p65 = scmp.eq.s32.totalorder %s64, 0
      %s67 = sadd.s32 %s66, 1
      %s68 = scalar_select %p65, %s66, %s67
      %p71 = pneg %p65
      %p72 = scmp.eq.s32.totalorder %s14, 1
      %p73 = por %p71, %p72
      %p74 = scmp.ne.s32.totalorder %s66, %s69
      %p75 = scmp.eq.s32.totalorder %s14, 0
      %p76 = por %p74, %p75
      %p77 = scmp.ne.s32.totalorder %s66, %s69
      %p78 = scmp.eq.s32.totalorder %s19, 1
      %p79 = por %p77, %p78
      %p80 = scmp.ne.s32.totalorder %s69, %s70
      %p81 = scmp.eq.s32.totalorder %s19, 0
      %p82 = por %p80, %p81
      %p83 = scmp.ne.s32.totalorder %s69, %s70
      %p84 = scmp.eq.s32.totalorder %s20, 1
      %p85 = por %p83, %p84
      %p87 = scmp.ne.s32.totalorder %s70, %s86
      %p88 = scmp.eq.s32.totalorder %s20, 0
      %p89 = por %p87, %p88
      %s90 = ssub.s32 %s14, %s21
      %p91 = scmp.eq.s32.totalorder %s90, 0
      %s93 = sadd.s32 %s92, 1
      %s94 = scalar_select %p91, %s92, %s93
      %p97 = pneg %p91
      %p98 = scmp.eq.s32.totalorder %s14, 1
      %p99 = por %p97, %p98
      %p100 = scmp.ne.s32.totalorder %s92, %s95
      %p101 = scmp.eq.s32.totalorder %s14, 0
      %p102 = por %p100, %p101
      %p103 = scmp.ne.s32.totalorder %s92, %s95
      %p104 = scmp.eq.s32.totalorder %s19, 1
      %p105 = por %p103, %p104
      %p106 = scmp.ne.s32.totalorder %s95, %s96
      %p107 = scmp.eq.s32.totalorder %s19, 0
      %p108 = por %p106, %p107
      %p109 = scmp.ne.s32.totalorder %s95, %s96
      %p110 = scmp.eq.s32.totalorder %s20, 1
      %p111 = por %p109, %p110
      %p113 = scmp.ne.s32.totalorder %s96, %s112
      %p114 = scmp.eq.s32.totalorder %s20, 0
      %p115 = por %p113, %p114
      %p116 = scmp.le.s32.totalorder 1, %s14
      %p117 = scmp.lt.s32.totalorder %s14, 3
      %p118 = pnand %p116, %p117
      %p119 = pneg %p118
      // Predicated region
      $region9: #{tpu_custom_call.1} parent=5 // pred_check
        _
      $region10: #{tpu_custom_call.1} parent=5 // pred_check_branch
        %121 = sbr.rel (%p118) target = $region12
      $region11: #{tpu_custom_call.1} parent=5 // pred_region
        %s122 = ssub.s32 %s14, 1
        // Predicated region
        $region13: #{tpu_custom_call.1} parent=11 // pred_check
          %p123 = pneg %p35
        $region14: #{tpu_custom_call.1} parent=11 // pred_check_branch
          %125 = sbr.rel (%p123) target = $region16
        $region15: #{tpu_custom_call.1} parent=11 // pred_region
          %s127 = ssub.s32 48, 48
          %128 = vsyncadd [#allocation3], %s127
          %s130 = sshll.u32 [#allocation2], 4
          %s131 = int_to_ptr.vmem [resolvable:$true] %s130
          %133 = dma.hbm_to_vmem [thread:$0]  %s0, 48, %s131, [#allocation3]
        $region16: #{tpu_custom_call.1} parent=11 // pred_fallthru
          _
        // Predicated region
        $region17: #{tpu_custom_call.1} parent=11 // pred_check
          %p134 = pneg %p56
        $region18: #{tpu_custom_call.1} parent=11 // pred_check_branch
          %136 = sbr.rel (%p134) target = $region20
        $region19: #{tpu_custom_call.1} parent=11 // pred_region
          %s138 = ssub.s32 48, 48
          %139 = vsyncadd [#allocation6], %s138
          %s141 = sshll.u32 [#allocation5], 4
          %s142 = int_to_ptr.vmem [resolvable:$true] %s141
          %144 = dma.hbm_to_vmem [thread:$0]  %s1, 48, %s142, [#allocation6]
        $region20: #{tpu_custom_call.1} parent=11 // pred_fallthru
          _
      $region12: #{tpu_custom_call.1} parent=5 // pred_fallthru
        _
      %p145 = scmp.lt.s32.totalorder %s14, 2
      // Predicated region
      $region21: #{tpu_custom_call.1} parent=5 // pred_check
        %p146 = pneg %p145
      $region22: #{tpu_custom_call.1} parent=5 // pred_check_branch
        %148 = sbr.rel (%p146) target = $region24
      $region23: #{tpu_custom_call.1} parent=5 // pred_region
        // Predicated region
        $region25: #{tpu_custom_call.1} parent=23 // pred_check
          %p149 = pneg %p76
        $region26: #{tpu_custom_call.1} parent=23 // pred_check_branch
          %151 = sbr.rel (%p149) target = $region28
        $region27: #{tpu_custom_call.1} parent=23 // pred_region
          %s152 = sand.u32 %s14, 1
          %s153 = scalar_lea.sflag [#allocation3], %s152
          %s154 = sand.u32 %s66, 1
          %s155 = smul.addr %s154, 8
          %s156 = scalar_lea.vmem [#allocation7], %s155
          %s158 = ssub.s32 128, 128
          %159 = vsyncadd %s153, %s158
          %s160 = smul.addr %s14, 128
          %s161 = scalar_lea.hbm %s2, %s160
          %s163 = sshll.u32 %s156, 4
          %s164 = int_to_ptr.vmem [resolvable:$true] %s163
          %166 = dma.hbm_to_vmem [thread:$0]  %s161, 128, %s164, %s153
        $region28: #{tpu_custom_call.1} parent=23 // pred_fallthru
          _
      $region24: #{tpu_custom_call.1} parent=5 // pred_fallthru
        _
      %p167 = scmp.le.s32.totalorder 1, %s14
      %p168 = scmp.lt.s32.totalorder %s14, 3
      %p169 = pnand %p167, %p168
      %p170 = pneg %p169
      // Predicated region
      $region29: #{tpu_custom_call.1} parent=5 // pred_check
        _
      $region30: #{tpu_custom_call.1} parent=5 // pred_check_branch
        %172 = sbr.rel (%p169) target = $region32
      $region31: #{tpu_custom_call.1} parent=5 // pred_region
        %s173 = ssub.s32 %s14, 1
        // Predicated region
        $region33: #{tpu_custom_call.1} parent=31 // pred_check
          %p174 = pneg %p35
        $region34: #{tpu_custom_call.1} parent=31 // pred_check_branch
          %176 = sbr.rel (%p174) target = $region36
        $region35: #{tpu_custom_call.1} parent=31 // pred_region
          %177 = dma.done [#allocation3], 48
        $region36: #{tpu_custom_call.1} parent=31 // pred_fallthru
          _
        // Predicated region
        $region37: #{tpu_custom_call.1} parent=31 // pred_check
          %p178 = pneg %p56
        $region38: #{tpu_custom_call.1} parent=31 // pred_check_branch
          %180 = sbr.rel (%p178) target = $region40
        $region39: #{tpu_custom_call.1} parent=31 // pred_region
          %181 = dma.done [#allocation6], 48
        $region40: #{tpu_custom_call.1} parent=31 // pred_fallthru
          _
        %s182 = sand.u32 %s19, 1
        %s183 = scalar_lea.sflag [#allocation3], %s182
        %s184 = sand.u32 %s69, 1
        %s185 = smul.addr %s184, 8
        %s186 = scalar_lea.vmem [#allocation7], %s185
        // Predicated region
        $region41: #{tpu_custom_call.1} parent=31 // pred_check
          %p187 = pneg %p82
        $region42: #{tpu_custom_call.1} parent=31 // pred_check_branch
          %189 = sbr.rel (%p187) target = $region44
        $region43: #{tpu_custom_call.1} parent=31 // pred_region
          %190 = dma.done %s183, 128
        $region44: #{tpu_custom_call.1} parent=31 // pred_fallthru
          _
        %p191 = pneg %p35
        %p192 = pneg %p32
        %p193 = pneg %p56
        %p194 = pneg %p53
        %s195 = sand.u32 %s19, 1
        %s196 = scalar_lea.sflag [#allocation3], %s195
        %s197 = sand.u32 %s69, 1
        %s198 = smul.addr %s197, 8
        %s199 = scalar_lea.vmem [#allocation7], %s198
        %p200 = pneg %p82
        %p201 = pneg %p79
        %p202 = pneg %p108
        %p203 = pneg %p105
        %s204 = sand.u32 %s95, 1
        %s205 = scalar_lea.sflag [#allocation4], %s204
        %s206 = sand.u32 %s95, 1
        %s207 = smul.addr %s206, 24
        %s208 = scalar_lea.vmem [#allocation8], %s207
        %v209 = vld [vmem:[%s186] sm:$0xff]
        %211 = vrot.lane.b32.xlu0 %v209, 16
        %v212 = vpop.permute.xlu0 %211
        %214 = vrot.lane.b32.xlu0 %v209, 32
        %v215 = vpop.permute.xlu0 %214
        %217 = vrot.lane.b32.xlu0 %v209, 48
        %v218 = vpop.permute.xlu0 %217
        %220 = vrot.lane.b32.xlu0 %v209, 64
        %v221 = vpop.permute.xlu0 %220
        %223 = vrot.lane.b32.xlu0 %v209, 80
        %v224 = vpop.permute.xlu0 %223
        %226 = vrot.lane.b32.xlu0 %v209, 96
        %v227 = vpop.permute.xlu0 %226
        %229 = vrot.lane.b32.xlu0 %v209, 112
        %v230 = vpop.permute.xlu0 %229
        %vm232 = vcmask 130048
        %v233 = vsel %vm232, %v209, %v212
        %vm234 = vcmask 261120
        %v235 = vsel %vm234, %v233, %v215
        %vm236 = vcmask 392192
        %v237 = vsel %vm236, %v235, %v218
        %vm238 = vcmask 523264
        %v239 = vsel %vm238, %v237, %v221
        %vm240 = vcmask 654336
        %v241 = vsel %vm240, %v239, %v224
        %vm242 = vcmask 785408
        %v243 = vsel %vm242, %v241, %v227
        %vm244 = vcmask 916480
        %v245 = vsel %vm244, %v243, %v230
        %v246 = vld [vmem:[#allocation2] sm:$0x7]
        %v248 = vlaneseq
        %v249 = vshrl.u32 %v248, 7
        %v250 = vsub.s32 0, %v249
        %v251 = vrot.slane %v246, %v250
        %v252 = vlaneseq
        %v253 = vshrl.u32 %v252, 7
        %v254 = vsub.s32 1, %v253
        %v255 = vrot.slane %v246, %v254
        %v256 = vlaneseq
        %v257 = vshrl.u32 %v256, 7
        %v258 = vsub.s32 2, %v257
        %v259 = vrot.slane %v246, %v258
        %v263 = vmul.f32 %v245, %v251
        %v264 = vmul.f32 %v245, %v255
        %v265 = vmul.f32 %v239, %v259
        %v266 = vld [vmem:[#allocation5] sm:$0x7]
        %v268 = vlaneseq
        %v269 = vshrl.u32 %v268, 7
        %v270 = vsub.s32 0, %v269
        %v271 = vrot.slane %v266, %v270
        %v272 = vlaneseq
        %v273 = vshrl.u32 %v272, 7
        %v274 = vsub.s32 1, %v273
        %v275 = vrot.slane %v266, %v274
        %v276 = vlaneseq
        %v277 = vshrl.u32 %v276, 7
        %v278 = vsub.s32 2, %v277
        %v279 = vrot.slane %v266, %v278
        %v283 = vadd.f32 %v263, %v271
        %v284 = vadd.f32 %v264, %v275
        %v285 = vadd.f32 %v265, %v279
        %v286 = vlaneseq
        %v287 = vand.u32 %v286, 127
        %v288 = vadd.s32 %v287, 128
        %v289 = vadd.s32 %v287, 256
        %vm290 = vcmp.lt.s32.totalorder %v287, 16
        %vm291 = vcmp.lt.s32.totalorder %v288, 16
        %vm292 = vcmp.lt.s32.totalorder %v289, 16
        %v293 = vand.u32 2147483647, %v283
        %vm294 = vcmp.le.f32.partialorder %v293, 0.7853982
        %vm295 = vcmp.lt.s32.totalorder %v283, 0
        %v296 = vand.u32 %v283, 2139095040
        %v297 = vshrl.u32 %v296, 23
        %v298 = vsub.s32 %v297, 127
        %v299 = vand.u32 2147483647, %v283
        %v300 = vand.u32 %v299, 8388607
        %v301 = vor.u32 %v300, 8388608
        %v302 = vsub.s32 0, %v301
        %v303 = vadd.s32 %v298, 1
        %vm304 = vcmp.gt.s32.totalorder %v303, 0
        %v305 = vsel %vm304, %v303, 0
        %v306 = vshrl.u32 %v305, 5
        %v307 = vand.u32 %v305, 31
        %v308 = vsub.s32 32, %v307
        %v309 = vshrl.u32 683565275, %v308
        %v310 = vshll.u32 683565275, %v307
        %v311 = vshrl.u32 2475754826, %v308
        %v312 = vor.u32 %v310, %v311
        %v313 = vshll.u32 2475754826, %v307
        %v314 = vshrl.u32 2131351028, %v308
        %v315 = vor.u32 %v313, %v314
        %v316 = vshll.u32 2131351028, %v307
        %v317 = vshrl.u32 2102212464, %v308
        %v318 = vor.u32 %v316, %v317
        %v319 = vshll.u32 2102212464, %v307
        %v320 = vshrl.u32 920167782, %v308
        %v321 = vor.u32 %v319, %v320
        %v322 = vshll.u32 920167782, %v307
        %v323 = vshrl.u32 1326507024, %v308
        %v324 = vor.u32 %v322, %v323
        %vm325 = vcmp.lt.s32.totalorder %v306, 1
        %vm326 = vcmp.lt.s32.totalorder %v306, 2
        %vm327 = vcmp.lt.s32.totalorder %v306, 3
        %vm328 = vcmp.lt.s32.totalorder %v306, 4
        %v329 = vsel %vm325, %v309, %v312
        %v330 = vsel %vm328, %v318, 2102212464
        %v331 = vsel %vm327, %v315, %v330
        %v332 = vsel %vm326, %v329, %v331
        %v333 = vsel %vm325, %v312, %v315
        %v334 = vsel %vm328, %v321, 920167782
        %v335 = vsel %vm327, %v318, %v334
        %v336 = vsel %vm326, %v333, %v335
        %v337 = vsel %vm325, %v315, %v318
        %v338 = vsel %vm328, %v324, 1326507024
        %v339 = vsel %vm327, %v321, %v338
        %v340 = vsel %vm326, %v337, %v339
        %v341 = vshll.u32 %v301, 8
        %v342 = vmul.u32.u64.compose %v341, %v340
        %v343 = vextract.low.u32 %v342
        %v344 = vextract.high.u32 %v342
        %v345 = vmul.u32.u64.compose %v341, %v336
        %v346 = vextract.low.u32 %v345
        %v347 = vextract.high.u32 %v345
        %v348 = vmul.u32 %v341, %v332
        %v349 = vadd.s32 %v344, %v346
        %vm350 = vc.u32 %v344, %v346
        %v351 = vadd.s32 %v347, 1
        %v352 = vsel %vm350, %v351, %v347
        %v353 = vadd.s32 %v348, %v352
        %v354 = vadd.s32 %v353, 536870912
        %v355 = vshrl.u32 %v354, 30
        %v356 = vshll.u32 %v355, 30
        %v357 = vsub.s32 %v353, %v356
        %vm358 = vcmp.lt.s32.totalorder %v357, 0
        %v359 = vsub.s32 0, %v357
        %v360 = vsel %vm358, %v359, %v357
        %v361 = vclz %v360
        %v362 = vsub.s32 %v361, 2
        %vm363 = vcmp.gt.s32.totalorder 0, %v362
        %v364 = vsel %vm363, 0, %v362
        %v365 = vsub.s32 32, %v364
        %v366 = vshll.u32 %v357, %v364
        %v367 = vshrl.u32 %v349, %v365
        %v368 = vor.u32 %v366, %v367
        %v369 = vsub.s32 4294967266, %v364
        %v370 = vadd.s32 %v369, 127
        %v371 = vshll.u32 %v370, 23
        %v372 = vor.u32 4788187, %v371
        %v373 = vand.u32 2147483647, %v372
        %v375 = vcvt.s32.f32 %v368
        %v376 = vmul.f32 %v375, %v373
        %v377 = vxor.u32 %v376, 2147483648
        %v378 = vsel %vm295, %v377, %v376
        %v379 = vsub.s32 4, %v355
        %v380 = vsel %vm295, %v379, %v355
        %v381 = vsel %vm294, %v283, %v378
        %v382 = vsel %vm294, 0, %v380
        %v383 = vcosq.f32.pop %v381
        %v384 = vsinq.f32.pop %v381
        %vm385 = vweird.f32 %v283
        %v386 = vadd.s32 %v382, 3
        %v387 = vand.u32 %v386, 3
        %vm388 = vcmp.lt.s32.totalorder %v387, 2
        %vm389 = vcmp.eq.s32.totalorder %v387, 0
        %v390 = vxor.u32 %v384, 2147483648
        %v391 = vsel %vm389, %v383, %v390
        %vm392 = vcmp.eq.s32.totalorder %v387, 2
        %v393 = vxor.u32 %v383, 2147483648
        %v394 = vsel %vm392, %v393, %v384
        %v395 = vsel %vm388, %v391, %v394
        %v396 = vsel %vm385, nan, %v395
        %v397 = vand.u32 2147483647, %v284
        %vm398 = vcmp.le.f32.partialorder %v397, 0.7853982
        %vm399 = vcmp.lt.s32.totalorder %v284, 0
        %v400 = vand.u32 %v284, 2139095040
        %v401 = vshrl.u32 %v400, 23
        %v402 = vsub.s32 %v401, 127
        %v403 = vand.u32 2147483647, %v284
        %v404 = vand.u32 %v403, 8388607
        %v405 = vor.u32 %v404, 8388608
        %v406 = vsub.s32 0, %v405
        %v407 = vadd.s32 %v402, 1
        %vm408 = vcmp.gt.s32.totalorder %v407, 0
        %v409 = vsel %vm408, %v407, 0
        %v410 = vshrl.u32 %v409, 5
        %v411 = vand.u32 %v409, 31
        %v412 = vsub.s32 32, %v411
        %v413 = vshrl.u32 683565275, %v412
        %v414 = vshll.u32 683565275, %v411
        %v415 = vshrl.u32 2475754826, %v412
        %v416 = vor.u32 %v414, %v415
        %v417 = vshll.u32 2475754826, %v411
        %v418 = vshrl.u32 2131351028, %v412
        %v419 = vor.u32 %v417, %v418
        %v420 = vshll.u32 2131351028, %v411
        %v421 = vshrl.u32 2102212464, %v412
        %v422 = vor.u32 %v420, %v421
        %v423 = vshll.u32 2102212464, %v411
        %v424 = vshrl.u32 920167782, %v412
        %v425 = vor.u32 %v423, %v424
        %v426 = vshll.u32 920167782, %v411
        %v427 = vshrl.u32 1326507024, %v412
        %v428 = vor.u32 %v426, %v427
        %vm429 = vcmp.lt.s32.totalorder %v410, 1
        %vm430 = vcmp.lt.s32.totalorder %v410, 2
        %vm431 = vcmp.lt.s32.totalorder %v410, 3
        %vm432 = vcmp.lt.s32.totalorder %v410, 4
        %v433 = vsel %vm429, %v413, %v416
        %v434 = vsel %vm432, %v422, 2102212464
        %v435 = vsel %vm431, %v419, %v434
        %v436 = vsel %vm430, %v433, %v435
        %v437 = vsel %vm429, %v416, %v419
        %v438 = vsel %vm432, %v425, 920167782
        %v439 = vsel %vm431, %v422, %v438
        %v440 = vsel %vm430, %v437, %v439
        %v441 = vsel %vm429, %v419, %v422
        %v442 = vsel %vm432, %v428, 1326507024
        %v443 = vsel %vm431, %v425, %v442
        %v444 = vsel %vm430, %v441, %v443
        %v445 = vshll.u32 %v405, 8
        %v446 = vmul.u32.u64.compose %v445, %v444
        %v447 = vextract.low.u32 %v446
        %v448 = vextract.high.u32 %v446
        %v449 = vmul.u32.u64.compose %v445, %v440
        %v450 = vextract.low.u32 %v449
        %v451 = vextract.high.u32 %v449
        %v452 = vmul.u32 %v445, %v436
        %v453 = vadd.s32 %v448, %v450
        %vm454 = vc.u32 %v448, %v450
        %v455 = vadd.s32 %v451, 1
        %v456 = vsel %vm454, %v455, %v451
        %v457 = vadd.s32 %v452, %v456
        %v458 = vadd.s32 %v457, 536870912
        %v459 = vshrl.u32 %v458, 30
        %v460 = vshll.u32 %v459, 30
        %v461 = vsub.s32 %v457, %v460
        %vm462 = vcmp.lt.s32.totalorder %v461, 0
        %v463 = vsub.s32 0, %v461
        %v464 = vsel %vm462, %v463, %v461
        %v465 = vclz %v464
        %v466 = vsub.s32 %v465, 2
        %vm467 = vcmp.gt.s32.totalorder 0, %v466
        %v468 = vsel %vm467, 0, %v466
        %v469 = vsub.s32 32, %v468
        %v470 = vshll.u32 %v461, %v468
        %v471 = vshrl.u32 %v453, %v469
        %v472 = vor.u32 %v470, %v471
        %v473 = vsub.s32 4294967266, %v468
        %v474 = vadd.s32 %v473, 127
        %v475 = vshll.u32 %v474, 23
        %v476 = vor.u32 4788187, %v475
        %v477 = vand.u32 2147483647, %v476
        %v479 = vcvt.s32.f32 %v472
        %v480 = vmul.f32 %v479, %v477
        %v481 = vxor.u32 %v480, 2147483648
        %v482 = vsel %vm399, %v481, %v480
        %v483 = vsub.s32 4, %v459
        %v484 = vsel %vm399, %v483, %v459
        %v485 = vsel %vm398, %v284, %v482
        %v486 = vsel %vm398, 0, %v484
        %v487 = vcosq.f32.pop %v485
        %v488 = vsinq.f32.pop %v485
        %vm489 = vweird.f32 %v284
        %v490 = vadd.s32 %v486, 3
        %v491 = vand.u32 %v490, 3
        %vm492 = vcmp.lt.s32.totalorder %v491, 2
        %vm493 = vcmp.eq.s32.totalorder %v491, 0
        %v494 = vxor.u32 %v488, 2147483648
        %v495 = vsel %vm493, %v487, %v494
        %vm496 = vcmp.eq.s32.totalorder %v491, 2
        %v497 = vxor.u32 %v487, 2147483648
        %v498 = vsel %vm496, %v497, %v488
        %v499 = vsel %vm492, %v495, %v498
        %v500 = vsel %vm489, nan, %v499
        %v501 = vand.u32 2147483647, %v285
        %vm502 = vcmp.le.f32.partialorder %v501, 0.7853982
        %vm503 = vcmp.lt.s32.totalorder %v285, 0
        %v504 = vand.u32 %v285, 2139095040
        %v505 = vshrl.u32 %v504, 23
        %v506 = vsub.s32 %v505, 127
        %v507 = vand.u32 2147483647, %v285
        %v508 = vand.u32 %v507, 8388607
        %v509 = vor.u32 %v508, 8388608
        %v510 = vsub.s32 0, %v509
        %v511 = vadd.s32 %v506, 1
        %vm512 = vcmp.gt.s32.totalorder %v511, 0
        %v513 = vsel %vm512, %v511, 0
        %v514 = vshrl.u32 %v513, 5
        %v515 = vand.u32 %v513, 31
        %v516 = vsub.s32 32, %v515
        %v517 = vshrl.u32 683565275, %v516
        %v518 = vshll.u32 683565275, %v515
        %v519 = vshrl.u32 2475754826, %v516
        %v520 = vor.u32 %v518, %v519
        %v521 = vshll.u32 2475754826, %v515
        %v522 = vshrl.u32 2131351028, %v516
        %v523 = vor.u32 %v521, %v522
        %v524 = vshll.u32 2131351028, %v515
        %v525 = vshrl.u32 2102212464, %v516
        %v526 = vor.u32 %v524, %v525
        %v527 = vshll.u32 2102212464, %v515
        %v528 = vshrl.u32 920167782, %v516
        %v529 = vor.u32 %v527, %v528
        %v530 = vshll.u32 920167782, %v515
        %v531 = vshrl.u32 1326507024, %v516
        %v532 = vor.u32 %v530, %v531
        %vm533 = vcmp.lt.s32.totalorder %v514, 1
        %vm534 = vcmp.lt.s32.totalorder %v514, 2
        %vm535 = vcmp.lt.s32.totalorder %v514, 3
        %vm536 = vcmp.lt.s32.totalorder %v514, 4
        %v537 = vsel %vm533, %v517, %v520
        %v538 = vsel %vm536, %v526, 2102212464
        %v539 = vsel %vm535, %v523, %v538
        %v540 = vsel %vm534, %v537, %v539
        %v541 = vsel %vm533, %v520, %v523
        %v542 = vsel %vm536, %v529, 920167782
        %v543 = vsel %vm535, %v526, %v542
        %v544 = vsel %vm534, %v541, %v543
        %v545 = vsel %vm533, %v523, %v526
        %v546 = vsel %vm536, %v532, 1326507024
        %v547 = vsel %vm535, %v529, %v546
        %v548 = vsel %vm534, %v545, %v547
        %v549 = vshll.u32 %v509, 8
        %v550 = vmul.u32.u64.compose %v549, %v548
        %v551 = vextract.low.u32 %v550
        %v552 = vextract.high.u32 %v550
        %v553 = vmul.u32.u64.compose %v549, %v544
        %v554 = vextract.low.u32 %v553
        %v555 = vextract.high.u32 %v553
        %v556 = vmul.u32 %v549, %v540
        %v557 = vadd.s32 %v552, %v554
        %vm558 = vc.u32 %v552, %v554
        %v559 = vadd.s32 %v555, 1
        %v560 = vsel %vm558, %v559, %v555
        %v561 = vadd.s32 %v556, %v560
        %v562 = vadd.s32 %v561, 536870912
        %v563 = vshrl.u32 %v562, 30
        %v564 = vshll.u32 %v563, 30
        %v565 = vsub.s32 %v561, %v564
        %vm566 = vcmp.lt.s32.totalorder %v565, 0
        %v567 = vsub.s32 0, %v565
        %v568 = vsel %vm566, %v567, %v565
        %v569 = vclz %v568
        %v570 = vsub.s32 %v569, 2
        %vm571 = vcmp.gt.s32.totalorder 0, %v570
        %v572 = vsel %vm571, 0, %v570
        %v573 = vsub.s32 32, %v572
        %v574 = vshll.u32 %v565, %v572
        %v575 = vshrl.u32 %v557, %v573
        %v576 = vor.u32 %v574, %v575
        %v577 = vsub.s32 4294967266, %v572
        %v578 = vadd.s32 %v577, 127
        %v579 = vshll.u32 %v578, 23
        %v580 = vor.u32 4788187, %v579
        %v581 = vand.u32 2147483647, %v580
        %v583 = vcvt.s32.f32 %v576
        %v584 = vmul.f32 %v583, %v581
        %v585 = vxor.u32 %v584, 2147483648
        %v586 = vsel %vm503, %v585, %v584
        %v587 = vsub.s32 4, %v563
        %v588 = vsel %vm503, %v587, %v563
        %v589 = vsel %vm502, %v285, %v586
        %v590 = vsel %vm502, 0, %v588
        %v591 = vcosq.f32.pop %v589
        %v592 = vsinq.f32.pop %v589
        %vm593 = vweird.f32 %v285
        %v594 = vadd.s32 %v590, 3
        %v595 = vand.u32 %v594, 3
        %vm596 = vcmp.lt.s32.totalorder %v595, 2
        %vm597 = vcmp.eq.s32.totalorder %v595, 0
        %v598 = vxor.u32 %v592, 2147483648
        %v599 = vsel %vm597, %v591, %v598
        %vm600 = vcmp.eq.s32.totalorder %v595, 2
        %v601 = vxor.u32 %v591, 2147483648
        %v602 = vsel %vm600, %v601, %v592
        %v603 = vsel %vm596, %v599, %v602
        %v604 = vsel %vm593, nan, %v603
        %v605 = vsel %vm290, %v245, %v396
        %v606 = vsel %vm291, %v245, %v500
        %v607 = vsel %vm292, %v239, %v604
        %608 = vst [vmem:[%s208] sm:$0xff] %v605
        %609 = vst [vmem:[%s208 + $0x8] sm:$0xff] %v606
        %610 = vst.msk [vmem:[%s208 + $0x10] sm:$0xff] %vm240, %v607
        %s611 = sand.u32 %s95, 1
        %s612 = scalar_lea.sflag [#allocation4], %s611
        %s613 = sand.u32 %s95, 1
        %s614 = smul.addr %s613, 24
        %s615 = scalar_lea.vmem [#allocation8], %s614
        // Predicated region
        $region45: #{tpu_custom_call.1} parent=31 // pred_check
          %p616 = pneg %p105
        $region46: #{tpu_custom_call.1} parent=31 // pred_check_branch
          %618 = sbr.rel (%p616) target = $region48
        $region47: #{tpu_custom_call.1} parent=31 // pred_region
          %s620 = ssub.s32 384, 384
          %621 = vsyncadd %s612, %s620
          %s622 = smul.addr %s19, 3
          %s623 = smul.addr %s622, 128
          %s624 = scalar_lea.hbm %s3, %s623
          %s626 = sshll.u32 %s615, 4
          %s627 = int_to_ptr.vmem [resolvable:$true] %s626
          %629 = dma.vmem_to_hbm [thread:$0]  %s627, 384, %s624, %s612
        $region48: #{tpu_custom_call.1} parent=31 // pred_fallthru
          _
      $region32: #{tpu_custom_call.1} parent=5 // pred_fallthru
        _
      %p630 = scmp.le.s32.totalorder 2, %s14
      // Predicated region
      $region49: #{tpu_custom_call.1} parent=5 // pred_check
        %p631 = pneg %p630
      $region50: #{tpu_custom_call.1} parent=5 // pred_check_branch
        %633 = sbr.rel (%p631) target = $region52
      $region51: #{tpu_custom_call.1} parent=5 // pred_region
        %s634 = ssub.s32 %s14, 2
        // Predicated region
        $region53: #{tpu_custom_call.1} parent=51 // pred_check
          %p635 = pneg %p111
        $region54: #{tpu_custom_call.1} parent=51 // pred_check_branch
          %637 = sbr.rel (%p635) target = $region56
        $region55: #{tpu_custom_call.1} parent=51 // pred_region
          %s638 = sand.u32 %s96, 1
          %s639 = scalar_lea.sflag [#allocation4], %s638
          %s640 = sand.u32 %s96, 1
          %s641 = smul.addr %s640, 24
          %s642 = scalar_lea.vmem [#allocation8], %s641
          %643 = dma.done %s639, 384
        $region56: #{tpu_custom_call.1} parent=51 // pred_fallthru
          _
      $region52: #{tpu_custom_call.1} parent=5 // pred_fallthru
        _
    $region6: #{tpu_custom_call.1} parent=1 // loop_footer
      %s18 = sadd.s32 1, %s14
    $region7: #{tpu_custom_call.1} parent=1 // loop_footer_branch
      %13 = sbr.rel target = $region3
    $region8: #{tpu_custom_call.1} parent=1 // loop_exit
      _
    %644 = vsyncpa [#allocation3], 1
    %s645 = scalar_lea.sflag [#allocation3], 1
    %646 = vsyncpa %s645, 1
    %647 = vsyncpa [#allocation6], 1
    %648 = vsyncpa [#allocation4], 1
    %s649 = scalar_lea.sflag [#allocation4], 1
    %650 = vsyncpa %s649, 1

// kernel: tpu_custom_call.1
$region0: #{tpu_custom_call.1}
  #allocation0 [shape = 'u32[]', space=smem, size = 0x4, offset = 0x4, fixed_abs, tag = 'smem constant byte address 0x4 - core index']
  #allocation1 [shape = 'u32[144,128]{1,0:T(1,128)}', space=vmem, size = 0x12000, scoped, tag = 'internal scratch']
  %s0 = inlined_call_operand.hbm [shape: f32[1,336], index: 0, kind: input, shape index: {}]
  %s1 = inlined_call_operand.hbm [shape: f32[1,336], index: 1, kind: input, shape index: {}]
  %s2 = inlined_call_operand.hbm [shape: f32[16,16], index: 2, kind: input, shape index: {}]
  %s3 = inlined_call_operand.hbm [shape: f32[16,336], index: 3, kind: output, shape index: {}]
  %s4 = sld [smem:[#allocation0]]
  $region57: #{tpu_custom_call.1} parent=0
    _
  %s6 = ssub.s32 1, %s4
  %s7 = scalar_select 0, %s6, %s4
  $region1: #{tpu_custom_call.1} parent=0
    #allocation2 [shape = 'u8[1536]{0}', space=vmem, size = 0x800, scoped, tag = 'input window, operand 0, single buffered']
    #allocation3 [shape = 's32[2]{0}', space=sflag, size = 0x8, scoped, tag = 'scoped memory for tpu_custom_call.1']
    #allocation4 [shape = 's32[2]{0}', space=sflag, size = 0x8, scoped, tag = 'scoped memory for tpu_custom_call.1']
    #allocation5 [shape = 'u8[1536]{0}', space=vmem, size = 0x800, scoped, tag = 'input window, operand 1, single buffered']
    #allocation6 [shape = 's32[1]{0}', space=sflag, size = 0x4, scoped, tag = 'scoped memory for tpu_custom_call.1']
    #allocation7 [shape = 'u8[8192]{0}', space=vmem, size = 0x2000, scoped, tag = 'input window, operand 2']
    #allocation8 [shape = 'u8[24576]{0}', space=vmem, size = 0x6000, scoped, tag = 'output window, operand 0']
    %8 = vsyncpa [#allocation3], 0
    %9 = vsyncpa [#allocation6], 0
    %10 = vsyncpa [#allocation4], 0
    %s11 = scalar_lea.sflag [#allocation4], 1
    %12 = vsyncpa %s11, 0
    loop: start=0, step=1, limit=4
    $region2: #{tpu_custom_call.1} parent=1 // loop_pre_header
      _
    $region3: #{tpu_custom_call.1} parent=1 // loop_header
      %s14 = sphi 0, %s18
      %p15 = scmp.ge.s32.totalorder %s14, 4
      %s22 = sphi 0, %s22
      %s24 = sphi 0, %s22
      %s25 = sphi 0, %s24
      %s39 = sphi 0, %s25
      %s43 = sphi 0, %s43
      %s45 = sphi 0, %s43
      %s46 = sphi 0, %s45
      %s60 = sphi 0, %s46
      %s66 = sphi 0, %s68
      %s69 = sphi 0, %s66
      %s70 = sphi 0, %s69
      %s86 = sphi 0, %s70
      %s92 = sphi 0, %s94
      %s95 = sphi 0, %s92
      %s96 = sphi 0, %s95
      %s112 = sphi 0, %s96
    $region4: #{tpu_custom_call.1} parent=1 // loop_header_branch
      %17 = sbr.rel (%p15) target = $region8
    $region5: #{tpu_custom_call.1} parent=1 // loop_body
      %s19 = ssub.s32 %s14, 1
      %s20 = ssub.s32 %s14, 2
      %s21 = sadd.s32 %s14, 1
      %s23 = sadd.s32 %s22, 1
      %p26 = scmp.eq.s32.totalorder %s14, 1
      %p27 = scmp.ne.s32.totalorder %s22, %s24
      %p28 = scmp.eq.s32.totalorder %s14, 0
      %p29 = por %p27, %p28
      %p30 = scmp.ne.s32.totalorder %s22, %s24
      %p31 = scmp.eq.s32.totalorder %s19, 1
      %p32 = por %p30, %p31
      %p33 = scmp.ne.s32.totalorder %s24, %s25
      %p34 = scmp.eq.s32.totalorder %s19, 0
      %p35 = por %p33, %p34
      %p36 = scmp.ne.s32.totalorder %s24, %s25
      %p37 = scmp.eq.s32.totalorder %s20, 1
      %p38 = por %p36, %p37
      %p40 = scmp.ne.s32.totalorder %s25, %s39
      %p41 = scmp.eq.s32.totalorder %s20, 0
      %p42 = por %p40, %p41
      %s44 = sadd.s32 %s43, 1
      %p47 = scmp.eq.s32.totalorder %s14, 1
      %p48 = scmp.ne.s32.totalorder %s43, %s45
      %p49 = scmp.eq.s32.totalorder %s14, 0
      %p50 = por %p48, %p49
      %p51 = scmp.ne.s32.totalorder %s43, %s45
      %p52 = scmp.eq.s32.totalorder %s19, 1
      %p53 = por %p51, %p52
      %p54 = scmp.ne.s32.totalorder %s45, %s46
      %p55 = scmp.eq.s32.totalorder %s19, 0
      %p56 = por %p54, %p55
      %p57 = scmp.ne.s32.totalorder %s45, %s46
      %p58 = scmp.eq.s32.totalorder %s20, 1
      %p59 = por %p57, %p58
      %p61 = scmp.ne.s32.totalorder %s46, %s60
      %p62 = scmp.eq.s32.totalorder %s20, 0
      %p63 = por %p61, %p62
      %s64 = ssub.s32 %s14, %s21
      %p65 = scmp.eq.s32.totalorder %s64, 0
      %s67 = sadd.s32 %s66, 1
      %s68 = scalar_select %p65, %s66, %s67
      %p71 = pneg %p65
      %p72 = scmp.eq.s32.totalorder %s14, 1
      %p73 = por %p71, %p72
      %p74 = scmp.ne.s32.totalorder %s66, %s69
      %p75 = scmp.eq.s32.totalorder %s14, 0
      %p76 = por %p74, %p75
      %p77 = scmp.ne.s32.totalorder %s66, %s69
      %p78 = scmp.eq.s32.totalorder %s19, 1
      %p79 = por %p77, %p78
      %p80 = scmp.ne.s32.totalorder %s69, %s70
      %p81 = scmp.eq.s32.totalorder %s19, 0
      %p82 = por %p80, %p81
      %p83 = scmp.ne.s32.totalorder %s69, %s70
      %p84 = scmp.eq.s32.totalorder %s20, 1
      %p85 = por %p83, %p84
      %p87 = scmp.ne.s32.totalorder %s70, %s86
      %p88 = scmp.eq.s32.totalorder %s20, 0
      %p89 = por %p87, %p88
      %s90 = ssub.s32 %s14, %s21
      %p91 = scmp.eq.s32.totalorder %s90, 0
      %s93 = sadd.s32 %s92, 1
      %s94 = scalar_select %p91, %s92, %s93
      %p97 = pneg %p91
      %p98 = scmp.eq.s32.totalorder %s14, 1
      %p99 = por %p97, %p98
      %p100 = scmp.ne.s32.totalorder %s92, %s95
      %p101 = scmp.eq.s32.totalorder %s14, 0
      %p102 = por %p100, %p101
      %p103 = scmp.ne.s32.totalorder %s92, %s95
      %p104 = scmp.eq.s32.totalorder %s19, 1
      %p105 = por %p103, %p104
      %p106 = scmp.ne.s32.totalorder %s95, %s96
      %p107 = scmp.eq.s32.totalorder %s19, 0
      %p108 = por %p106, %p107
      %p109 = scmp.ne.s32.totalorder %s95, %s96
      %p110 = scmp.eq.s32.totalorder %s20, 1
      %p111 = por %p109, %p110
      %p113 = scmp.ne.s32.totalorder %s96, %s112
      %p114 = scmp.eq.s32.totalorder %s20, 0
      %p115 = por %p113, %p114
      %p116 = scmp.le.s32.totalorder 1, %s14
      %p117 = scmp.lt.s32.totalorder %s14, 3
      %p118 = pnand %p116, %p117
      %p119 = pneg %p118
      // Predicated region
      $region9: #{tpu_custom_call.1} parent=5 // pred_check
        _
      $region10: #{tpu_custom_call.1} parent=5 // pred_check_branch
        %121 = sbr.rel (%p118) target = $region12
      $region11: #{tpu_custom_call.1} parent=5 // pred_region
        %s122 = ssub.s32 %s14, 1
        // Predicated region
        $region13: #{tpu_custom_call.1} parent=11 // pred_check
          %p123 = pneg %p35
        $region14: #{tpu_custom_call.1} parent=11 // pred_check_branch
          %125 = sbr.rel (%p123) target = $region16
        $region15: #{tpu_custom_call.1} parent=11 // pred_region
          %s127 = ssub.s32 48, 48
          %128 = vsyncadd [#allocation3], %s127
          %s130 = sshll.u32 [#allocation2], 4
          %s131 = int_to_ptr.vmem [resolvable:$true] %s130
          %133 = dma.hbm_to_vmem [thread:$0]  %s0, 48, %s131, [#allocation3]
        $region16: #{tpu_custom_call.1} parent=11 // pred_fallthru
          _
        // Predicated region
        $region17: #{tpu_custom_call.1} parent=11 // pred_check
          %p134 = pneg %p56
        $region18: #{tpu_custom_call.1} parent=11 // pred_check_branch
          %136 = sbr.rel (%p134) target = $region20
        $region19: #{tpu_custom_call.1} parent=11 // pred_region
          %s138 = ssub.s32 48, 48
          %139 = vsyncadd [#allocation6], %s138
          %s141 = sshll.u32 [#allocation5], 4
          %s142 = int_to_ptr.vmem [resolvable:$true] %s141
          %144 = dma.hbm_to_vmem [thread:$0]  %s1, 48, %s142, [#allocation6]
        $region20: #{tpu_custom_call.1} parent=11 // pred_fallthru
          _
      $region12: #{tpu_custom_call.1} parent=5 // pred_fallthru
        _
      %p145 = scmp.lt.s32.totalorder %s14, 2
      // Predicated region
      $region21: #{tpu_custom_call.1} parent=5 // pred_check
        %p146 = pneg %p145
      $region22: #{tpu_custom_call.1} parent=5 // pred_check_branch
        %148 = sbr.rel (%p146) target = $region24
      $region23: #{tpu_custom_call.1} parent=5 // pred_region
        // Predicated region
        $region25: #{tpu_custom_call.1} parent=23 // pred_check
          %p149 = pneg %p76
        $region26: #{tpu_custom_call.1} parent=23 // pred_check_branch
          %151 = sbr.rel (%p149) target = $region28
        $region27: #{tpu_custom_call.1} parent=23 // pred_region
          %s152 = sand.u32 %s14, 1
          %s153 = scalar_lea.sflag [#allocation3], %s152
          %s154 = sand.u32 %s66, 1
          %s155 = smul.addr %s154, 8
          %s156 = scalar_lea.vmem [#allocation7], %s155
          %s158 = ssub.s32 128, 128
          %159 = vsyncadd %s153, %s158
          %s160 = smul.addr %s14, 128
          %s161 = scalar_lea.hbm %s2, %s160
          %s163 = sshll.u32 %s156, 4
          %s164 = int_to_ptr.vmem [resolvable:$true] %s163
          %166 = dma.hbm_to_vmem [thread:$0]  %s161, 128, %s164, %s153
        $region28: #{tpu_custom_call.1} parent=23 // pred_fallthru
          _
      $region24: #{tpu_custom_call.1} parent=5 // pred_fallthru
        _
      %p167 = scmp.le.s32.totalorder 1, %s14
      %p168 = scmp.lt.s32.totalorder %s14, 3
      %p169 = pnand %p167, %p168
      %p170 = pneg %p169
      // Predicated region
      $region29: #{tpu_custom_call.1} parent=5 // pred_check
        _
      $region30: #{tpu_custom_call.1} parent=5 // pred_check_branch
        %172 = sbr.rel (%p169) target = $region32
      $region31: #{tpu_custom_call.1} parent=5 // pred_region
        %s173 = ssub.s32 %s14, 1
        // Predicated region
        $region33: #{tpu_custom_call.1} parent=31 // pred_check
          %p174 = pneg %p35
        $region34: #{tpu_custom_call.1} parent=31 // pred_check_branch
          %176 = sbr.rel (%p174) target = $region36
        $region35: #{tpu_custom_call.1} parent=31 // pred_region
          %177 = dma.done [#allocation3], 48
        $region36: #{tpu_custom_call.1} parent=31 // pred_fallthru
          _
        // Predicated region
        $region37: #{tpu_custom_call.1} parent=31 // pred_check
          %p178 = pneg %p56
        $region38: #{tpu_custom_call.1} parent=31 // pred_check_branch
          %180 = sbr.rel (%p178) target = $region40
        $region39: #{tpu_custom_call.1} parent=31 // pred_region
          %181 = dma.done [#allocation6], 48
        $region40: #{tpu_custom_call.1} parent=31 // pred_fallthru
          _
        %s182 = sand.u32 %s19, 1
        %s183 = scalar_lea.sflag [#allocation3], %s182
        %s184 = sand.u32 %s69, 1
        %s185 = smul.addr %s184, 8
        %s186 = scalar_lea.vmem [#allocation7], %s185
        // Predicated region
        $region41: #{tpu_custom_call.1} parent=31 // pred_check
          %p187 = pneg %p82
        $region42: #{tpu_custom_call.1} parent=31 // pred_check_branch
          %189 = sbr.rel (%p187) target = $region44
        $region43: #{tpu_custom_call.1} parent=31 // pred_region
          %190 = dma.done %s183, 128
        $region44: #{tpu_custom_call.1} parent=31 // pred_fallthru
          _
        %p191 = pneg %p35
        %p192 = pneg %p32
        %p193 = pneg %p56
        %p194 = pneg %p53
        %s195 = sand.u32 %s19, 1
        %s196 = scalar_lea.sflag [#allocation3], %s195
        %s197 = sand.u32 %s69, 1
        %s198 = smul.addr %s197, 8
        %s199 = scalar_lea.vmem [#allocation7], %s198
        %p200 = pneg %p82
        %p201 = pneg %p79
        %p202 = pneg %p108
        %p203 = pneg %p105
        %s204 = sand.u32 %s95, 1
        %s205 = scalar_lea.sflag [#allocation4], %s204
        %s206 = sand.u32 %s95, 1
        %s207 = smul.addr %s206, 24
        %s208 = scalar_lea.vmem [#allocation8], %s207
        %v209 = vld [vmem:[%s186] sm:$0xff]
        %vm210 = vcmask 130048
        %211 = vst.msk [vmem:[%s208] sm:$0xff] %vm210, %v209
        %v212 = vand.u32 2147483647, %v209
        %vm213 = vcmp.le.f32.partialorder %v212, 0.7853982
        %vm214 = vcmp.lt.s32.totalorder %v209, 0
        %v215 = vand.u32 %v209, 2139095040
        %v216 = vshrl.u32 %v215, 23
        %v217 = vsub.s32 %v216, 127
        %v218 = vand.u32 2147483647, %v209
        %v219 = vand.u32 %v218, 8388607
        %v220 = vor.u32 %v219, 8388608
        %v221 = vsub.s32 0, %v220
        %v222 = vadd.s32 %v217, 1
        %vm223 = vcmp.gt.s32.totalorder %v222, 0
        %v224 = vsel %vm223, %v222, 0
        %v225 = vshrl.u32 %v224, 5
        %v226 = vand.u32 %v224, 31
        %v227 = vsub.s32 32, %v226
        %v228 = vshrl.u32 683565275, %v227
        %v229 = vshll.u32 683565275, %v226
        %v230 = vshrl.u32 2475754826, %v227
        %v231 = vor.u32 %v229, %v230
        %v232 = vshll.u32 2475754826, %v226
        %v233 = vshrl.u32 2131351028, %v227
        %v234 = vor.u32 %v232, %v233
        %v235 = vshll.u32 2131351028, %v226
        %v236 = vshrl.u32 2102212464, %v227
        %v237 = vor.u32 %v235, %v236
        %v238 = vshll.u32 2102212464, %v226
        %v239 = vshrl.u32 920167782, %v227
        %v240 = vor.u32 %v238, %v239
        %v241 = vshll.u32 920167782, %v226
        %v242 = vshrl.u32 1326507024, %v227
        %v243 = vor.u32 %v241, %v242
        %vm244 = vcmp.lt.s32.totalorder %v225, 1
        %vm245 = vcmp.lt.s32.totalorder %v225, 2
        %vm246 = vcmp.lt.s32.totalorder %v225, 3
        %vm247 = vcmp.lt.s32.totalorder %v225, 4
        %v248 = vsel %vm244, %v228, %v231
        %v249 = vsel %vm247, %v237, 2102212464
        %v250 = vsel %vm246, %v234, %v249
        %v251 = vsel %vm245, %v248, %v250
        %v252 = vsel %vm244, %v231, %v234
        %v253 = vsel %vm247, %v240, 920167782
        %v254 = vsel %vm246, %v237, %v253
        %v255 = vsel %vm245, %v252, %v254
        %v256 = vsel %vm244, %v234, %v237
        %v257 = vsel %vm247, %v243, 1326507024
        %v258 = vsel %vm246, %v240, %v257
        %v259 = vsel %vm245, %v256, %v258
        %v260 = vshll.u32 %v220, 8
        %v261 = vmul.u32.u64.compose %v260, %v259
        %v262 = vextract.low.u32 %v261
        %v263 = vextract.high.u32 %v261
        %v264 = vmul.u32.u64.compose %v260, %v255
        %v265 = vextract.low.u32 %v264
        %v266 = vextract.high.u32 %v264
        %v267 = vmul.u32 %v260, %v251
        %v268 = vadd.s32 %v263, %v265
        %vm269 = vc.u32 %v263, %v265
        %v270 = vadd.s32 %v266, 1
        %v271 = vsel %vm269, %v270, %v266
        %v272 = vadd.s32 %v267, %v271
        %v273 = vadd.s32 %v272, 536870912
        %v274 = vshrl.u32 %v273, 30
        %v275 = vshll.u32 %v274, 30
        %v276 = vsub.s32 %v272, %v275
        %vm277 = vcmp.lt.s32.totalorder %v276, 0
        %v278 = vsub.s32 0, %v276
        %v279 = vsel %vm277, %v278, %v276
        %v280 = vclz %v279
        %v281 = vsub.s32 %v280, 2
        %vm282 = vcmp.gt.s32.totalorder 0, %v281
        %v283 = vsel %vm282, 0, %v281
        %v284 = vsub.s32 32, %v283
        %v285 = vshll.u32 %v276, %v283
        %v286 = vshrl.u32 %v268, %v284
        %v287 = vor.u32 %v285, %v286
        %v288 = vsub.s32 4294967266, %v283
        %v289 = vadd.s32 %v288, 127
        %v290 = vshll.u32 %v289, 23
        %v291 = vor.u32 4788187, %v290
        %v292 = vand.u32 2147483647, %v291
        %v294 = vcvt.s32.f32 %v287
        %v295 = vmul.f32 %v294, %v292
        %v296 = vxor.u32 %v295, 2147483648
        %v297 = vsel %vm214, %v296, %v295
        %v298 = vsub.s32 4, %v274
        %v299 = vsel %vm214, %v298, %v274
        %v300 = vsel %vm213, %v209, %v297
        %v301 = vsel %vm213, 0, %v299
        %v302 = vcosq.f32.pop %v300
        %v303 = vsinq.f32.pop %v300
        %vm304 = vweird.f32 %v209
        %v305 = vadd.s32 %v301, 3
        %v306 = vand.u32 %v305, 3
        %vm307 = vcmp.lt.s32.totalorder %v306, 2
        %vm308 = vcmp.eq.s32.totalorder %v306, 0
        %v309 = vxor.u32 %v303, 2147483648
        %v310 = vsel %vm308, %v302, %v309
        %vm311 = vcmp.eq.s32.totalorder %v306, 2
        %v312 = vxor.u32 %v302, 2147483648
        %v313 = vsel %vm311, %v312, %v303
        %v314 = vsel %vm307, %v310, %v313
        %v315 = vsel %vm304, nan, %v314
        %317 = vrot.lane.b32.xlu0 %v315, 16
        %v318 = vpop.permute.xlu0 %317
        %vm320 = vcmask 261248
        %321 = vst.msk [vmem:[%s208] sm:$0xff] %vm320, %v318
        %v322 = vand.u32 2147483647, %v209
        %vm323 = vcmp.le.f32.partialorder %v322, 0.7853982
        %vm324 = vcmp.lt.s32.totalorder %v209, 0
        %v325 = vand.u32 %v209, 2139095040
        %v326 = vshrl.u32 %v325, 23
        %v327 = vsub.s32 %v326, 127
        %v328 = vand.u32 2147483647, %v209
        %v329 = vand.u32 %v328, 8388607
        %v330 = vor.u32 %v329, 8388608
        %v331 = vsub.s32 0, %v330
        %v332 = vadd.s32 %v327, 1
        %vm333 = vcmp.gt.s32.totalorder %v332, 0
        %v334 = vsel %vm333, %v332, 0
        %v335 = vshrl.u32 %v334, 5
        %v336 = vand.u32 %v334, 31
        %v337 = vsub.s32 32, %v336
        %v338 = vshrl.u32 683565275, %v337
        %v339 = vshll.u32 683565275, %v336
        %v340 = vshrl.u32 2475754826, %v337
        %v341 = vor.u32 %v339, %v340
        %v342 = vshll.u32 2475754826, %v336
        %v343 = vshrl.u32 2131351028, %v337
        %v344 = vor.u32 %v342, %v343
        %v345 = vshll.u32 2131351028, %v336
        %v346 = vshrl.u32 2102212464, %v337
        %v347 = vor.u32 %v345, %v346
        %v348 = vshll.u32 2102212464, %v336
        %v349 = vshrl.u32 920167782, %v337
        %v350 = vor.u32 %v348, %v349
        %v351 = vshll.u32 920167782, %v336
        %v352 = vshrl.u32 1326507024, %v337
        %v353 = vor.u32 %v351, %v352
        %vm354 = vcmp.lt.s32.totalorder %v335, 1
        %vm355 = vcmp.lt.s32.totalorder %v335, 2
        %vm356 = vcmp.lt.s32.totalorder %v335, 3
        %vm357 = vcmp.lt.s32.totalorder %v335, 4
        %v358 = vsel %vm354, %v338, %v341
        %v359 = vsel %vm357, %v347, 2102212464
        %v360 = vsel %vm356, %v344, %v359
        %v361 = vsel %vm355, %v358, %v360
        %v362 = vsel %vm354, %v341, %v344
        %v363 = vsel %vm357, %v350, 920167782
        %v364 = vsel %vm356, %v347, %v363
        %v365 = vsel %vm355, %v362, %v364
        %v366 = vsel %vm354, %v344, %v347
        %v367 = vsel %vm357, %v353, 1326507024
        %v368 = vsel %vm356, %v350, %v367
        %v369 = vsel %vm355, %v366, %v368
        %v370 = vshll.u32 %v330, 8
        %v371 = vmul.u32.u64.compose %v370, %v369
        %v372 = vextract.low.u32 %v371
        %v373 = vextract.high.u32 %v371
        %v374 = vmul.u32.u64.compose %v370, %v365
        %v375 = vextract.low.u32 %v374
        %v376 = vextract.high.u32 %v374
        %v377 = vmul.u32 %v370, %v361
        %v378 = vadd.s32 %v373, %v375
        %vm379 = vc.u32 %v373, %v375
        %v380 = vadd.s32 %v376, 1
        %v381 = vsel %vm379, %v380, %v376
        %v382 = vadd.s32 %v377, %v381
        %v383 = vadd.s32 %v382, 536870912
        %v384 = vshrl.u32 %v383, 30
        %v385 = vshll.u32 %v384, 30
        %v386 = vsub.s32 %v382, %v385
        %vm387 = vcmp.lt.s32.totalorder %v386, 0
        %v388 = vsub.s32 0, %v386
        %v389 = vsel %vm387, %v388, %v386
        %v390 = vclz %v389
        %v391 = vsub.s32 %v390, 2
        %vm392 = vcmp.gt.s32.totalorder 0, %v391
        %v393 = vsel %vm392, 0, %v391
        %v394 = vsub.s32 32, %v393
        %v395 = vshll.u32 %v386, %v393
        %v396 = vshrl.u32 %v378, %v394
        %v397 = vor.u32 %v395, %v396
        %v398 = vsub.s32 4294967266, %v393
        %v399 = vadd.s32 %v398, 127
        %v400 = vshll.u32 %v399, 23
        %v401 = vor.u32 4788187, %v400
        %v402 = vand.u32 2147483647, %v401
        %v404 = vcvt.s32.f32 %v397
        %v405 = vmul.f32 %v404, %v402
        %v406 = vxor.u32 %v405, 2147483648
        %v407 = vsel %vm324, %v406, %v405
        %v408 = vsub.s32 4, %v384
        %v409 = vsel %vm324, %v408, %v384
        %v410 = vsel %vm323, %v209, %v407
        %v411 = vsel %vm323, 0, %v409
        %v412 = vcosq.f32.pop %v410
        %v413 = vsinq.f32.pop %v410
        %vm414 = vweird.f32 %v209
        %v415 = vand.u32 %v411, 3
        %vm416 = vcmp.lt.s32.totalorder %v415, 2
        %vm417 = vcmp.eq.s32.totalorder %v415, 0
        %v418 = vxor.u32 %v413, 2147483648
        %v419 = vsel %vm417, %v412, %v418
        %vm420 = vcmp.eq.s32.totalorder %v415, 2
        %v421 = vxor.u32 %v412, 2147483648
        %v422 = vsel %vm420, %v421, %v413
        %v423 = vsel %vm416, %v419, %v422
        %v424 = vsel %vm414, nan, %v423
        %426 = vrot.lane.b32.xlu0 %v424, 32
        %v427 = vpop.permute.xlu0 %426
        %vm429 = vcmask 392448
        %430 = vst.msk [vmem:[%s208] sm:$0xff] %vm429, %v427
        %v431 = vmul.f32 %v209, 2.0
        %v432 = vand.u32 2147483647, %v431
        %vm433 = vcmp.le.f32.partialorder %v432, 0.7853982
        %vm434 = vcmp.lt.s32.totalorder %v431, 0
        %v435 = vand.u32 %v431, 2139095040
        %v436 = vshrl.u32 %v435, 23
        %v437 = vsub.s32 %v436, 127
        %v438 = vand.u32 2147483647, %v431
        %v439 = vand.u32 %v438, 8388607
        %v440 = vor.u32 %v439, 8388608
        %v441 = vsub.s32 0, %v440
        %v442 = vadd.s32 %v437, 1
        %vm443 = vcmp.gt.s32.totalorder %v442, 0
        %v444 = vsel %vm443, %v442, 0
        %v445 = vshrl.u32 %v444, 5
        %v446 = vand.u32 %v444, 31
        %v447 = vsub.s32 32, %v446
        %v448 = vshrl.u32 683565275, %v447
        %v449 = vshll.u32 683565275, %v446
        %v450 = vshrl.u32 2475754826, %v447
        %v451 = vor.u32 %v449, %v450
        %v452 = vshll.u32 2475754826, %v446
        %v453 = vshrl.u32 2131351028, %v447
        %v454 = vor.u32 %v452, %v453
        %v455 = vshll.u32 2131351028, %v446
        %v456 = vshrl.u32 2102212464, %v447
        %v457 = vor.u32 %v455, %v456
        %v458 = vshll.u32 2102212464, %v446
        %v459 = vshrl.u32 920167782, %v447
        %v460 = vor.u32 %v458, %v459
        %v461 = vshll.u32 920167782, %v446
        %v462 = vshrl.u32 1326507024, %v447
        %v463 = vor.u32 %v461, %v462
        %vm464 = vcmp.lt.s32.totalorder %v445, 1
        %vm465 = vcmp.lt.s32.totalorder %v445, 2
        %vm466 = vcmp.lt.s32.totalorder %v445, 3
        %vm467 = vcmp.lt.s32.totalorder %v445, 4
        %v468 = vsel %vm464, %v448, %v451
        %v469 = vsel %vm467, %v457, 2102212464
        %v470 = vsel %vm466, %v454, %v469
        %v471 = vsel %vm465, %v468, %v470
        %v472 = vsel %vm464, %v451, %v454
        %v473 = vsel %vm467, %v460, 920167782
        %v474 = vsel %vm466, %v457, %v473
        %v475 = vsel %vm465, %v472, %v474
        %v476 = vsel %vm464, %v454, %v457
        %v477 = vsel %vm467, %v463, 1326507024
        %v478 = vsel %vm466, %v460, %v477
        %v479 = vsel %vm465, %v476, %v478
        %v480 = vshll.u32 %v440, 8
        %v481 = vmul.u32.u64.compose %v480, %v479
        %v482 = vextract.low.u32 %v481
        %v483 = vextract.high.u32 %v481
        %v484 = vmul.u32.u64.compose %v480, %v475
        %v485 = vextract.low.u32 %v484
        %v486 = vextract.high.u32 %v484
        %v487 = vmul.u32 %v480, %v471
        %v488 = vadd.s32 %v483, %v485
        %vm489 = vc.u32 %v483, %v485
        %v490 = vadd.s32 %v486, 1
        %v491 = vsel %vm489, %v490, %v486
        %v492 = vadd.s32 %v487, %v491
        %v493 = vadd.s32 %v492, 536870912
        %v494 = vshrl.u32 %v493, 30
        %v495 = vshll.u32 %v494, 30
        %v496 = vsub.s32 %v492, %v495
        %vm497 = vcmp.lt.s32.totalorder %v496, 0
        %v498 = vsub.s32 0, %v496
        %v499 = vsel %vm497, %v498, %v496
        %v500 = vclz %v499
        %v501 = vsub.s32 %v500, 2
        %vm502 = vcmp.gt.s32.totalorder 0, %v501
        %v503 = vsel %vm502, 0, %v501
        %v504 = vsub.s32 32, %v503
        %v505 = vshll.u32 %v496, %v503
        %v506 = vshrl.u32 %v488, %v504
        %v507 = vor.u32 %v505, %v506
        %v508 = vsub.s32 4294967266, %v503
        %v509 = vadd.s32 %v508, 127
        %v510 = vshll.u32 %v509, 23
        %v511 = vor.u32 4788187, %v510
        %v512 = vand.u32 2147483647, %v511
        %v514 = vcvt.s32.f32 %v507
        %v515 = vmul.f32 %v514, %v512
        %v516 = vxor.u32 %v515, 2147483648
        %v517 = vsel %vm434, %v516, %v515
        %v518 = vsub.s32 4, %v494
        %v519 = vsel %vm434, %v518, %v494
        %v520 = vsel %vm433, %v431, %v517
        %v521 = vsel %vm433, 0, %v519
        %v522 = vcosq.f32.pop %v520
        %v523 = vsinq.f32.pop %v520
        %vm524 = vweird.f32 %v431
        %v525 = vadd.s32 %v521, 3
        %v526 = vand.u32 %v525, 3
        %vm527 = vcmp.lt.s32.totalorder %v526, 2
        %vm528 = vcmp.eq.s32.totalorder %v526, 0
        %v529 = vxor.u32 %v523, 2147483648
        %v530 = vsel %vm528, %v522, %v529
        %vm531 = vcmp.eq.s32.totalorder %v526, 2
        %v532 = vxor.u32 %v522, 2147483648
        %v533 = vsel %vm531, %v532, %v523
        %v534 = vsel %vm527, %v530, %v533
        %v535 = vsel %vm524, nan, %v534
        %537 = vrot.lane.b32.xlu0 %v535, 48
        %v538 = vpop.permute.xlu0 %537
        %vm540 = vcmask 523648
        %541 = vst.msk [vmem:[%s208] sm:$0xff] %vm540, %v538
        %v542 = vand.u32 2147483647, %v431
        %vm543 = vcmp.le.f32.partialorder %v542, 0.7853982
        %vm544 = vcmp.lt.s32.totalorder %v431, 0
        %v545 = vand.u32 %v431, 2139095040
        %v546 = vshrl.u32 %v545, 23
        %v547 = vsub.s32 %v546, 127
        %v548 = vand.u32 2147483647, %v431
        %v549 = vand.u32 %v548, 8388607
        %v550 = vor.u32 %v549, 8388608
        %v551 = vsub.s32 0, %v550
        %v552 = vadd.s32 %v547, 1
        %vm553 = vcmp.gt.s32.totalorder %v552, 0
        %v554 = vsel %vm553, %v552, 0
        %v555 = vshrl.u32 %v554, 5
        %v556 = vand.u32 %v554, 31
        %v557 = vsub.s32 32, %v556
        %v558 = vshrl.u32 683565275, %v557
        %v559 = vshll.u32 683565275, %v556
        %v560 = vshrl.u32 2475754826, %v557
        %v561 = vor.u32 %v559, %v560
        %v562 = vshll.u32 2475754826, %v556
        %v563 = vshrl.u32 2131351028, %v557
        %v564 = vor.u32 %v562, %v563
        %v565 = vshll.u32 2131351028, %v556
        %v566 = vshrl.u32 2102212464, %v557
        %v567 = vor.u32 %v565, %v566
        %v568 = vshll.u32 2102212464, %v556
        %v569 = vshrl.u32 920167782, %v557
        %v570 = vor.u32 %v568, %v569
        %v571 = vshll.u32 920167782, %v556
        %v572 = vshrl.u32 1326507024, %v557
        %v573 = vor.u32 %v571, %v572
        %vm574 = vcmp.lt.s32.totalorder %v555, 1
        %vm575 = vcmp.lt.s32.totalorder %v555, 2
        %vm576 = vcmp.lt.s32.totalorder %v555, 3
        %vm577 = vcmp.lt.s32.totalorder %v555, 4
        %v578 = vsel %vm574, %v558, %v561
        %v579 = vsel %vm577, %v567, 2102212464
        %v580 = vsel %vm576, %v564, %v579
        %v581 = vsel %vm575, %v578, %v580
        %v582 = vsel %vm574, %v561, %v564
        %v583 = vsel %vm577, %v570, 920167782
        %v584 = vsel %vm576, %v567, %v583
        %v585 = vsel %vm575, %v582, %v584
        %v586 = vsel %vm574, %v564, %v567
        %v587 = vsel %vm577, %v573, 1326507024
        %v588 = vsel %vm576, %v570, %v587
        %v589 = vsel %vm575, %v586, %v588
        %v590 = vshll.u32 %v550, 8
        %v591 = vmul.u32.u64.compose %v590, %v589
        %v592 = vextract.low.u32 %v591
        %v593 = vextract.high.u32 %v591
        %v594 = vmul.u32.u64.compose %v590, %v585
        %v595 = vextract.low.u32 %v594
        %v596 = vextract.high.u32 %v594
        %v597 = vmul.u32 %v590, %v581
        %v598 = vadd.s32 %v593, %v595
        %vm599 = vc.u32 %v593, %v595
        %v600 = vadd.s32 %v596, 1
        %v601 = vsel %vm599, %v600, %v596
        %v602 = vadd.s32 %v597, %v601
        %v603 = vadd.s32 %v602, 536870912
        %v604 = vshrl.u32 %v603, 30
        %v605 = vshll.u32 %v604, 30
        %v606 = vsub.s32 %v602, %v605
        %vm607 = vcmp.lt.s32.totalorder %v606, 0
        %v608 = vsub.s32 0, %v606
        %v609 = vsel %vm607, %v608, %v606
        %v610 = vclz %v609
        %v611 = vsub.s32 %v610, 2
        %vm612 = vcmp.gt.s32.totalorder 0, %v611
        %v613 = vsel %vm612, 0, %v611
        %v614 = vsub.s32 32, %v613
        %v615 = vshll.u32 %v606, %v613
        %v616 = vshrl.u32 %v598, %v614
        %v617 = vor.u32 %v615, %v616
        %v618 = vsub.s32 4294967266, %v613
        %v619 = vadd.s32 %v618, 127
        %v620 = vshll.u32 %v619, 23
        %v621 = vor.u32 4788187, %v620
        %v622 = vand.u32 2147483647, %v621
        %v624 = vcvt.s32.f32 %v617
        %v625 = vmul.f32 %v624, %v622
        %v626 = vxor.u32 %v625, 2147483648
        %v627 = vsel %vm544, %v626, %v625
        %v628 = vsub.s32 4, %v604
        %v629 = vsel %vm544, %v628, %v604
        %v630 = vsel %vm543, %v431, %v627
        %v631 = vsel %vm543, 0, %v629
        %v632 = vcosq.f32.pop %v630
        %v633 = vsinq.f32.pop %v630
        %vm634 = vweird.f32 %v431
        %v635 = vand.u32 %v631, 3
        %vm636 = vcmp.lt.s32.totalorder %v635, 2
        %vm637 = vcmp.eq.s32.totalorder %v635, 0
        %v638 = vxor.u32 %v633, 2147483648
        %v639 = vsel %vm637, %v632, %v638
        %vm640 = vcmp.eq.s32.totalorder %v635, 2
        %v641 = vxor.u32 %v632, 2147483648
        %v642 = vsel %vm640, %v641, %v633
        %v643 = vsel %vm636, %v639, %v642
        %v644 = vsel %vm634, nan, %v643
        %646 = vrot.lane.b32.xlu0 %v644, 64
        %v647 = vpop.permute.xlu0 %646
        %vm649 = vcmask 654848
        %650 = vst.msk [vmem:[%s208] sm:$0xff] %vm649, %v647
        %v651 = vmul.f32 %v209, 4.0
        %v652 = vand.u32 2147483647, %v651
        %vm653 = vcmp.le.f32.partialorder %v652, 0.7853982
        %vm654 = vcmp.lt.s32.totalorder %v651, 0
        %v655 = vand.u32 %v651, 2139095040
        %v656 = vshrl.u32 %v655, 23
        %v657 = vsub.s32 %v656, 127
        %v658 = vand.u32 2147483647, %v651
        %v659 = vand.u32 %v658, 8388607
        %v660 = vor.u32 %v659, 8388608
        %v661 = vsub.s32 0, %v660
        %v662 = vadd.s32 %v657, 1
        %vm663 = vcmp.gt.s32.totalorder %v662, 0
        %v664 = vsel %vm663, %v662, 0
        %v665 = vshrl.u32 %v664, 5
        %v666 = vand.u32 %v664, 31
        %v667 = vsub.s32 32, %v666
        %v668 = vshrl.u32 683565275, %v667
        %v669 = vshll.u32 683565275, %v666
        %v670 = vshrl.u32 2475754826, %v667
        %v671 = vor.u32 %v669, %v670
        %v672 = vshll.u32 2475754826, %v666
        %v673 = vshrl.u32 2131351028, %v667
        %v674 = vor.u32 %v672, %v673
        %v675 = vshll.u32 2131351028, %v666
        %v676 = vshrl.u32 2102212464, %v667
        %v677 = vor.u32 %v675, %v676
        %v678 = vshll.u32 2102212464, %v666
        %v679 = vshrl.u32 920167782, %v667
        %v680 = vor.u32 %v678, %v679
        %v681 = vshll.u32 920167782, %v666
        %v682 = vshrl.u32 1326507024, %v667
        %v683 = vor.u32 %v681, %v682
        %vm684 = vcmp.lt.s32.totalorder %v665, 1
        %vm685 = vcmp.lt.s32.totalorder %v665, 2
        %vm686 = vcmp.lt.s32.totalorder %v665, 3
        %vm687 = vcmp.lt.s32.totalorder %v665, 4
        %v688 = vsel %vm684, %v668, %v671
        %v689 = vsel %vm687, %v677, 2102212464
        %v690 = vsel %vm686, %v674, %v689
        %v691 = vsel %vm685, %v688, %v690
        %v692 = vsel %vm684, %v671, %v674
        %v693 = vsel %vm687, %v680, 920167782
        %v694 = vsel %vm686, %v677, %v693
        %v695 = vsel %vm685, %v692, %v694
        %v696 = vsel %vm684, %v674, %v677
        %v697 = vsel %vm687, %v683, 1326507024
        %v698 = vsel %vm686, %v680, %v697
        %v699 = vsel %vm685, %v696, %v698
        %v700 = vshll.u32 %v660, 8
        %v701 = vmul.u32.u64.compose %v700, %v699
        %v702 = vextract.low.u32 %v701
        %v703 = vextract.high.u32 %v701
        %v704 = vmul.u32.u64.compose %v700, %v695
        %v705 = vextract.low.u32 %v704
        %v706 = vextract.high.u32 %v704
        %v707 = vmul.u32 %v700, %v691
        %v708 = vadd.s32 %v703, %v705
        %vm709 = vc.u32 %v703, %v705
        %v710 = vadd.s32 %v706, 1
        %v711 = vsel %vm709, %v710, %v706
        %v712 = vadd.s32 %v707, %v711
        %v713 = vadd.s32 %v712, 536870912
        %v714 = vshrl.u32 %v713, 30
        %v715 = vshll.u32 %v714, 30
        %v716 = vsub.s32 %v712, %v715
        %vm717 = vcmp.lt.s32.totalorder %v716, 0
        %v718 = vsub.s32 0, %v716
        %v719 = vsel %vm717, %v718, %v716
        %v720 = vclz %v719
        %v721 = vsub.s32 %v720, 2
        %vm722 = vcmp.gt.s32.totalorder 0, %v721
        %v723 = vsel %vm722, 0, %v721
        %v724 = vsub.s32 32, %v723
        %v725 = vshll.u32 %v716, %v723
        %v726 = vshrl.u32 %v708, %v724
        %v727 = vor.u32 %v725, %v726
        %v728 = vsub.s32 4294967266, %v723
        %v729 = vadd.s32 %v728, 127
        %v730 = vshll.u32 %v729, 23
        %v731 = vor.u32 4788187, %v730
        %v732 = vand.u32 2147483647, %v731
        %v734 = vcvt.s32.f32 %v727
        %v735 = vmul.f32 %v734, %v732
        %v736 = vxor.u32 %v735, 2147483648
        %v737 = vsel %vm654, %v736, %v735
        %v738 = vsub.s32 4, %v714
        %v739 = vsel %vm654, %v738, %v714
        %v740 = vsel %vm653, %v651, %v737
        %v741 = vsel %vm653, 0, %v739
        %v742 = vcosq.f32.pop %v740
        %v743 = vsinq.f32.pop %v740
        %vm744 = vweird.f32 %v651
        %v745 = vadd.s32 %v741, 3
        %v746 = vand.u32 %v745, 3
        %vm747 = vcmp.lt.s32.totalorder %v746, 2
        %vm748 = vcmp.eq.s32.totalorder %v746, 0
        %v749 = vxor.u32 %v743, 2147483648
        %v750 = vsel %vm748, %v742, %v749
        %vm751 = vcmp.eq.s32.totalorder %v746, 2
        %v752 = vxor.u32 %v742, 2147483648
        %v753 = vsel %vm751, %v752, %v743
        %v754 = vsel %vm747, %v750, %v753
        %v755 = vsel %vm744, nan, %v754
        %757 = vrot.lane.b32.xlu0 %v755, 80
        %v758 = vpop.permute.xlu0 %757
        %vm760 = vcmask 786048
        %761 = vst.msk [vmem:[%s208] sm:$0xff] %vm760, %v758
        %v762 = vand.u32 2147483647, %v651
        %vm763 = vcmp.le.f32.partialorder %v762, 0.7853982
        %vm764 = vcmp.lt.s32.totalorder %v651, 0
        %v765 = vand.u32 %v651, 2139095040
        %v766 = vshrl.u32 %v765, 23
        %v767 = vsub.s32 %v766, 127
        %v768 = vand.u32 2147483647, %v651
        %v769 = vand.u32 %v768, 8388607
        %v770 = vor.u32 %v769, 8388608
        %v771 = vsub.s32 0, %v770
        %v772 = vadd.s32 %v767, 1
        %vm773 = vcmp.gt.s32.totalorder %v772, 0
        %v774 = vsel %vm773, %v772, 0
        %v775 = vshrl.u32 %v774, 5
        %v776 = vand.u32 %v774, 31
        %v777 = vsub.s32 32, %v776
        %v778 = vshrl.u32 683565275, %v777
        %v779 = vshll.u32 683565275, %v776
        %v780 = vshrl.u32 2475754826, %v777
        %v781 = vor.u32 %v779, %v780
        %v782 = vshll.u32 2475754826, %v776
        %v783 = vshrl.u32 2131351028, %v777
        %v784 = vor.u32 %v782, %v783
        %v785 = vshll.u32 2131351028, %v776
        %v786 = vshrl.u32 2102212464, %v777
        %v787 = vor.u32 %v785, %v786
        %v788 = vshll.u32 2102212464, %v776
        %v789 = vshrl.u32 920167782, %v777
        %v790 = vor.u32 %v788, %v789
        %v791 = vshll.u32 920167782, %v776
        %v792 = vshrl.u32 1326507024, %v777
        %v793 = vor.u32 %v791, %v792
        %vm794 = vcmp.lt.s32.totalorder %v775, 1
        %vm795 = vcmp.lt.s32.totalorder %v775, 2
        %vm796 = vcmp.lt.s32.totalorder %v775, 3
        %vm797 = vcmp.lt.s32.totalorder %v775, 4
        %v798 = vsel %vm794, %v778, %v781
        %v799 = vsel %vm797, %v787, 2102212464
        %v800 = vsel %vm796, %v784, %v799
        %v801 = vsel %vm795, %v798, %v800
        %v802 = vsel %vm794, %v781, %v784
        %v803 = vsel %vm797, %v790, 920167782
        %v804 = vsel %vm796, %v787, %v803
        %v805 = vsel %vm795, %v802, %v804
        %v806 = vsel %vm794, %v784, %v787
        %v807 = vsel %vm797, %v793, 1326507024
        %v808 = vsel %vm796, %v790, %v807
        %v809 = vsel %vm795, %v806, %v808
        %v810 = vshll.u32 %v770, 8
        %v811 = vmul.u32.u64.compose %v810, %v809
        %v812 = vextract.low.u32 %v811
        %v813 = vextract.high.u32 %v811
        %v814 = vmul.u32.u64.compose %v810, %v805
        %v815 = vextract.low.u32 %v814
        %v816 = vextract.high.u32 %v814
        %v817 = vmul.u32 %v810, %v801
        %v818 = vadd.s32 %v813, %v815
        %vm819 = vc.u32 %v813, %v815
        %v820 = vadd.s32 %v816, 1
        %v821 = vsel %vm819, %v820, %v816
        %v822 = vadd.s32 %v817, %v821
        %v823 = vadd.s32 %v822, 536870912
        %v824 = vshrl.u32 %v823, 30
        %v825 = vshll.u32 %v824, 30
        %v826 = vsub.s32 %v822, %v825
        %vm827 = vcmp.lt.s32.totalorder %v826, 0
        %v828 = vsub.s32 0, %v826
        %v829 = vsel %vm827, %v828, %v826
        %v830 = vclz %v829
        %v831 = vsub.s32 %v830, 2
        %vm832 = vcmp.gt.s32.totalorder 0, %v831
        %v833 = vsel %vm832, 0, %v831
        %v834 = vsub.s32 32, %v833
        %v835 = vshll.u32 %v826, %v833
        %v836 = vshrl.u32 %v818, %v834
        %v837 = vor.u32 %v835, %v836
        %v838 = vsub.s32 4294967266, %v833
        %v839 = vadd.s32 %v838, 127
        %v840 = vshll.u32 %v839, 23
        %v841 = vor.u32 4788187, %v840
        %v842 = vand.u32 2147483647, %v841
        %v844 = vcvt.s32.f32 %v837
        %v845 = vmul.f32 %v844, %v842
        %v846 = vxor.u32 %v845, 2147483648
        %v847 = vsel %vm764, %v846, %v845
        %v848 = vsub.s32 4, %v824
        %v849 = vsel %vm764, %v848, %v824
        %v850 = vsel %vm763, %v651, %v847
        %v851 = vsel %vm763, 0, %v849
        %v852 = vcosq.f32.pop %v850
        %v853 = vsinq.f32.pop %v850
        %vm854 = vweird.f32 %v651
        %v855 = vand.u32 %v851, 3
        %vm856 = vcmp.lt.s32.totalorder %v855, 2
        %vm857 = vcmp.eq.s32.totalorder %v855, 0
        %v858 = vxor.u32 %v853, 2147483648
        %v859 = vsel %vm857, %v852, %v858
        %vm860 = vcmp.eq.s32.totalorder %v855, 2
        %v861 = vxor.u32 %v852, 2147483648
        %v862 = vsel %vm860, %v861, %v853
        %v863 = vsel %vm856, %v859, %v862
        %v864 = vsel %vm854, nan, %v863
        %866 = vrot.lane.b32.xlu0 %v864, 96
        %v867 = vpop.permute.xlu0 %866
        %vm869 = vcmask 917248
        %870 = vst.msk [vmem:[%s208] sm:$0xff] %vm869, %v867
        %v871 = vmul.f32 %v209, 8.0
        %v872 = vand.u32 2147483647, %v871
        %vm873 = vcmp.le.f32.partialorder %v872, 0.7853982
        %vm874 = vcmp.lt.s32.totalorder %v871, 0
        %v875 = vand.u32 %v871, 2139095040
        %v876 = vshrl.u32 %v875, 23
        %v877 = vsub.s32 %v876, 127
        %v878 = vand.u32 2147483647, %v871
        %v879 = vand.u32 %v878, 8388607
        %v880 = vor.u32 %v879, 8388608
        %v881 = vsub.s32 0, %v880
        %v882 = vadd.s32 %v877, 1
        %vm883 = vcmp.gt.s32.totalorder %v882, 0
        %v884 = vsel %vm883, %v882, 0
        %v885 = vshrl.u32 %v884, 5
        %v886 = vand.u32 %v884, 31
        %v887 = vsub.s32 32, %v886
        %v888 = vshrl.u32 683565275, %v887
        %v889 = vshll.u32 683565275, %v886
        %v890 = vshrl.u32 2475754826, %v887
        %v891 = vor.u32 %v889, %v890
        %v892 = vshll.u32 2475754826, %v886
        %v893 = vshrl.u32 2131351028, %v887
        %v894 = vor.u32 %v892, %v893
        %v895 = vshll.u32 2131351028, %v886
        %v896 = vshrl.u32 2102212464, %v887
        %v897 = vor.u32 %v895, %v896
        %v898 = vshll.u32 2102212464, %v886
        %v899 = vshrl.u32 920167782, %v887
        %v900 = vor.u32 %v898, %v899
        %v901 = vshll.u32 920167782, %v886
        %v902 = vshrl.u32 1326507024, %v887
        %v903 = vor.u32 %v901, %v902
        %vm904 = vcmp.lt.s32.totalorder %v885, 1
        %vm905 = vcmp.lt.s32.totalorder %v885, 2
        %vm906 = vcmp.lt.s32.totalorder %v885, 3
        %vm907 = vcmp.lt.s32.totalorder %v885, 4
        %v908 = vsel %vm904, %v888, %v891
        %v909 = vsel %vm907, %v897, 2102212464
        %v910 = vsel %vm906, %v894, %v909
        %v911 = vsel %vm905, %v908, %v910
        %v912 = vsel %vm904, %v891, %v894
        %v913 = vsel %vm907, %v900, 920167782
        %v914 = vsel %vm906, %v897, %v913
        %v915 = vsel %vm905, %v912, %v914
        %v916 = vsel %vm904, %v894, %v897
        %v917 = vsel %vm907, %v903, 1326507024
        %v918 = vsel %vm906, %v900, %v917
        %v919 = vsel %vm905, %v916, %v918
        %v920 = vshll.u32 %v880, 8
        %v921 = vmul.u32.u64.compose %v920, %v919
        %v922 = vextract.low.u32 %v921
        %v923 = vextract.high.u32 %v921
        %v924 = vmul.u32.u64.compose %v920, %v915
        %v925 = vextract.low.u32 %v924
        %v926 = vextract.high.u32 %v924
        %v927 = vmul.u32 %v920, %v911
        %v928 = vadd.s32 %v923, %v925
        %vm929 = vc.u32 %v923, %v925
        %v930 = vadd.s32 %v926, 1
        %v931 = vsel %vm929, %v930, %v926
        %v932 = vadd.s32 %v927, %v931
        %v933 = vadd.s32 %v932, 536870912
        %v934 = vshrl.u32 %v933, 30
        %v935 = vshll.u32 %v934, 30
        %v936 = vsub.s32 %v932, %v935
        %vm937 = vcmp.lt.s32.totalorder %v936, 0
        %v938 = vsub.s32 0, %v936
        %v939 = vsel %vm937, %v938, %v936
        %v940 = vclz %v939
        %v941 = vsub.s32 %v940, 2
        %vm942 = vcmp.gt.s32.totalorder 0, %v941
        %v943 = vsel %vm942, 0, %v941
        %v944 = vsub.s32 32, %v943
        %v945 = vshll.u32 %v936, %v943
        %v946 = vshrl.u32 %v928, %v944
        %v947 = vor.u32 %v945, %v946
        %v948 = vsub.s32 4294967266, %v943
        %v949 = vadd.s32 %v948, 127
        %v950 = vshll.u32 %v949, 23
        %v951 = vor.u32 4788187, %v950
        %v952 = vand.u32 2147483647, %v951
        %v954 = vcvt.s32.f32 %v947
        %v955 = vmul.f32 %v954, %v952
        %v956 = vxor.u32 %v955, 2147483648
        %v957 = vsel %vm874, %v956, %v955
        %v958 = vsub.s32 4, %v934
        %v959 = vsel %vm874, %v958, %v934
        %v960 = vsel %vm873, %v871, %v957
        %v961 = vsel %vm873, 0, %v959
        %v962 = vcosq.f32.pop %v960
        %v963 = vsinq.f32.pop %v960
        %vm964 = vweird.f32 %v871
        %v965 = vadd.s32 %v961, 3
        %v966 = vand.u32 %v965, 3
        %vm967 = vcmp.lt.s32.totalorder %v966, 2
        %vm968 = vcmp.eq.s32.totalorder %v966, 0
        %v969 = vxor.u32 %v963, 2147483648
        %v970 = vsel %vm968, %v962, %v969
        %vm971 = vcmp.eq.s32.totalorder %v966, 2
        %v972 = vxor.u32 %v962, 2147483648
        %v973 = vsel %vm971, %v972, %v963
        %v974 = vsel %vm967, %v970, %v973
        %v975 = vsel %vm964, nan, %v974
        %977 = vrot.lane.b32.xlu0 %v975, 112
        %v978 = vpop.permute.xlu0 %977
        %vm980 = vcmask 1048448
        %981 = vst.msk [vmem:[%s208] sm:$0xff] %vm980, %v978
        %v982 = vand.u32 2147483647, %v871
        %vm983 = vcmp.le.f32.partialorder %v982, 0.7853982
        %vm984 = vcmp.lt.s32.totalorder %v871, 0
        %v985 = vand.u32 %v871, 2139095040
        %v986 = vshrl.u32 %v985, 23
        %v987 = vsub.s32 %v986, 127
        %v988 = vand.u32 2147483647, %v871
        %v989 = vand.u32 %v988, 8388607
        %v990 = vor.u32 %v989, 8388608
        %v991 = vsub.s32 0, %v990
        %v992 = vadd.s32 %v987, 1
        %vm993 = vcmp.gt.s32.totalorder %v992, 0
        %v994 = vsel %vm993, %v992, 0
        %v995 = vshrl.u32 %v994, 5
        %v996 = vand.u32 %v994, 31
        %v997 = vsub.s32 32, %v996
        %v998 = vshrl.u32 683565275, %v997
        %v999 = vshll.u32 683565275, %v996
        %v1000 = vshrl.u32 2475754826, %v997
        %v1001 = vor.u32 %v999, %v1000
        %v1002 = vshll.u32 2475754826, %v996
        %v1003 = vshrl.u32 2131351028, %v997
        %v1004 = vor.u32 %v1002, %v1003
        %v1005 = vshll.u32 2131351028, %v996
        %v1006 = vshrl.u32 2102212464, %v997
        %v1007 = vor.u32 %v1005, %v1006
        %v1008 = vshll.u32 2102212464, %v996
        %v1009 = vshrl.u32 920167782, %v997
        %v1010 = vor.u32 %v1008, %v1009
        %v1011 = vshll.u32 920167782, %v996
        %v1012 = vshrl.u32 1326507024, %v997
        %v1013 = vor.u32 %v1011, %v1012
        %vm1014 = vcmp.lt.s32.totalorder %v995, 1
        %vm1015 = vcmp.lt.s32.totalorder %v995, 2
        %vm1016 = vcmp.lt.s32.totalorder %v995, 3
        %vm1017 = vcmp.lt.s32.totalorder %v995, 4
        %v1018 = vsel %vm1014, %v998, %v1001
        %v1019 = vsel %vm1017, %v1007, 2102212464
        %v1020 = vsel %vm1016, %v1004, %v1019
        %v1021 = vsel %vm1015, %v1018, %v1020
        %v1022 = vsel %vm1014, %v1001, %v1004
        %v1023 = vsel %vm1017, %v1010, 920167782
        %v1024 = vsel %vm1016, %v1007, %v1023
        %v1025 = vsel %vm1015, %v1022, %v1024
        %v1026 = vsel %vm1014, %v1004, %v1007
        %v1027 = vsel %vm1017, %v1013, 1326507024
        %v1028 = vsel %vm1016, %v1010, %v1027
        %v1029 = vsel %vm1015, %v1026, %v1028
        %v1030 = vshll.u32 %v990, 8
        %v1031 = vmul.u32.u64.compose %v1030, %v1029
        %v1032 = vextract.low.u32 %v1031
        %v1033 = vextract.high.u32 %v1031
        %v1034 = vmul.u32.u64.compose %v1030, %v1025
        %v1035 = vextract.low.u32 %v1034
        %v1036 = vextract.high.u32 %v1034
        %v1037 = vmul.u32 %v1030, %v1021
        %v1038 = vadd.s32 %v1033, %v1035
        %vm1039 = vc.u32 %v1033, %v1035
        %v1040 = vadd.s32 %v1036, 1
        %v1041 = vsel %vm1039, %v1040, %v1036
        %v1042 = vadd.s32 %v1037, %v1041
        %v1043 = vadd.s32 %v1042, 536870912
        %v1044 = vshrl.u32 %v1043, 30
        %v1045 = vshll.u32 %v1044, 30
        %v1046 = vsub.s32 %v1042, %v1045
        %vm1047 = vcmp.lt.s32.totalorder %v1046, 0
        %v1048 = vsub.s32 0, %v1046
        %v1049 = vsel %vm1047, %v1048, %v1046
        %v1050 = vclz %v1049
        %v1051 = vsub.s32 %v1050, 2
        %vm1052 = vcmp.gt.s32.totalorder 0, %v1051
        %v1053 = vsel %vm1052, 0, %v1051
        %v1054 = vsub.s32 32, %v1053
        %v1055 = vshll.u32 %v1046, %v1053
        %v1056 = vshrl.u32 %v1038, %v1054
        %v1057 = vor.u32 %v1055, %v1056
        %v1058 = vsub.s32 4294967266, %v1053
        %v1059 = vadd.s32 %v1058, 127
        %v1060 = vshll.u32 %v1059, 23
        %v1061 = vor.u32 4788187, %v1060
        %v1062 = vand.u32 2147483647, %v1061
        %v1064 = vcvt.s32.f32 %v1057
        %v1065 = vmul.f32 %v1064, %v1062
        %v1066 = vxor.u32 %v1065, 2147483648
        %v1067 = vsel %vm984, %v1066, %v1065
        %v1068 = vsub.s32 4, %v1044
        %v1069 = vsel %vm984, %v1068, %v1044
        %v1070 = vsel %vm983, %v871, %v1067
        %v1071 = vsel %vm983, 0, %v1069
        %v1072 = vcosq.f32.pop %v1070
        %v1073 = vsinq.f32.pop %v1070
        %vm1074 = vweird.f32 %v871
        %v1075 = vand.u32 %v1071, 3
        %vm1076 = vcmp.lt.s32.totalorder %v1075, 2
        %vm1077 = vcmp.eq.s32.totalorder %v1075, 0
        %v1078 = vxor.u32 %v1073, 2147483648
        %v1079 = vsel %vm1077, %v1072, %v1078
        %vm1080 = vcmp.eq.s32.totalorder %v1075, 2
        %v1081 = vxor.u32 %v1072, 2147483648
        %v1082 = vsel %vm1080, %v1081, %v1073
        %v1083 = vsel %vm1076, %v1079, %v1082
        %v1084 = vsel %vm1074, nan, %v1083
        %1085 = vst.msk [vmem:[%s208 + $0x8] sm:$0xff] %vm210, %v1084
        %v1086 = vmul.f32 %v209, 16.0
        %v1087 = vand.u32 2147483647, %v1086
        %vm1088 = vcmp.le.f32.partialorder %v1087, 0.7853982
        %vm1089 = vcmp.lt.s32.totalorder %v1086, 0
        %v1090 = vand.u32 %v1086, 2139095040
        %v1091 = vshrl.u32 %v1090, 23
        %v1092 = vsub.s32 %v1091, 127
        %v1093 = vand.u32 2147483647, %v1086
        %v1094 = vand.u32 %v1093, 8388607
        %v1095 = vor.u32 %v1094, 8388608
        %v1096 = vsub.s32 0, %v1095
        %v1097 = vadd.s32 %v1092, 1
        %vm1098 = vcmp.gt.s32.totalorder %v1097, 0
        %v1099 = vsel %vm1098, %v1097, 0
        %v1100 = vshrl.u32 %v1099, 5
        %v1101 = vand.u32 %v1099, 31
        %v1102 = vsub.s32 32, %v1101
        %v1103 = vshrl.u32 683565275, %v1102
        %v1104 = vshll.u32 683565275, %v1101
        %v1105 = vshrl.u32 2475754826, %v1102
        %v1106 = vor.u32 %v1104, %v1105
        %v1107 = vshll.u32 2475754826, %v1101
        %v1108 = vshrl.u32 2131351028, %v1102
        %v1109 = vor.u32 %v1107, %v1108
        %v1110 = vshll.u32 2131351028, %v1101
        %v1111 = vshrl.u32 2102212464, %v1102
        %v1112 = vor.u32 %v1110, %v1111
        %v1113 = vshll.u32 2102212464, %v1101
        %v1114 = vshrl.u32 920167782, %v1102
        %v1115 = vor.u32 %v1113, %v1114
        %v1116 = vshll.u32 920167782, %v1101
        %v1117 = vshrl.u32 1326507024, %v1102
        %v1118 = vor.u32 %v1116, %v1117
        %vm1119 = vcmp.lt.s32.totalorder %v1100, 1
        %vm1120 = vcmp.lt.s32.totalorder %v1100, 2
        %vm1121 = vcmp.lt.s32.totalorder %v1100, 3
        %vm1122 = vcmp.lt.s32.totalorder %v1100, 4
        %v1123 = vsel %vm1119, %v1103, %v1106
        %v1124 = vsel %vm1122, %v1112, 2102212464
        %v1125 = vsel %vm1121, %v1109, %v1124
        %v1126 = vsel %vm1120, %v1123, %v1125
        %v1127 = vsel %vm1119, %v1106, %v1109
        %v1128 = vsel %vm1122, %v1115, 920167782
        %v1129 = vsel %vm1121, %v1112, %v1128
        %v1130 = vsel %vm1120, %v1127, %v1129
        %v1131 = vsel %vm1119, %v1109, %v1112
        %v1132 = vsel %vm1122, %v1118, 1326507024
        %v1133 = vsel %vm1121, %v1115, %v1132
        %v1134 = vsel %vm1120, %v1131, %v1133
        %v1135 = vshll.u32 %v1095, 8
        %v1136 = vmul.u32.u64.compose %v1135, %v1134
        %v1137 = vextract.low.u32 %v1136
        %v1138 = vextract.high.u32 %v1136
        %v1139 = vmul.u32.u64.compose %v1135, %v1130
        %v1140 = vextract.low.u32 %v1139
        %v1141 = vextract.high.u32 %v1139
        %v1142 = vmul.u32 %v1135, %v1126
        %v1143 = vadd.s32 %v1138, %v1140
        %vm1144 = vc.u32 %v1138, %v1140
        %v1145 = vadd.s32 %v1141, 1
        %v1146 = vsel %vm1144, %v1145, %v1141
        %v1147 = vadd.s32 %v1142, %v1146
        %v1148 = vadd.s32 %v1147, 536870912
        %v1149 = vshrl.u32 %v1148, 30
        %v1150 = vshll.u32 %v1149, 30
        %v1151 = vsub.s32 %v1147, %v1150
        %vm1152 = vcmp.lt.s32.totalorder %v1151, 0
        %v1153 = vsub.s32 0, %v1151
        %v1154 = vsel %vm1152, %v1153, %v1151
        %v1155 = vclz %v1154
        %v1156 = vsub.s32 %v1155, 2
        %vm1157 = vcmp.gt.s32.totalorder 0, %v1156
        %v1158 = vsel %vm1157, 0, %v1156
        %v1159 = vsub.s32 32, %v1158
        %v1160 = vshll.u32 %v1151, %v1158
        %v1161 = vshrl.u32 %v1143, %v1159
        %v1162 = vor.u32 %v1160, %v1161
        %v1163 = vsub.s32 4294967266, %v1158
        %v1164 = vadd.s32 %v1163, 127
        %v1165 = vshll.u32 %v1164, 23
        %v1166 = vor.u32 4788187, %v1165
        %v1167 = vand.u32 2147483647, %v1166
        %v1169 = vcvt.s32.f32 %v1162
        %v1170 = vmul.f32 %v1169, %v1167
        %v1171 = vxor.u32 %v1170, 2147483648
        %v1172 = vsel %vm1089, %v1171, %v1170
        %v1173 = vsub.s32 4, %v1149
        %v1174 = vsel %vm1089, %v1173, %v1149
        %v1175 = vsel %vm1088, %v1086, %v1172
        %v1176 = vsel %vm1088, 0, %v1174
        %v1177 = vcosq.f32.pop %v1175
        %v1178 = vsinq.f32.pop %v1175
        %vm1179 = vweird.f32 %v1086
        %v1180 = vadd.s32 %v1176, 3
        %v1181 = vand.u32 %v1180, 3
        %vm1182 = vcmp.lt.s32.totalorder %v1181, 2
        %vm1183 = vcmp.eq.s32.totalorder %v1181, 0
        %v1184 = vxor.u32 %v1178, 2147483648
        %v1185 = vsel %vm1183, %v1177, %v1184
        %vm1186 = vcmp.eq.s32.totalorder %v1181, 2
        %v1187 = vxor.u32 %v1177, 2147483648
        %v1188 = vsel %vm1186, %v1187, %v1178
        %v1189 = vsel %vm1182, %v1185, %v1188
        %v1190 = vsel %vm1179, nan, %v1189
        %1192 = vrot.lane.b32.xlu0 %v1190, 16
        %v1193 = vpop.permute.xlu0 %1192
        %1195 = vst.msk [vmem:[%s208 + $0x8] sm:$0xff] %vm320, %v1193
        %v1196 = vand.u32 2147483647, %v1086
        %vm1197 = vcmp.le.f32.partialorder %v1196, 0.7853982
        %vm1198 = vcmp.lt.s32.totalorder %v1086, 0
        %v1199 = vand.u32 %v1086, 2139095040
        %v1200 = vshrl.u32 %v1199, 23
        %v1201 = vsub.s32 %v1200, 127
        %v1202 = vand.u32 2147483647, %v1086
        %v1203 = vand.u32 %v1202, 8388607
        %v1204 = vor.u32 %v1203, 8388608
        %v1205 = vsub.s32 0, %v1204
        %v1206 = vadd.s32 %v1201, 1
        %vm1207 = vcmp.gt.s32.totalorder %v1206, 0
        %v1208 = vsel %vm1207, %v1206, 0
        %v1209 = vshrl.u32 %v1208, 5
        %v1210 = vand.u32 %v1208, 31
        %v1211 = vsub.s32 32, %v1210
        %v1212 = vshrl.u32 683565275, %v1211
        %v1213 = vshll.u32 683565275, %v1210
        %v1214 = vshrl.u32 2475754826, %v1211
        %v1215 = vor.u32 %v1213, %v1214
        %v1216 = vshll.u32 2475754826, %v1210
        %v1217 = vshrl.u32 2131351028, %v1211
        %v1218 = vor.u32 %v1216, %v1217
        %v1219 = vshll.u32 2131351028, %v1210
        %v1220 = vshrl.u32 2102212464, %v1211
        %v1221 = vor.u32 %v1219, %v1220
        %v1222 = vshll.u32 2102212464, %v1210
        %v1223 = vshrl.u32 920167782, %v1211
        %v1224 = vor.u32 %v1222, %v1223
        %v1225 = vshll.u32 920167782, %v1210
        %v1226 = vshrl.u32 1326507024, %v1211
        %v1227 = vor.u32 %v1225, %v1226
        %vm1228 = vcmp.lt.s32.totalorder %v1209, 1
        %vm1229 = vcmp.lt.s32.totalorder %v1209, 2
        %vm1230 = vcmp.lt.s32.totalorder %v1209, 3
        %vm1231 = vcmp.lt.s32.totalorder %v1209, 4
        %v1232 = vsel %vm1228, %v1212, %v1215
        %v1233 = vsel %vm1231, %v1221, 2102212464
        %v1234 = vsel %vm1230, %v1218, %v1233
        %v1235 = vsel %vm1229, %v1232, %v1234
        %v1236 = vsel %vm1228, %v1215, %v1218
        %v1237 = vsel %vm1231, %v1224, 920167782
        %v1238 = vsel %vm1230, %v1221, %v1237
        %v1239 = vsel %vm1229, %v1236, %v1238
        %v1240 = vsel %vm1228, %v1218, %v1221
        %v1241 = vsel %vm1231, %v1227, 1326507024
        %v1242 = vsel %vm1230, %v1224, %v1241
        %v1243 = vsel %vm1229, %v1240, %v1242
        %v1244 = vshll.u32 %v1204, 8
        %v1245 = vmul.u32.u64.compose %v1244, %v1243
        %v1246 = vextract.low.u32 %v1245
        %v1247 = vextract.high.u32 %v1245
        %v1248 = vmul.u32.u64.compose %v1244, %v1239
        %v1249 = vextract.low.u32 %v1248
        %v1250 = vextract.high.u32 %v1248
        %v1251 = vmul.u32 %v1244, %v1235
        %v1252 = vadd.s32 %v1247, %v1249
        %vm1253 = vc.u32 %v1247, %v1249
        %v1254 = vadd.s32 %v1250, 1
        %v1255 = vsel %vm1253, %v1254, %v1250
        %v1256 = vadd.s32 %v1251, %v1255
        %v1257 = vadd.s32 %v1256, 536870912
        %v1258 = vshrl.u32 %v1257, 30
        %v1259 = vshll.u32 %v1258, 30
        %v1260 = vsub.s32 %v1256, %v1259
        %vm1261 = vcmp.lt.s32.totalorder %v1260, 0
        %v1262 = vsub.s32 0, %v1260
        %v1263 = vsel %vm1261, %v1262, %v1260
        %v1264 = vclz %v1263
        %v1265 = vsub.s32 %v1264, 2
        %vm1266 = vcmp.gt.s32.totalorder 0, %v1265
        %v1267 = vsel %vm1266, 0, %v1265
        %v1268 = vsub.s32 32, %v1267
        %v1269 = vshll.u32 %v1260, %v1267
        %v1270 = vshrl.u32 %v1252, %v1268
        %v1271 = vor.u32 %v1269, %v1270
        %v1272 = vsub.s32 4294967266, %v1267
        %v1273 = vadd.s32 %v1272, 127
        %v1274 = vshll.u32 %v1273, 23
        %v1275 = vor.u32 4788187, %v1274
        %v1276 = vand.u32 2147483647, %v1275
        %v1278 = vcvt.s32.f32 %v1271
        %v1279 = vmul.f32 %v1278, %v1276
        %v1280 = vxor.u32 %v1279, 2147483648
        %v1281 = vsel %vm1198, %v1280, %v1279
        %v1282 = vsub.s32 4, %v1258
        %v1283 = vsel %vm1198, %v1282, %v1258
        %v1284 = vsel %vm1197, %v1086, %v1281
        %v1285 = vsel %vm1197, 0, %v1283
        %v1286 = vcosq.f32.pop %v1284
        %v1287 = vsinq.f32.pop %v1284
        %vm1288 = vweird.f32 %v1086
        %v1289 = vand.u32 %v1285, 3
        %vm1290 = vcmp.lt.s32.totalorder %v1289, 2
        %vm1291 = vcmp.eq.s32.totalorder %v1289, 0
        %v1292 = vxor.u32 %v1287, 2147483648
        %v1293 = vsel %vm1291, %v1286, %v1292
        %vm1294 = vcmp.eq.s32.totalorder %v1289, 2
        %v1295 = vxor.u32 %v1286, 2147483648
        %v1296 = vsel %vm1294, %v1295, %v1287
        %v1297 = vsel %vm1290, %v1293, %v1296
        %v1298 = vsel %vm1288, nan, %v1297
        %1300 = vrot.lane.b32.xlu0 %v1298, 32
        %v1301 = vpop.permute.xlu0 %1300
        %1303 = vst.msk [vmem:[%s208 + $0x8] sm:$0xff] %vm429, %v1301
        %v1304 = vmul.f32 %v209, 32.0
        %v1305 = vand.u32 2147483647, %v1304
        %vm1306 = vcmp.le.f32.partialorder %v1305, 0.7853982
        %vm1307 = vcmp.lt.s32.totalorder %v1304, 0
        %v1308 = vand.u32 %v1304, 2139095040
        %v1309 = vshrl.u32 %v1308, 23
        %v1310 = vsub.s32 %v1309, 127
        %v1311 = vand.u32 2147483647, %v1304
        %v1312 = vand.u32 %v1311, 8388607
        %v1313 = vor.u32 %v1312, 8388608
        %v1314 = vsub.s32 0, %v1313
        %v1315 = vadd.s32 %v1310, 1
        %vm1316 = vcmp.gt.s32.totalorder %v1315, 0
        %v1317 = vsel %vm1316, %v1315, 0
        %v1318 = vshrl.u32 %v1317, 5
        %v1319 = vand.u32 %v1317, 31
        %v1320 = vsub.s32 32, %v1319
        %v1321 = vshrl.u32 683565275, %v1320
        %v1322 = vshll.u32 683565275, %v1319
        %v1323 = vshrl.u32 2475754826, %v1320
        %v1324 = vor.u32 %v1322, %v1323
        %v1325 = vshll.u32 2475754826, %v1319
        %v1326 = vshrl.u32 2131351028, %v1320
        %v1327 = vor.u32 %v1325, %v1326
        %v1328 = vshll.u32 2131351028, %v1319
        %v1329 = vshrl.u32 2102212464, %v1320
        %v1330 = vor.u32 %v1328, %v1329
        %v1331 = vshll.u32 2102212464, %v1319
        %v1332 = vshrl.u32 920167782, %v1320
        %v1333 = vor.u32 %v1331, %v1332
        %v1334 = vshll.u32 920167782, %v1319
        %v1335 = vshrl.u32 1326507024, %v1320
        %v1336 = vor.u32 %v1334, %v1335
        %vm1337 = vcmp.lt.s32.totalorder %v1318, 1
        %vm1338 = vcmp.lt.s32.totalorder %v1318, 2
        %vm1339 = vcmp.lt.s32.totalorder %v1318, 3
        %vm1340 = vcmp.lt.s32.totalorder %v1318, 4
        %v1341 = vsel %vm1337, %v1321, %v1324
        %v1342 = vsel %vm1340, %v1330, 2102212464
        %v1343 = vsel %vm1339, %v1327, %v1342
        %v1344 = vsel %vm1338, %v1341, %v1343
        %v1345 = vsel %vm1337, %v1324, %v1327
        %v1346 = vsel %vm1340, %v1333, 920167782
        %v1347 = vsel %vm1339, %v1330, %v1346
        %v1348 = vsel %vm1338, %v1345, %v1347
        %v1349 = vsel %vm1337, %v1327, %v1330
        %v1350 = vsel %vm1340, %v1336, 1326507024
        %v1351 = vsel %vm1339, %v1333, %v1350
        %v1352 = vsel %vm1338, %v1349, %v1351
        %v1353 = vshll.u32 %v1313, 8
        %v1354 = vmul.u32.u64.compose %v1353, %v1352
        %v1355 = vextract.low.u32 %v1354
        %v1356 = vextract.high.u32 %v1354
        %v1357 = vmul.u32.u64.compose %v1353, %v1348
        %v1358 = vextract.low.u32 %v1357
        %v1359 = vextract.high.u32 %v1357
        %v1360 = vmul.u32 %v1353, %v1344
        %v1361 = vadd.s32 %v1356, %v1358
        %vm1362 = vc.u32 %v1356, %v1358
        %v1363 = vadd.s32 %v1359, 1
        %v1364 = vsel %vm1362, %v1363, %v1359
        %v1365 = vadd.s32 %v1360, %v1364
        %v1366 = vadd.s32 %v1365, 536870912
        %v1367 = vshrl.u32 %v1366, 30
        %v1368 = vshll.u32 %v1367, 30
        %v1369 = vsub.s32 %v1365, %v1368
        %vm1370 = vcmp.lt.s32.totalorder %v1369, 0
        %v1371 = vsub.s32 0, %v1369
        %v1372 = vsel %vm1370, %v1371, %v1369
        %v1373 = vclz %v1372
        %v1374 = vsub.s32 %v1373, 2
        %vm1375 = vcmp.gt.s32.totalorder 0, %v1374
        %v1376 = vsel %vm1375, 0, %v1374
        %v1377 = vsub.s32 32, %v1376
        %v1378 = vshll.u32 %v1369, %v1376
        %v1379 = vshrl.u32 %v1361, %v1377
        %v1380 = vor.u32 %v1378, %v1379
        %v1381 = vsub.s32 4294967266, %v1376
        %v1382 = vadd.s32 %v1381, 127
        %v1383 = vshll.u32 %v1382, 23
        %v1384 = vor.u32 4788187, %v1383
        %v1385 = vand.u32 2147483647, %v1384
        %v1387 = vcvt.s32.f32 %v1380
        %v1388 = vmul.f32 %v1387, %v1385
        %v1389 = vxor.u32 %v1388, 2147483648
        %v1390 = vsel %vm1307, %v1389, %v1388
        %v1391 = vsub.s32 4, %v1367
        %v1392 = vsel %vm1307, %v1391, %v1367
        %v1393 = vsel %vm1306, %v1304, %v1390
        %v1394 = vsel %vm1306, 0, %v1392
        %v1395 = vcosq.f32.pop %v1393
        %v1396 = vsinq.f32.pop %v1393
        %vm1397 = vweird.f32 %v1304
        %v1398 = vadd.s32 %v1394, 3
        %v1399 = vand.u32 %v1398, 3
        %vm1400 = vcmp.lt.s32.totalorder %v1399, 2
        %vm1401 = vcmp.eq.s32.totalorder %v1399, 0
        %v1402 = vxor.u32 %v1396, 2147483648
        %v1403 = vsel %vm1401, %v1395, %v1402
        %vm1404 = vcmp.eq.s32.totalorder %v1399, 2
        %v1405 = vxor.u32 %v1395, 2147483648
        %v1406 = vsel %vm1404, %v1405, %v1396
        %v1407 = vsel %vm1400, %v1403, %v1406
        %v1408 = vsel %vm1397, nan, %v1407
        %1410 = vrot.lane.b32.xlu0 %v1408, 48
        %v1411 = vpop.permute.xlu0 %1410
        %1413 = vst.msk [vmem:[%s208 + $0x8] sm:$0xff] %vm540, %v1411
        %v1414 = vand.u32 2147483647, %v1304
        %vm1415 = vcmp.le.f32.partialorder %v1414, 0.7853982
        %vm1416 = vcmp.lt.s32.totalorder %v1304, 0
        %v1417 = vand.u32 %v1304, 2139095040
        %v1418 = vshrl.u32 %v1417, 23
        %v1419 = vsub.s32 %v1418, 127
        %v1420 = vand.u32 2147483647, %v1304
        %v1421 = vand.u32 %v1420, 8388607
        %v1422 = vor.u32 %v1421, 8388608
        %v1423 = vsub.s32 0, %v1422
        %v1424 = vadd.s32 %v1419, 1
        %vm1425 = vcmp.gt.s32.totalorder %v1424, 0
        %v1426 = vsel %vm1425, %v1424, 0
        %v1427 = vshrl.u32 %v1426, 5
        %v1428 = vand.u32 %v1426, 31
        %v1429 = vsub.s32 32, %v1428
        %v1430 = vshrl.u32 683565275, %v1429
        %v1431 = vshll.u32 683565275, %v1428
        %v1432 = vshrl.u32 2475754826, %v1429
        %v1433 = vor.u32 %v1431, %v1432
        %v1434 = vshll.u32 2475754826, %v1428
        %v1435 = vshrl.u32 2131351028, %v1429
        %v1436 = vor.u32 %v1434, %v1435
        %v1437 = vshll.u32 2131351028, %v1428
        %v1438 = vshrl.u32 2102212464, %v1429
        %v1439 = vor.u32 %v1437, %v1438
        %v1440 = vshll.u32 2102212464, %v1428
        %v1441 = vshrl.u32 920167782, %v1429
        %v1442 = vor.u32 %v1440, %v1441
        %v1443 = vshll.u32 920167782, %v1428
        %v1444 = vshrl.u32 1326507024, %v1429
        %v1445 = vor.u32 %v1443, %v1444
        %vm1446 = vcmp.lt.s32.totalorder %v1427, 1
        %vm1447 = vcmp.lt.s32.totalorder %v1427, 2
        %vm1448 = vcmp.lt.s32.totalorder %v1427, 3
        %vm1449 = vcmp.lt.s32.totalorder %v1427, 4
        %v1450 = vsel %vm1446, %v1430, %v1433
        %v1451 = vsel %vm1449, %v1439, 2102212464
        %v1452 = vsel %vm1448, %v1436, %v1451
        %v1453 = vsel %vm1447, %v1450, %v1452
        %v1454 = vsel %vm1446, %v1433, %v1436
        %v1455 = vsel %vm1449, %v1442, 920167782
        %v1456 = vsel %vm1448, %v1439, %v1455
        %v1457 = vsel %vm1447, %v1454, %v1456
        %v1458 = vsel %vm1446, %v1436, %v1439
        %v1459 = vsel %vm1449, %v1445, 1326507024
        %v1460 = vsel %vm1448, %v1442, %v1459
        %v1461 = vsel %vm1447, %v1458, %v1460
        %v1462 = vshll.u32 %v1422, 8
        %v1463 = vmul.u32.u64.compose %v1462, %v1461
        %v1464 = vextract.low.u32 %v1463
        %v1465 = vextract.high.u32 %v1463
        %v1466 = vmul.u32.u64.compose %v1462, %v1457
        %v1467 = vextract.low.u32 %v1466
        %v1468 = vextract.high.u32 %v1466
        %v1469 = vmul.u32 %v1462, %v1453
        %v1470 = vadd.s32 %v1465, %v1467
        %vm1471 = vc.u32 %v1465, %v1467
        %v1472 = vadd.s32 %v1468, 1
        %v1473 = vsel %vm1471, %v1472, %v1468
        %v1474 = vadd.s32 %v1469, %v1473
        %v1475 = vadd.s32 %v1474, 536870912
        %v1476 = vshrl.u32 %v1475, 30
        %v1477 = vshll.u32 %v1476, 30
        %v1478 = vsub.s32 %v1474, %v1477
        %vm1479 = vcmp.lt.s32.totalorder %v1478, 0
        %v1480 = vsub.s32 0, %v1478
        %v1481 = vsel %vm1479, %v1480, %v1478
        %v1482 = vclz %v1481
        %v1483 = vsub.s32 %v1482, 2
        %vm1484 = vcmp.gt.s32.totalorder 0, %v1483
        %v1485 = vsel %vm1484, 0, %v1483
        %v1486 = vsub.s32 32, %v1485
        %v1487 = vshll.u32 %v1478, %v1485
        %v1488 = vshrl.u32 %v1470, %v1486
        %v1489 = vor.u32 %v1487, %v1488
        %v1490 = vsub.s32 4294967266, %v1485
        %v1491 = vadd.s32 %v1490, 127
        %v1492 = vshll.u32 %v1491, 23
        %v1493 = vor.u32 4788187, %v1492
        %v1494 = vand.u32 2147483647, %v1493
        %v1496 = vcvt.s32.f32 %v1489
        %v1497 = vmul.f32 %v1496, %v1494
        %v1498 = vxor.u32 %v1497, 2147483648
        %v1499 = vsel %vm1416, %v1498, %v1497
        %v1500 = vsub.s32 4, %v1476
        %v1501 = vsel %vm1416, %v1500, %v1476
        %v1502 = vsel %vm1415, %v1304, %v1499
        %v1503 = vsel %vm1415, 0, %v1501
        %v1504 = vcosq.f32.pop %v1502
        %v1505 = vsinq.f32.pop %v1502
        %vm1506 = vweird.f32 %v1304
        %v1507 = vand.u32 %v1503, 3
        %vm1508 = vcmp.lt.s32.totalorder %v1507, 2
        %vm1509 = vcmp.eq.s32.totalorder %v1507, 0
        %v1510 = vxor.u32 %v1505, 2147483648
        %v1511 = vsel %vm1509, %v1504, %v1510
        %vm1512 = vcmp.eq.s32.totalorder %v1507, 2
        %v1513 = vxor.u32 %v1504, 2147483648
        %v1514 = vsel %vm1512, %v1513, %v1505
        %v1515 = vsel %vm1508, %v1511, %v1514
        %v1516 = vsel %vm1506, nan, %v1515
        %1518 = vrot.lane.b32.xlu0 %v1516, 64
        %v1519 = vpop.permute.xlu0 %1518
        %1521 = vst.msk [vmem:[%s208 + $0x8] sm:$0xff] %vm649, %v1519
        %v1522 = vmul.f32 %v209, 64.0
        %v1523 = vand.u32 2147483647, %v1522
        %vm1524 = vcmp.le.f32.partialorder %v1523, 0.7853982
        %vm1525 = vcmp.lt.s32.totalorder %v1522, 0
        %v1526 = vand.u32 %v1522, 2139095040
        %v1527 = vshrl.u32 %v1526, 23
        %v1528 = vsub.s32 %v1527, 127
        %v1529 = vand.u32 2147483647, %v1522
        %v1530 = vand.u32 %v1529, 8388607
        %v1531 = vor.u32 %v1530, 8388608
        %v1532 = vsub.s32 0, %v1531
        %v1533 = vadd.s32 %v1528, 1
        %vm1534 = vcmp.gt.s32.totalorder %v1533, 0
        %v1535 = vsel %vm1534, %v1533, 0
        %v1536 = vshrl.u32 %v1535, 5
        %v1537 = vand.u32 %v1535, 31
        %v1538 = vsub.s32 32, %v1537
        %v1539 = vshrl.u32 683565275, %v1538
        %v1540 = vshll.u32 683565275, %v1537
        %v1541 = vshrl.u32 2475754826, %v1538
        %v1542 = vor.u32 %v1540, %v1541
        %v1543 = vshll.u32 2475754826, %v1537
        %v1544 = vshrl.u32 2131351028, %v1538
        %v1545 = vor.u32 %v1543, %v1544
        %v1546 = vshll.u32 2131351028, %v1537
        %v1547 = vshrl.u32 2102212464, %v1538
        %v1548 = vor.u32 %v1546, %v1547
        %v1549 = vshll.u32 2102212464, %v1537
        %v1550 = vshrl.u32 920167782, %v1538
        %v1551 = vor.u32 %v1549, %v1550
        %v1552 = vshll.u32 920167782, %v1537
        %v1553 = vshrl.u32 1326507024, %v1538
        %v1554 = vor.u32 %v1552, %v1553
        %vm1555 = vcmp.lt.s32.totalorder %v1536, 1
        %vm1556 = vcmp.lt.s32.totalorder %v1536, 2
        %vm1557 = vcmp.lt.s32.totalorder %v1536, 3
        %vm1558 = vcmp.lt.s32.totalorder %v1536, 4
        %v1559 = vsel %vm1555, %v1539, %v1542
        %v1560 = vsel %vm1558, %v1548, 2102212464
        %v1561 = vsel %vm1557, %v1545, %v1560
        %v1562 = vsel %vm1556, %v1559, %v1561
        %v1563 = vsel %vm1555, %v1542, %v1545
        %v1564 = vsel %vm1558, %v1551, 920167782
        %v1565 = vsel %vm1557, %v1548, %v1564
        %v1566 = vsel %vm1556, %v1563, %v1565
        %v1567 = vsel %vm1555, %v1545, %v1548
        %v1568 = vsel %vm1558, %v1554, 1326507024
        %v1569 = vsel %vm1557, %v1551, %v1568
        %v1570 = vsel %vm1556, %v1567, %v1569
        %v1571 = vshll.u32 %v1531, 8
        %v1572 = vmul.u32.u64.compose %v1571, %v1570
        %v1573 = vextract.low.u32 %v1572
        %v1574 = vextract.high.u32 %v1572
        %v1575 = vmul.u32.u64.compose %v1571, %v1566
        %v1576 = vextract.low.u32 %v1575
        %v1577 = vextract.high.u32 %v1575
        %v1578 = vmul.u32 %v1571, %v1562
        %v1579 = vadd.s32 %v1574, %v1576
        %vm1580 = vc.u32 %v1574, %v1576
        %v1581 = vadd.s32 %v1577, 1
        %v1582 = vsel %vm1580, %v1581, %v1577
        %v1583 = vadd.s32 %v1578, %v1582
        %v1584 = vadd.s32 %v1583, 536870912
        %v1585 = vshrl.u32 %v1584, 30
        %v1586 = vshll.u32 %v1585, 30
        %v1587 = vsub.s32 %v1583, %v1586
        %vm1588 = vcmp.lt.s32.totalorder %v1587, 0
        %v1589 = vsub.s32 0, %v1587
        %v1590 = vsel %vm1588, %v1589, %v1587
        %v1591 = vclz %v1590
        %v1592 = vsub.s32 %v1591, 2
        %vm1593 = vcmp.gt.s32.totalorder 0, %v1592
        %v1594 = vsel %vm1593, 0, %v1592
        %v1595 = vsub.s32 32, %v1594
        %v1596 = vshll.u32 %v1587, %v1594
        %v1597 = vshrl.u32 %v1579, %v1595
        %v1598 = vor.u32 %v1596, %v1597
        %v1599 = vsub.s32 4294967266, %v1594
        %v1600 = vadd.s32 %v1599, 127
        %v1601 = vshll.u32 %v1600, 23
        %v1602 = vor.u32 4788187, %v1601
        %v1603 = vand.u32 2147483647, %v1602
        %v1605 = vcvt.s32.f32 %v1598
        %v1606 = vmul.f32 %v1605, %v1603
        %v1607 = vxor.u32 %v1606, 2147483648
        %v1608 = vsel %vm1525, %v1607, %v1606
        %v1609 = vsub.s32 4, %v1585
        %v1610 = vsel %vm1525, %v1609, %v1585
        %v1611 = vsel %vm1524, %v1522, %v1608
        %v1612 = vsel %vm1524, 0, %v1610
        %v1613 = vcosq.f32.pop %v1611
        %v1614 = vsinq.f32.pop %v1611
        %vm1615 = vweird.f32 %v1522
        %v1616 = vadd.s32 %v1612, 3
        %v1617 = vand.u32 %v1616, 3
        %vm1618 = vcmp.lt.s32.totalorder %v1617, 2
        %vm1619 = vcmp.eq.s32.totalorder %v1617, 0
        %v1620 = vxor.u32 %v1614, 2147483648
        %v1621 = vsel %vm1619, %v1613, %v1620
        %vm1622 = vcmp.eq.s32.totalorder %v1617, 2
        %v1623 = vxor.u32 %v1613, 2147483648
        %v1624 = vsel %vm1622, %v1623, %v1614
        %v1625 = vsel %vm1618, %v1621, %v1624
        %v1626 = vsel %vm1615, nan, %v1625
        %1628 = vrot.lane.b32.xlu0 %v1626, 80
        %v1629 = vpop.permute.xlu0 %1628
        %1631 = vst.msk [vmem:[%s208 + $0x8] sm:$0xff] %vm760, %v1629
        %v1632 = vand.u32 2147483647, %v1522
        %vm1633 = vcmp.le.f32.partialorder %v1632, 0.7853982
        %vm1634 = vcmp.lt.s32.totalorder %v1522, 0
        %v1635 = vand.u32 %v1522, 2139095040
        %v1636 = vshrl.u32 %v1635, 23
        %v1637 = vsub.s32 %v1636, 127
        %v1638 = vand.u32 2147483647, %v1522
        %v1639 = vand.u32 %v1638, 8388607
        %v1640 = vor.u32 %v1639, 8388608
        %v1641 = vsub.s32 0, %v1640
        %v1642 = vadd.s32 %v1637, 1
        %vm1643 = vcmp.gt.s32.totalorder %v1642, 0
        %v1644 = vsel %vm1643, %v1642, 0
        %v1645 = vshrl.u32 %v1644, 5
        %v1646 = vand.u32 %v1644, 31
        %v1647 = vsub.s32 32, %v1646
        %v1648 = vshrl.u32 683565275, %v1647
        %v1649 = vshll.u32 683565275, %v1646
        %v1650 = vshrl.u32 2475754826, %v1647
        %v1651 = vor.u32 %v1649, %v1650
        %v1652 = vshll.u32 2475754826, %v1646
        %v1653 = vshrl.u32 2131351028, %v1647
        %v1654 = vor.u32 %v1652, %v1653
        %v1655 = vshll.u32 2131351028, %v1646
        %v1656 = vshrl.u32 2102212464, %v1647
        %v1657 = vor.u32 %v1655, %v1656
        %v1658 = vshll.u32 2102212464, %v1646
        %v1659 = vshrl.u32 920167782, %v1647
        %v1660 = vor.u32 %v1658, %v1659
        %v1661 = vshll.u32 920167782, %v1646
        %v1662 = vshrl.u32 1326507024, %v1647
        %v1663 = vor.u32 %v1661, %v1662
        %vm1664 = vcmp.lt.s32.totalorder %v1645, 1
        %vm1665 = vcmp.lt.s32.totalorder %v1645, 2
        %vm1666 = vcmp.lt.s32.totalorder %v1645, 3
        %vm1667 = vcmp.lt.s32.totalorder %v1645, 4
        %v1668 = vsel %vm1664, %v1648, %v1651
        %v1669 = vsel %vm1667, %v1657, 2102212464
        %v1670 = vsel %vm1666, %v1654, %v1669
        %v1671 = vsel %vm1665, %v1668, %v1670
        %v1672 = vsel %vm1664, %v1651, %v1654
        %v1673 = vsel %vm1667, %v1660, 920167782
        %v1674 = vsel %vm1666, %v1657, %v1673
        %v1675 = vsel %vm1665, %v1672, %v1674
        %v1676 = vsel %vm1664, %v1654, %v1657
        %v1677 = vsel %vm1667, %v1663, 1326507024
        %v1678 = vsel %vm1666, %v1660, %v1677
        %v1679 = vsel %vm1665, %v1676, %v1678
        %v1680 = vshll.u32 %v1640, 8
        %v1681 = vmul.u32.u64.compose %v1680, %v1679
        %v1682 = vextract.low.u32 %v1681
        %v1683 = vextract.high.u32 %v1681
        %v1684 = vmul.u32.u64.compose %v1680, %v1675
        %v1685 = vextract.low.u32 %v1684
        %v1686 = vextract.high.u32 %v1684
        %v1687 = vmul.u32 %v1680, %v1671
        %v1688 = vadd.s32 %v1683, %v1685
        %vm1689 = vc.u32 %v1683, %v1685
        %v1690 = vadd.s32 %v1686, 1
        %v1691 = vsel %vm1689, %v1690, %v1686
        %v1692 = vadd.s32 %v1687, %v1691
        %v1693 = vadd.s32 %v1692, 536870912
        %v1694 = vshrl.u32 %v1693, 30
        %v1695 = vshll.u32 %v1694, 30
        %v1696 = vsub.s32 %v1692, %v1695
        %vm1697 = vcmp.lt.s32.totalorder %v1696, 0
        %v1698 = vsub.s32 0, %v1696
        %v1699 = vsel %vm1697, %v1698, %v1696
        %v1700 = vclz %v1699
        %v1701 = vsub.s32 %v1700, 2
        %vm1702 = vcmp.gt.s32.totalorder 0, %v1701
        %v1703 = vsel %vm1702, 0, %v1701
        %v1704 = vsub.s32 32, %v1703
        %v1705 = vshll.u32 %v1696, %v1703
        %v1706 = vshrl.u32 %v1688, %v1704
        %v1707 = vor.u32 %v1705, %v1706
        %v1708 = vsub.s32 4294967266, %v1703
        %v1709 = vadd.s32 %v1708, 127
        %v1710 = vshll.u32 %v1709, 23
        %v1711 = vor.u32 4788187, %v1710
        %v1712 = vand.u32 2147483647, %v1711
        %v1714 = vcvt.s32.f32 %v1707
        %v1715 = vmul.f32 %v1714, %v1712
        %v1716 = vxor.u32 %v1715, 2147483648
        %v1717 = vsel %vm1634, %v1716, %v1715
        %v1718 = vsub.s32 4, %v1694
        %v1719 = vsel %vm1634, %v1718, %v1694
        %v1720 = vsel %vm1633, %v1522, %v1717
        %v1721 = vsel %vm1633, 0, %v1719
        %v1722 = vcosq.f32.pop %v1720
        %v1723 = vsinq.f32.pop %v1720
        %vm1724 = vweird.f32 %v1522
        %v1725 = vand.u32 %v1721, 3
        %vm1726 = vcmp.lt.s32.totalorder %v1725, 2
        %vm1727 = vcmp.eq.s32.totalorder %v1725, 0
        %v1728 = vxor.u32 %v1723, 2147483648
        %v1729 = vsel %vm1727, %v1722, %v1728
        %vm1730 = vcmp.eq.s32.totalorder %v1725, 2
        %v1731 = vxor.u32 %v1722, 2147483648
        %v1732 = vsel %vm1730, %v1731, %v1723
        %v1733 = vsel %vm1726, %v1729, %v1732
        %v1734 = vsel %vm1724, nan, %v1733
        %1736 = vrot.lane.b32.xlu0 %v1734, 96
        %v1737 = vpop.permute.xlu0 %1736
        %1739 = vst.msk [vmem:[%s208 + $0x8] sm:$0xff] %vm869, %v1737
        %v1740 = vmul.f32 %v209, 128.0
        %v1741 = vand.u32 2147483647, %v1740
        %vm1742 = vcmp.le.f32.partialorder %v1741, 0.7853982
        %vm1743 = vcmp.lt.s32.totalorder %v1740, 0
        %v1744 = vand.u32 %v1740, 2139095040
        %v1745 = vshrl.u32 %v1744, 23
        %v1746 = vsub.s32 %v1745, 127
        %v1747 = vand.u32 2147483647, %v1740
        %v1748 = vand.u32 %v1747, 8388607
        %v1749 = vor.u32 %v1748, 8388608
        %v1750 = vsub.s32 0, %v1749
        %v1751 = vadd.s32 %v1746, 1
        %vm1752 = vcmp.gt.s32.totalorder %v1751, 0
        %v1753 = vsel %vm1752, %v1751, 0
        %v1754 = vshrl.u32 %v1753, 5
        %v1755 = vand.u32 %v1753, 31
        %v1756 = vsub.s32 32, %v1755
        %v1757 = vshrl.u32 683565275, %v1756
        %v1758 = vshll.u32 683565275, %v1755
        %v1759 = vshrl.u32 2475754826, %v1756
        %v1760 = vor.u32 %v1758, %v1759
        %v1761 = vshll.u32 2475754826, %v1755
        %v1762 = vshrl.u32 2131351028, %v1756
        %v1763 = vor.u32 %v1761, %v1762
        %v1764 = vshll.u32 2131351028, %v1755
        %v1765 = vshrl.u32 2102212464, %v1756
        %v1766 = vor.u32 %v1764, %v1765
        %v1767 = vshll.u32 2102212464, %v1755
        %v1768 = vshrl.u32 920167782, %v1756
        %v1769 = vor.u32 %v1767, %v1768
        %v1770 = vshll.u32 920167782, %v1755
        %v1771 = vshrl.u32 1326507024, %v1756
        %v1772 = vor.u32 %v1770, %v1771
        %vm1773 = vcmp.lt.s32.totalorder %v1754, 1
        %vm1774 = vcmp.lt.s32.totalorder %v1754, 2
        %vm1775 = vcmp.lt.s32.totalorder %v1754, 3
        %vm1776 = vcmp.lt.s32.totalorder %v1754, 4
        %v1777 = vsel %vm1773, %v1757, %v1760
        %v1778 = vsel %vm1776, %v1766, 2102212464
        %v1779 = vsel %vm1775, %v1763, %v1778
        %v1780 = vsel %vm1774, %v1777, %v1779
        %v1781 = vsel %vm1773, %v1760, %v1763
        %v1782 = vsel %vm1776, %v1769, 920167782
        %v1783 = vsel %vm1775, %v1766, %v1782
        %v1784 = vsel %vm1774, %v1781, %v1783
        %v1785 = vsel %vm1773, %v1763, %v1766
        %v1786 = vsel %vm1776, %v1772, 1326507024
        %v1787 = vsel %vm1775, %v1769, %v1786
        %v1788 = vsel %vm1774, %v1785, %v1787
        %v1789 = vshll.u32 %v1749, 8
        %v1790 = vmul.u32.u64.compose %v1789, %v1788
        %v1791 = vextract.low.u32 %v1790
        %v1792 = vextract.high.u32 %v1790
        %v1793 = vmul.u32.u64.compose %v1789, %v1784
        %v1794 = vextract.low.u32 %v1793
        %v1795 = vextract.high.u32 %v1793
        %v1796 = vmul.u32 %v1789, %v1780
        %v1797 = vadd.s32 %v1792, %v1794
        %vm1798 = vc.u32 %v1792, %v1794
        %v1799 = vadd.s32 %v1795, 1
        %v1800 = vsel %vm1798, %v1799, %v1795
        %v1801 = vadd.s32 %v1796, %v1800
        %v1802 = vadd.s32 %v1801, 536870912
        %v1803 = vshrl.u32 %v1802, 30
        %v1804 = vshll.u32 %v1803, 30
        %v1805 = vsub.s32 %v1801, %v1804
        %vm1806 = vcmp.lt.s32.totalorder %v1805, 0
        %v1807 = vsub.s32 0, %v1805
        %v1808 = vsel %vm1806, %v1807, %v1805
        %v1809 = vclz %v1808
        %v1810 = vsub.s32 %v1809, 2
        %vm1811 = vcmp.gt.s32.totalorder 0, %v1810
        %v1812 = vsel %vm1811, 0, %v1810
        %v1813 = vsub.s32 32, %v1812
        %v1814 = vshll.u32 %v1805, %v1812
        %v1815 = vshrl.u32 %v1797, %v1813
        %v1816 = vor.u32 %v1814, %v1815
        %v1817 = vsub.s32 4294967266, %v1812
        %v1818 = vadd.s32 %v1817, 127
        %v1819 = vshll.u32 %v1818, 23
        %v1820 = vor.u32 4788187, %v1819
        %v1821 = vand.u32 2147483647, %v1820
        %v1823 = vcvt.s32.f32 %v1816
        %v1824 = vmul.f32 %v1823, %v1821
        %v1825 = vxor.u32 %v1824, 2147483648
        %v1826 = vsel %vm1743, %v1825, %v1824
        %v1827 = vsub.s32 4, %v1803
        %v1828 = vsel %vm1743, %v1827, %v1803
        %v1829 = vsel %vm1742, %v1740, %v1826
        %v1830 = vsel %vm1742, 0, %v1828
        %v1831 = vcosq.f32.pop %v1829
        %v1832 = vsinq.f32.pop %v1829
        %vm1833 = vweird.f32 %v1740
        %v1834 = vadd.s32 %v1830, 3
        %v1835 = vand.u32 %v1834, 3
        %vm1836 = vcmp.lt.s32.totalorder %v1835, 2
        %vm1837 = vcmp.eq.s32.totalorder %v1835, 0
        %v1838 = vxor.u32 %v1832, 2147483648
        %v1839 = vsel %vm1837, %v1831, %v1838
        %vm1840 = vcmp.eq.s32.totalorder %v1835, 2
        %v1841 = vxor.u32 %v1831, 2147483648
        %v1842 = vsel %vm1840, %v1841, %v1832
        %v1843 = vsel %vm1836, %v1839, %v1842
        %v1844 = vsel %vm1833, nan, %v1843
        %1846 = vrot.lane.b32.xlu0 %v1844, 112
        %v1847 = vpop.permute.xlu0 %1846
        %1849 = vst.msk [vmem:[%s208 + $0x8] sm:$0xff] %vm980, %v1847
        %v1850 = vand.u32 2147483647, %v1740
        %vm1851 = vcmp.le.f32.partialorder %v1850, 0.7853982
        %vm1852 = vcmp.lt.s32.totalorder %v1740, 0
        %v1853 = vand.u32 %v1740, 2139095040
        %v1854 = vshrl.u32 %v1853, 23
        %v1855 = vsub.s32 %v1854, 127
        %v1856 = vand.u32 2147483647, %v1740
        %v1857 = vand.u32 %v1856, 8388607
        %v1858 = vor.u32 %v1857, 8388608
        %v1859 = vsub.s32 0, %v1858
        %v1860 = vadd.s32 %v1855, 1
        %vm1861 = vcmp.gt.s32.totalorder %v1860, 0
        %v1862 = vsel %vm1861, %v1860, 0
        %v1863 = vshrl.u32 %v1862, 5
        %v1864 = vand.u32 %v1862, 31
        %v1865 = vsub.s32 32, %v1864
        %v1866 = vshrl.u32 683565275, %v1865
        %v1867 = vshll.u32 683565275, %v1864
        %v1868 = vshrl.u32 2475754826, %v1865
        %v1869 = vor.u32 %v1867, %v1868
        %v1870 = vshll.u32 2475754826, %v1864
        %v1871 = vshrl.u32 2131351028, %v1865
        %v1872 = vor.u32 %v1870, %v1871
        %v1873 = vshll.u32 2131351028, %v1864
        %v1874 = vshrl.u32 2102212464, %v1865
        %v1875 = vor.u32 %v1873, %v1874
        %v1876 = vshll.u32 2102212464, %v1864
        %v1877 = vshrl.u32 920167782, %v1865
        %v1878 = vor.u32 %v1876, %v1877
        %v1879 = vshll.u32 920167782, %v1864
        %v1880 = vshrl.u32 1326507024, %v1865
        %v1881 = vor.u32 %v1879, %v1880
        %vm1882 = vcmp.lt.s32.totalorder %v1863, 1
        %vm1883 = vcmp.lt.s32.totalorder %v1863, 2
        %vm1884 = vcmp.lt.s32.totalorder %v1863, 3
        %vm1885 = vcmp.lt.s32.totalorder %v1863, 4
        %v1886 = vsel %vm1882, %v1866, %v1869
        %v1887 = vsel %vm1885, %v1875, 2102212464
        %v1888 = vsel %vm1884, %v1872, %v1887
        %v1889 = vsel %vm1883, %v1886, %v1888
        %v1890 = vsel %vm1882, %v1869, %v1872
        %v1891 = vsel %vm1885, %v1878, 920167782
        %v1892 = vsel %vm1884, %v1875, %v1891
        %v1893 = vsel %vm1883, %v1890, %v1892
        %v1894 = vsel %vm1882, %v1872, %v1875
        %v1895 = vsel %vm1885, %v1881, 1326507024
        %v1896 = vsel %vm1884, %v1878, %v1895
        %v1897 = vsel %vm1883, %v1894, %v1896
        %v1898 = vshll.u32 %v1858, 8
        %v1899 = vmul.u32.u64.compose %v1898, %v1897
        %v1900 = vextract.low.u32 %v1899
        %v1901 = vextract.high.u32 %v1899
        %v1902 = vmul.u32.u64.compose %v1898, %v1893
        %v1903 = vextract.low.u32 %v1902
        %v1904 = vextract.high.u32 %v1902
        %v1905 = vmul.u32 %v1898, %v1889
        %v1906 = vadd.s32 %v1901, %v1903
        %vm1907 = vc.u32 %v1901, %v1903
        %v1908 = vadd.s32 %v1904, 1
        %v1909 = vsel %vm1907, %v1908, %v1904
        %v1910 = vadd.s32 %v1905, %v1909
        %v1911 = vadd.s32 %v1910, 536870912
        %v1912 = vshrl.u32 %v1911, 30
        %v1913 = vshll.u32 %v1912, 30
        %v1914 = vsub.s32 %v1910, %v1913
        %vm1915 = vcmp.lt.s32.totalorder %v1914, 0
        %v1916 = vsub.s32 0, %v1914
        %v1917 = vsel %vm1915, %v1916, %v1914
        %v1918 = vclz %v1917
        %v1919 = vsub.s32 %v1918, 2
        %vm1920 = vcmp.gt.s32.totalorder 0, %v1919
        %v1921 = vsel %vm1920, 0, %v1919
        %v1922 = vsub.s32 32, %v1921
        %v1923 = vshll.u32 %v1914, %v1921
        %v1924 = vshrl.u32 %v1906, %v1922
        %v1925 = vor.u32 %v1923, %v1924
        %v1926 = vsub.s32 4294967266, %v1921
        %v1927 = vadd.s32 %v1926, 127
        %v1928 = vshll.u32 %v1927, 23
        %v1929 = vor.u32 4788187, %v1928
        %v1930 = vand.u32 2147483647, %v1929
        %v1932 = vcvt.s32.f32 %v1925
        %v1933 = vmul.f32 %v1932, %v1930
        %v1934 = vxor.u32 %v1933, 2147483648
        %v1935 = vsel %vm1852, %v1934, %v1933
        %v1936 = vsub.s32 4, %v1912
        %v1937 = vsel %vm1852, %v1936, %v1912
        %v1938 = vsel %vm1851, %v1740, %v1935
        %v1939 = vsel %vm1851, 0, %v1937
        %v1940 = vcosq.f32.pop %v1938
        %v1941 = vsinq.f32.pop %v1938
        %vm1942 = vweird.f32 %v1740
        %v1943 = vand.u32 %v1939, 3
        %vm1944 = vcmp.lt.s32.totalorder %v1943, 2
        %vm1945 = vcmp.eq.s32.totalorder %v1943, 0
        %v1946 = vxor.u32 %v1941, 2147483648
        %v1947 = vsel %vm1945, %v1940, %v1946
        %vm1948 = vcmp.eq.s32.totalorder %v1943, 2
        %v1949 = vxor.u32 %v1940, 2147483648
        %v1950 = vsel %vm1948, %v1949, %v1941
        %v1951 = vsel %vm1944, %v1947, %v1950
        %v1952 = vsel %vm1942, nan, %v1951
        %1953 = vst.msk [vmem:[%s208 + $0x10] sm:$0xff] %vm210, %v1952
        %v1954 = vmul.f32 %v209, 256.0
        %v1955 = vand.u32 2147483647, %v1954
        %vm1956 = vcmp.le.f32.partialorder %v1955, 0.7853982
        %vm1957 = vcmp.lt.s32.totalorder %v1954, 0
        %v1958 = vand.u32 %v1954, 2139095040
        %v1959 = vshrl.u32 %v1958, 23
        %v1960 = vsub.s32 %v1959, 127
        %v1961 = vand.u32 2147483647, %v1954
        %v1962 = vand.u32 %v1961, 8388607
        %v1963 = vor.u32 %v1962, 8388608
        %v1964 = vsub.s32 0, %v1963
        %v1965 = vadd.s32 %v1960, 1
        %vm1966 = vcmp.gt.s32.totalorder %v1965, 0
        %v1967 = vsel %vm1966, %v1965, 0
        %v1968 = vshrl.u32 %v1967, 5
        %v1969 = vand.u32 %v1967, 31
        %v1970 = vsub.s32 32, %v1969
        %v1971 = vshrl.u32 683565275, %v1970
        %v1972 = vshll.u32 683565275, %v1969
        %v1973 = vshrl.u32 2475754826, %v1970
        %v1974 = vor.u32 %v1972, %v1973
        %v1975 = vshll.u32 2475754826, %v1969
        %v1976 = vshrl.u32 2131351028, %v1970
        %v1977 = vor.u32 %v1975, %v1976
        %v1978 = vshll.u32 2131351028, %v1969
        %v1979 = vshrl.u32 2102212464, %v1970
        %v1980 = vor.u32 %v1978, %v1979
        %v1981 = vshll.u32 2102212464, %v1969
        %v1982 = vshrl.u32 920167782, %v1970
        %v1983 = vor.u32 %v1981, %v1982
        %v1984 = vshll.u32 920167782, %v1969
        %v1985 = vshrl.u32 1326507024, %v1970
        %v1986 = vor.u32 %v1984, %v1985
        %vm1987 = vcmp.lt.s32.totalorder %v1968, 1
        %vm1988 = vcmp.lt.s32.totalorder %v1968, 2
        %vm1989 = vcmp.lt.s32.totalorder %v1968, 3
        %vm1990 = vcmp.lt.s32.totalorder %v1968, 4
        %v1991 = vsel %vm1987, %v1971, %v1974
        %v1992 = vsel %vm1990, %v1980, 2102212464
        %v1993 = vsel %vm1989, %v1977, %v1992
        %v1994 = vsel %vm1988, %v1991, %v1993
        %v1995 = vsel %vm1987, %v1974, %v1977
        %v1996 = vsel %vm1990, %v1983, 920167782
        %v1997 = vsel %vm1989, %v1980, %v1996
        %v1998 = vsel %vm1988, %v1995, %v1997
        %v1999 = vsel %vm1987, %v1977, %v1980
        %v2000 = vsel %vm1990, %v1986, 1326507024
        %v2001 = vsel %vm1989, %v1983, %v2000
        %v2002 = vsel %vm1988, %v1999, %v2001
        %v2003 = vshll.u32 %v1963, 8
        %v2004 = vmul.u32.u64.compose %v2003, %v2002
        %v2005 = vextract.low.u32 %v2004
        %v2006 = vextract.high.u32 %v2004
        %v2007 = vmul.u32.u64.compose %v2003, %v1998
        %v2008 = vextract.low.u32 %v2007
        %v2009 = vextract.high.u32 %v2007
        %v2010 = vmul.u32 %v2003, %v1994
        %v2011 = vadd.s32 %v2006, %v2008
        %vm2012 = vc.u32 %v2006, %v2008
        %v2013 = vadd.s32 %v2009, 1
        %v2014 = vsel %vm2012, %v2013, %v2009
        %v2015 = vadd.s32 %v2010, %v2014
        %v2016 = vadd.s32 %v2015, 536870912
        %v2017 = vshrl.u32 %v2016, 30
        %v2018 = vshll.u32 %v2017, 30
        %v2019 = vsub.s32 %v2015, %v2018
        %vm2020 = vcmp.lt.s32.totalorder %v2019, 0
        %v2021 = vsub.s32 0, %v2019
        %v2022 = vsel %vm2020, %v2021, %v2019
        %v2023 = vclz %v2022
        %v2024 = vsub.s32 %v2023, 2
        %vm2025 = vcmp.gt.s32.totalorder 0, %v2024
        %v2026 = vsel %vm2025, 0, %v2024
        %v2027 = vsub.s32 32, %v2026
        %v2028 = vshll.u32 %v2019, %v2026
        %v2029 = vshrl.u32 %v2011, %v2027
        %v2030 = vor.u32 %v2028, %v2029
        %v2031 = vsub.s32 4294967266, %v2026
        %v2032 = vadd.s32 %v2031, 127
        %v2033 = vshll.u32 %v2032, 23
        %v2034 = vor.u32 4788187, %v2033
        %v2035 = vand.u32 2147483647, %v2034
        %v2037 = vcvt.s32.f32 %v2030
        %v2038 = vmul.f32 %v2037, %v2035
        %v2039 = vxor.u32 %v2038, 2147483648
        %v2040 = vsel %vm1957, %v2039, %v2038
        %v2041 = vsub.s32 4, %v2017
        %v2042 = vsel %vm1957, %v2041, %v2017
        %v2043 = vsel %vm1956, %v1954, %v2040
        %v2044 = vsel %vm1956, 0, %v2042
        %v2045 = vcosq.f32.pop %v2043
        %v2046 = vsinq.f32.pop %v2043
        %vm2047 = vweird.f32 %v1954
        %v2048 = vadd.s32 %v2044, 3
        %v2049 = vand.u32 %v2048, 3
        %vm2050 = vcmp.lt.s32.totalorder %v2049, 2
        %vm2051 = vcmp.eq.s32.totalorder %v2049, 0
        %v2052 = vxor.u32 %v2046, 2147483648
        %v2053 = vsel %vm2051, %v2045, %v2052
        %vm2054 = vcmp.eq.s32.totalorder %v2049, 2
        %v2055 = vxor.u32 %v2045, 2147483648
        %v2056 = vsel %vm2054, %v2055, %v2046
        %v2057 = vsel %vm2050, %v2053, %v2056
        %v2058 = vsel %vm2047, nan, %v2057
        %2060 = vrot.lane.b32.xlu0 %v2058, 16
        %v2061 = vpop.permute.xlu0 %2060
        %2063 = vst.msk [vmem:[%s208 + $0x10] sm:$0xff] %vm320, %v2061
        %v2064 = vand.u32 2147483647, %v1954
        %vm2065 = vcmp.le.f32.partialorder %v2064, 0.7853982
        %vm2066 = vcmp.lt.s32.totalorder %v1954, 0
        %v2067 = vand.u32 %v1954, 2139095040
        %v2068 = vshrl.u32 %v2067, 23
        %v2069 = vsub.s32 %v2068, 127
        %v2070 = vand.u32 2147483647, %v1954
        %v2071 = vand.u32 %v2070, 8388607
        %v2072 = vor.u32 %v2071, 8388608
        %v2073 = vsub.s32 0, %v2072
        %v2074 = vadd.s32 %v2069, 1
        %vm2075 = vcmp.gt.s32.totalorder %v2074, 0
        %v2076 = vsel %vm2075, %v2074, 0
        %v2077 = vshrl.u32 %v2076, 5
        %v2078 = vand.u32 %v2076, 31
        %v2079 = vsub.s32 32, %v2078
        %v2080 = vshrl.u32 683565275, %v2079
        %v2081 = vshll.u32 683565275, %v2078
        %v2082 = vshrl.u32 2475754826, %v2079
        %v2083 = vor.u32 %v2081, %v2082
        %v2084 = vshll.u32 2475754826, %v2078
        %v2085 = vshrl.u32 2131351028, %v2079
        %v2086 = vor.u32 %v2084, %v2085
        %v2087 = vshll.u32 2131351028, %v2078
        %v2088 = vshrl.u32 2102212464, %v2079
        %v2089 = vor.u32 %v2087, %v2088
        %v2090 = vshll.u32 2102212464, %v2078
        %v2091 = vshrl.u32 920167782, %v2079
        %v2092 = vor.u32 %v2090, %v2091
        %v2093 = vshll.u32 920167782, %v2078
        %v2094 = vshrl.u32 1326507024, %v2079
        %v2095 = vor.u32 %v2093, %v2094
        %vm2096 = vcmp.lt.s32.totalorder %v2077, 1
        %vm2097 = vcmp.lt.s32.totalorder %v2077, 2
        %vm2098 = vcmp.lt.s32.totalorder %v2077, 3
        %vm2099 = vcmp.lt.s32.totalorder %v2077, 4
        %v2100 = vsel %vm2096, %v2080, %v2083
        %v2101 = vsel %vm2099, %v2089, 2102212464
        %v2102 = vsel %vm2098, %v2086, %v2101
        %v2103 = vsel %vm2097, %v2100, %v2102
        %v2104 = vsel %vm2096, %v2083, %v2086
        %v2105 = vsel %vm2099, %v2092, 920167782
        %v2106 = vsel %vm2098, %v2089, %v2105
        %v2107 = vsel %vm2097, %v2104, %v2106
        %v2108 = vsel %vm2096, %v2086, %v2089
        %v2109 = vsel %vm2099, %v2095, 1326507024
        %v2110 = vsel %vm2098, %v2092, %v2109
        %v2111 = vsel %vm2097, %v2108, %v2110
        %v2112 = vshll.u32 %v2072, 8
        %v2113 = vmul.u32.u64.compose %v2112, %v2111
        %v2114 = vextract.low.u32 %v2113
        %v2115 = vextract.high.u32 %v2113
        %v2116 = vmul.u32.u64.compose %v2112, %v2107
        %v2117 = vextract.low.u32 %v2116
        %v2118 = vextract.high.u32 %v2116
        %v2119 = vmul.u32 %v2112, %v2103
        %v2120 = vadd.s32 %v2115, %v2117
        %vm2121 = vc.u32 %v2115, %v2117
        %v2122 = vadd.s32 %v2118, 1
        %v2123 = vsel %vm2121, %v2122, %v2118
        %v2124 = vadd.s32 %v2119, %v2123
        %v2125 = vadd.s32 %v2124, 536870912
        %v2126 = vshrl.u32 %v2125, 30
        %v2127 = vshll.u32 %v2126, 30
        %v2128 = vsub.s32 %v2124, %v2127
        %vm2129 = vcmp.lt.s32.totalorder %v2128, 0
        %v2130 = vsub.s32 0, %v2128
        %v2131 = vsel %vm2129, %v2130, %v2128
        %v2132 = vclz %v2131
        %v2133 = vsub.s32 %v2132, 2
        %vm2134 = vcmp.gt.s32.totalorder 0, %v2133
        %v2135 = vsel %vm2134, 0, %v2133
        %v2136 = vsub.s32 32, %v2135
        %v2137 = vshll.u32 %v2128, %v2135
        %v2138 = vshrl.u32 %v2120, %v2136
        %v2139 = vor.u32 %v2137, %v2138
        %v2140 = vsub.s32 4294967266, %v2135
        %v2141 = vadd.s32 %v2140, 127
        %v2142 = vshll.u32 %v2141, 23
        %v2143 = vor.u32 4788187, %v2142
        %v2144 = vand.u32 2147483647, %v2143
        %v2146 = vcvt.s32.f32 %v2139
        %v2147 = vmul.f32 %v2146, %v2144
        %v2148 = vxor.u32 %v2147, 2147483648
        %v2149 = vsel %vm2066, %v2148, %v2147
        %v2150 = vsub.s32 4, %v2126
        %v2151 = vsel %vm2066, %v2150, %v2126
        %v2152 = vsel %vm2065, %v1954, %v2149
        %v2153 = vsel %vm2065, 0, %v2151
        %v2154 = vcosq.f32.pop %v2152
        %v2155 = vsinq.f32.pop %v2152
        %vm2156 = vweird.f32 %v1954
        %v2157 = vand.u32 %v2153, 3
        %vm2158 = vcmp.lt.s32.totalorder %v2157, 2
        %vm2159 = vcmp.eq.s32.totalorder %v2157, 0
        %v2160 = vxor.u32 %v2155, 2147483648
        %v2161 = vsel %vm2159, %v2154, %v2160
        %vm2162 = vcmp.eq.s32.totalorder %v2157, 2
        %v2163 = vxor.u32 %v2154, 2147483648
        %v2164 = vsel %vm2162, %v2163, %v2155
        %v2165 = vsel %vm2158, %v2161, %v2164
        %v2166 = vsel %vm2156, nan, %v2165
        %2168 = vrot.lane.b32.xlu0 %v2166, 32
        %v2169 = vpop.permute.xlu0 %2168
        %2171 = vst.msk [vmem:[%s208 + $0x10] sm:$0xff] %vm429, %v2169
        %v2172 = vmul.f32 %v209, 512.0
        %v2173 = vand.u32 2147483647, %v2172
        %vm2174 = vcmp.le.f32.partialorder %v2173, 0.7853982
        %vm2175 = vcmp.lt.s32.totalorder %v2172, 0
        %v2176 = vand.u32 %v2172, 2139095040
        %v2177 = vshrl.u32 %v2176, 23
        %v2178 = vsub.s32 %v2177, 127
        %v2179 = vand.u32 2147483647, %v2172
        %v2180 = vand.u32 %v2179, 8388607
        %v2181 = vor.u32 %v2180, 8388608
        %v2182 = vsub.s32 0, %v2181
        %v2183 = vadd.s32 %v2178, 1
        %vm2184 = vcmp.gt.s32.totalorder %v2183, 0
        %v2185 = vsel %vm2184, %v2183, 0
        %v2186 = vshrl.u32 %v2185, 5
        %v2187 = vand.u32 %v2185, 31
        %v2188 = vsub.s32 32, %v2187
        %v2189 = vshrl.u32 683565275, %v2188
        %v2190 = vshll.u32 683565275, %v2187
        %v2191 = vshrl.u32 2475754826, %v2188
        %v2192 = vor.u32 %v2190, %v2191
        %v2193 = vshll.u32 2475754826, %v2187
        %v2194 = vshrl.u32 2131351028, %v2188
        %v2195 = vor.u32 %v2193, %v2194
        %v2196 = vshll.u32 2131351028, %v2187
        %v2197 = vshrl.u32 2102212464, %v2188
        %v2198 = vor.u32 %v2196, %v2197
        %v2199 = vshll.u32 2102212464, %v2187
        %v2200 = vshrl.u32 920167782, %v2188
        %v2201 = vor.u32 %v2199, %v2200
        %v2202 = vshll.u32 920167782, %v2187
        %v2203 = vshrl.u32 1326507024, %v2188
        %v2204 = vor.u32 %v2202, %v2203
        %vm2205 = vcmp.lt.s32.totalorder %v2186, 1
        %vm2206 = vcmp.lt.s32.totalorder %v2186, 2
        %vm2207 = vcmp.lt.s32.totalorder %v2186, 3
        %vm2208 = vcmp.lt.s32.totalorder %v2186, 4
        %v2209 = vsel %vm2205, %v2189, %v2192
        %v2210 = vsel %vm2208, %v2198, 2102212464
        %v2211 = vsel %vm2207, %v2195, %v2210
        %v2212 = vsel %vm2206, %v2209, %v2211
        %v2213 = vsel %vm2205, %v2192, %v2195
        %v2214 = vsel %vm2208, %v2201, 920167782
        %v2215 = vsel %vm2207, %v2198, %v2214
        %v2216 = vsel %vm2206, %v2213, %v2215
        %v2217 = vsel %vm2205, %v2195, %v2198
        %v2218 = vsel %vm2208, %v2204, 1326507024
        %v2219 = vsel %vm2207, %v2201, %v2218
        %v2220 = vsel %vm2206, %v2217, %v2219
        %v2221 = vshll.u32 %v2181, 8
        %v2222 = vmul.u32.u64.compose %v2221, %v2220
        %v2223 = vextract.low.u32 %v2222
        %v2224 = vextract.high.u32 %v2222
        %v2225 = vmul.u32.u64.compose %v2221, %v2216
        %v2226 = vextract.low.u32 %v2225
        %v2227 = vextract.high.u32 %v2225
        %v2228 = vmul.u32 %v2221, %v2212
        %v2229 = vadd.s32 %v2224, %v2226
        %vm2230 = vc.u32 %v2224, %v2226
        %v2231 = vadd.s32 %v2227, 1
        %v2232 = vsel %vm2230, %v2231, %v2227
        %v2233 = vadd.s32 %v2228, %v2232
        %v2234 = vadd.s32 %v2233, 536870912
        %v2235 = vshrl.u32 %v2234, 30
        %v2236 = vshll.u32 %v2235, 30
        %v2237 = vsub.s32 %v2233, %v2236
        %vm2238 = vcmp.lt.s32.totalorder %v2237, 0
        %v2239 = vsub.s32 0, %v2237
        %v2240 = vsel %vm2238, %v2239, %v2237
        %v2241 = vclz %v2240
        %v2242 = vsub.s32 %v2241, 2
        %vm2243 = vcmp.gt.s32.totalorder 0, %v2242
        %v2244 = vsel %vm2243, 0, %v2242
        %v2245 = vsub.s32 32, %v2244
        %v2246 = vshll.u32 %v2237, %v2244
        %v2247 = vshrl.u32 %v2229, %v2245
        %v2248 = vor.u32 %v2246, %v2247
        %v2249 = vsub.s32 4294967266, %v2244
        %v2250 = vadd.s32 %v2249, 127
        %v2251 = vshll.u32 %v2250, 23
        %v2252 = vor.u32 4788187, %v2251
        %v2253 = vand.u32 2147483647, %v2252
        %v2255 = vcvt.s32.f32 %v2248
        %v2256 = vmul.f32 %v2255, %v2253
        %v2257 = vxor.u32 %v2256, 2147483648
        %v2258 = vsel %vm2175, %v2257, %v2256
        %v2259 = vsub.s32 4, %v2235
        %v2260 = vsel %vm2175, %v2259, %v2235
        %v2261 = vsel %vm2174, %v2172, %v2258
        %v2262 = vsel %vm2174, 0, %v2260
        %v2263 = vcosq.f32.pop %v2261
        %v2264 = vsinq.f32.pop %v2261
        %vm2265 = vweird.f32 %v2172
        %v2266 = vadd.s32 %v2262, 3
        %v2267 = vand.u32 %v2266, 3
        %vm2268 = vcmp.lt.s32.totalorder %v2267, 2
        %vm2269 = vcmp.eq.s32.totalorder %v2267, 0
        %v2270 = vxor.u32 %v2264, 2147483648
        %v2271 = vsel %vm2269, %v2263, %v2270
        %vm2272 = vcmp.eq.s32.totalorder %v2267, 2
        %v2273 = vxor.u32 %v2263, 2147483648
        %v2274 = vsel %vm2272, %v2273, %v2264
        %v2275 = vsel %vm2268, %v2271, %v2274
        %v2276 = vsel %vm2265, nan, %v2275
        %2278 = vrot.lane.b32.xlu0 %v2276, 48
        %v2279 = vpop.permute.xlu0 %2278
        %2281 = vst.msk [vmem:[%s208 + $0x10] sm:$0xff] %vm540, %v2279
        %v2282 = vand.u32 2147483647, %v2172
        %vm2283 = vcmp.le.f32.partialorder %v2282, 0.7853982
        %vm2284 = vcmp.lt.s32.totalorder %v2172, 0
        %v2285 = vand.u32 %v2172, 2139095040
        %v2286 = vshrl.u32 %v2285, 23
        %v2287 = vsub.s32 %v2286, 127
        %v2288 = vand.u32 2147483647, %v2172
        %v2289 = vand.u32 %v2288, 8388607
        %v2290 = vor.u32 %v2289, 8388608
        %v2291 = vsub.s32 0, %v2290
        %v2292 = vadd.s32 %v2287, 1
        %vm2293 = vcmp.gt.s32.totalorder %v2292, 0
        %v2294 = vsel %vm2293, %v2292, 0
        %v2295 = vshrl.u32 %v2294, 5
        %v2296 = vand.u32 %v2294, 31
        %v2297 = vsub.s32 32, %v2296
        %v2298 = vshrl.u32 683565275, %v2297
        %v2299 = vshll.u32 683565275, %v2296
        %v2300 = vshrl.u32 2475754826, %v2297
        %v2301 = vor.u32 %v2299, %v2300
        %v2302 = vshll.u32 2475754826, %v2296
        %v2303 = vshrl.u32 2131351028, %v2297
        %v2304 = vor.u32 %v2302, %v2303
        %v2305 = vshll.u32 2131351028, %v2296
        %v2306 = vshrl.u32 2102212464, %v2297
        %v2307 = vor.u32 %v2305, %v2306
        %v2308 = vshll.u32 2102212464, %v2296
        %v2309 = vshrl.u32 920167782, %v2297
        %v2310 = vor.u32 %v2308, %v2309
        %v2311 = vshll.u32 920167782, %v2296
        %v2312 = vshrl.u32 1326507024, %v2297
        %v2313 = vor.u32 %v2311, %v2312
        %vm2314 = vcmp.lt.s32.totalorder %v2295, 1
        %vm2315 = vcmp.lt.s32.totalorder %v2295, 2
        %vm2316 = vcmp.lt.s32.totalorder %v2295, 3
        %vm2317 = vcmp.lt.s32.totalorder %v2295, 4
        %v2318 = vsel %vm2314, %v2298, %v2301
        %v2319 = vsel %vm2317, %v2307, 2102212464
        %v2320 = vsel %vm2316, %v2304, %v2319
        %v2321 = vsel %vm2315, %v2318, %v2320
        %v2322 = vsel %vm2314, %v2301, %v2304
        %v2323 = vsel %vm2317, %v2310, 920167782
        %v2324 = vsel %vm2316, %v2307, %v2323
        %v2325 = vsel %vm2315, %v2322, %v2324
        %v2326 = vsel %vm2314, %v2304, %v2307
        %v2327 = vsel %vm2317, %v2313, 1326507024
        %v2328 = vsel %vm2316, %v2310, %v2327
        %v2329 = vsel %vm2315, %v2326, %v2328
        %v2330 = vshll.u32 %v2290, 8
        %v2331 = vmul.u32.u64.compose %v2330, %v2329
        %v2332 = vextract.low.u32 %v2331
        %v2333 = vextract.high.u32 %v2331
        %v2334 = vmul.u32.u64.compose %v2330, %v2325
        %v2335 = vextract.low.u32 %v2334
        %v2336 = vextract.high.u32 %v2334
        %v2337 = vmul.u32 %v2330, %v2321
        %v2338 = vadd.s32 %v2333, %v2335
        %vm2339 = vc.u32 %v2333, %v2335
        %v2340 = vadd.s32 %v2336, 1
        %v2341 = vsel %vm2339, %v2340, %v2336
        %v2342 = vadd.s32 %v2337, %v2341
        %v2343 = vadd.s32 %v2342, 536870912
        %v2344 = vshrl.u32 %v2343, 30
        %v2345 = vshll.u32 %v2344, 30
        %v2346 = vsub.s32 %v2342, %v2345
        %vm2347 = vcmp.lt.s32.totalorder %v2346, 0
        %v2348 = vsub.s32 0, %v2346
        %v2349 = vsel %vm2347, %v2348, %v2346
        %v2350 = vclz %v2349
        %v2351 = vsub.s32 %v2350, 2
        %vm2352 = vcmp.gt.s32.totalorder 0, %v2351
        %v2353 = vsel %vm2352, 0, %v2351
        %v2354 = vsub.s32 32, %v2353
        %v2355 = vshll.u32 %v2346, %v2353
        %v2356 = vshrl.u32 %v2338, %v2354
        %v2357 = vor.u32 %v2355, %v2356
        %v2358 = vsub.s32 4294967266, %v2353
        %v2359 = vadd.s32 %v2358, 127
        %v2360 = vshll.u32 %v2359, 23
        %v2361 = vor.u32 4788187, %v2360
        %v2362 = vand.u32 2147483647, %v2361
        %v2364 = vcvt.s32.f32 %v2357
        %v2365 = vmul.f32 %v2364, %v2362
        %v2366 = vxor.u32 %v2365, 2147483648
        %v2367 = vsel %vm2284, %v2366, %v2365
        %v2368 = vsub.s32 4, %v2344
        %v2369 = vsel %vm2284, %v2368, %v2344
        %v2370 = vsel %vm2283, %v2172, %v2367
        %v2371 = vsel %vm2283, 0, %v2369
        %v2372 = vcosq.f32.pop %v2370
        %v2373 = vsinq.f32.pop %v2370
        %vm2374 = vweird.f32 %v2172
        %v2375 = vand.u32 %v2371, 3
        %vm2376 = vcmp.lt.s32.totalorder %v2375, 2
        %vm2377 = vcmp.eq.s32.totalorder %v2375, 0
        %v2378 = vxor.u32 %v2373, 2147483648
        %v2379 = vsel %vm2377, %v2372, %v2378
        %vm2380 = vcmp.eq.s32.totalorder %v2375, 2
        %v2381 = vxor.u32 %v2372, 2147483648
        %v2382 = vsel %vm2380, %v2381, %v2373
        %v2383 = vsel %vm2376, %v2379, %v2382
        %v2384 = vsel %vm2374, nan, %v2383
        %2386 = vrot.lane.b32.xlu0 %v2384, 64
        %v2387 = vpop.permute.xlu0 %2386
        %2389 = vst.msk [vmem:[%s208 + $0x10] sm:$0xff] %vm649, %v2387
        %s2390 = sand.u32 %s95, 1
        %s2391 = scalar_lea.sflag [#allocation4], %s2390
        %s2392 = sand.u32 %s95, 1
        %s2393 = smul.addr %s2392, 24
        %s2394 = scalar_lea.vmem [#allocation8], %s2393
        // Predicated region
        $region45: #{tpu_custom_call.1} parent=31 // pred_check
          %p2395 = pneg %p105
        $region46: #{tpu_custom_call.1} parent=31 // pred_check_branch
          %2397 = sbr.rel (%p2395) target = $region48
        $region47: #{tpu_custom_call.1} parent=31 // pred_region
          %s2399 = ssub.s32 384, 384
          %2400 = vsyncadd %s2391, %s2399
          %s2401 = smul.addr %s19, 3
          %s2402 = smul.addr %s2401, 128
          %s2403 = scalar_lea.hbm %s3, %s2402
          %s2405 = sshll.u32 %s2394, 4
          %s2406 = int_to_ptr.vmem [resolvable:$true] %s2405
          %2408 = dma.vmem_to_hbm [thread:$0]  %s2406, 384, %s2403, %s2391
        $region48: #{tpu_custom_call.1} parent=31 // pred_fallthru
          _
      $region32: #{tpu_custom_call.1} parent=5 // pred_fallthru
        _
      %p2409 = scmp.le.s32.totalorder 2, %s14
      // Predicated region
      $region49: #{tpu_custom_call.1} parent=5 // pred_check
        %p2410 = pneg %p2409
      $region50: #{tpu_custom_call.1} parent=5 // pred_check_branch
        %2412 = sbr.rel (%p2410) target = $region52
      $region51: #{tpu_custom_call.1} parent=5 // pred_region
        %s2413 = ssub.s32 %s14, 2
        // Predicated region
        $region53: #{tpu_custom_call.1} parent=51 // pred_check
          %p2414 = pneg %p111
        $region54: #{tpu_custom_call.1} parent=51 // pred_check_branch
          %2416 = sbr.rel (%p2414) target = $region56
        $region55: #{tpu_custom_call.1} parent=51 // pred_region
          %s2417 = sand.u32 %s96, 1
          %s2418 = scalar_lea.sflag [#allocation4], %s2417
          %s2419 = sand.u32 %s96, 1
          %s2420 = smul.addr %s2419, 24
          %s2421 = scalar_lea.vmem [#allocation8], %s2420
          %2422 = dma.done %s2418, 384
        $region56: #{tpu_custom_call.1} parent=51 // pred_fallthru
          _
      $region52: #{tpu_custom_call.1} parent=5 // pred_fallthru
        _
    $region6: #{tpu_custom_call.1} parent=1 // loop_footer
      %s18 = sadd.s32 1, %s14
    $region7: #{tpu_custom_call.1} parent=1 // loop_footer_branch
      %13 = sbr.rel target = $region3
    $region8: #{tpu_custom_call.1} parent=1 // loop_exit
      _
    %2423 = vsyncpa [#allocation3], 1
    %s2424 = scalar_lea.sflag [#allocation3], 1
    %2425 = vsyncpa %s2424, 1
    %2426 = vsyncpa [#allocation6], 1
    %2427 = vsyncpa [#allocation4], 1
    %s2428 = scalar_lea.sflag [#allocation4], 1
    %2429 = vsyncpa %s2428, 1

</llo_original>
